<compile_context>
chip_gen: v5e
topology: v5e:2x2
jax: 0.10.0
libtpu: 0.0.40
codegen_flags: <defaults>
</compile_context>

<pallas_src>
import functools

import jax
import jax.numpy as jnp
from jax.experimental import pallas as pl
from jax.experimental.pallas import tpu as pltpu


# ----------------------------- parameter setup ------------------------------

def _conv_params(key, cin, cout, k):
    """Torch Conv1d weight (cout, cin, k) stored pre-flattened as (k*cin, cout)."""
    k1, k2 = jax.random.split(key)
    scale = 1.0 / jnp.sqrt(jnp.float32(cin * k))
    w = jax.random.uniform(k1, (k, cin, cout), jnp.float32, -scale, scale)
    b = jax.random.uniform(k2, (1, cout), jnp.float32, -scale, scale)
    # Rows grouped by tap k: rows [k*cin:(k+1)*cin] == W[k] (no kernel flip;
    # torch Conv1d is cross-correlation).
    return {"w": w.reshape(k * cin, cout), "b": b}


def init_causal_decoder(key, *, input_emb_width, hidden_size, width,
                        down_t, depth, dilation_growth_rate):
    """Flat, ordered, array-only list of {'w','b'} dicts (no static leaves)."""
    del dilation_growth_rate  # structure only; dilations are static config
    n_layers = 1 + down_t * (2 * depth + 1) + 2
    keys = iter(jax.random.split(key, n_layers))
    layers = [_conv_params(next(keys), hidden_size, width, 3)]        # conv_in
    for _ in range(down_t):
        for _ in range(depth):
            layers.append(_conv_params(next(keys), width, width, 3))  # dilated
            layers.append(_conv_params(next(keys), width, width, 1))  # 1x1
        layers.append(_conv_params(next(keys), width, width, 3))      # stage conv
    layers.append(_conv_params(next(keys), width, width, 3))          # conv_mid
    layers.append(_conv_params(next(keys), width, input_emb_width, 3))  # conv_out
    return layers


# ------------------------------- fused kernel -------------------------------

def causal_decoder_forward(params, z, *, input_emb_width, hidden_size, width,
                           down_t, depth, dilation_growth_rate):
    """z: (B, T, hidden_size)  ->  (B, input_emb_width, T * 2**down_t)."""
    B, T0, H = z.shape
    assert H == hidden_size
    T_out = T0 * (2 ** down_t)
    LANES = 128
    T_pad = ((T_out + LANES - 1) // LANES) * LANES    # lane-dense output slab

    # Static layer plan: (K, cin, cout, dilation, T_in) per conv, in order.
    # reverse_dilation=True -> dilations run high->low inside each resnet.
    dilations = [dilation_growth_rate ** d for d in range(depth)][::-1]
    plan = [(3, hidden_size, width, 1, T0)]
    t_len = T0
    for _ in range(down_t):
        for dil in dilations:
            plan.append((3, width, width, dil, t_len))   # dilated causal conv3
            plan.append((1, width, width, 1, t_len))     # 1x1 conv
        t_len *= 2
        plan.append((3, width, width, 1, t_len))         # stage CausalConv1d
    plan.append((3, width, width, 1, t_len))             # conv_mid
    plan.append((3, width, input_emb_width, 1, t_len))   # conv_out
    n_layers = len(plan)
    assert n_layers == len(params)

    # ---- pack all weights / biases into two contiguous slabs (2 DMAs) ----
    max_cout = max(c for (_, _, c, _, _) in plan)
    offsets, row = [], 0
    w_blocks, b_rows = [], []
    for (K, cin, cout, _, _), layer in zip(plan, params):
        assert layer["w"].shape == (K * cin, cout)
        offsets.append(row)                 # all offsets multiples of 8 (cin%8==0)
        row += K * cin
        w_blocks.append(jnp.pad(layer["w"], ((0, 0), (0, max_cout - cout))))
        b_rows.append(jnp.pad(layer["b"], ((0, 0), (0, max_cout - cout))))
    w_slab = jnp.concatenate(w_blocks, axis=0)           # (total_rows, max_cout)
    b_slab = jnp.concatenate(b_rows, axis=0)             # (n_layers,  max_cout)

    def kernel(z_ref, w_ref, b_ref, o_ref):
        def shift_rows(x, shift):
            """Causal time shift: out[t] = x[t - shift], zeros flow in."""
            T, C = x.shape
            if shift == 0:
                return x
            if shift >= T:
                return jnp.zeros_like(x)
            rolled = pltpu.roll(x, shift, axis=0)               # XLU (free slot)
            row_idx = jax.lax.broadcasted_iota(jnp.int32, (T, C), 0)
            return jnp.where(row_idx < shift, 0.0, rolled)      # one VPU select

        def conv(x, li, relu_in=False, relu_out=False):
            """Causal conv as K accumulating (T,Cin)@(Cin,Cout) MXU matmuls."""
            K, cin, cout, dil, _ = plan[li]
            r0 = offsets[li]
            xv = jnp.maximum(x, 0.0) if relu_in else x
            acc = None
            for k in range(K):                        # static unroll over taps
                xs = shift_rows(xv, (K - 1 - k) * dil)
                wk = w_ref[r0 + k * cin: r0 + (k + 1) * cin, :cout]  # static slice
                yk = jnp.dot(xs, wk, preferred_element_type=jnp.float32)
                acc = yk if acc is None else acc + yk
            y = acc + b_ref[li:li + 1, :cout]
            return jnp.maximum(y, 0.0) if relu_out else y

        for b in range(B):                            # tiny static batch unroll
            li = 0
            h = z_ref[b].astype(jnp.float32)          # (T0, hidden)
            h = conv(h, li, relu_out=True); li += 1           # conv_in + ReLU
            for _ in range(down_t):
                for _ in range(depth):                # CausalResnet1D block
                    s = conv(h, li, relu_in=True); li += 1    # dilated conv3
                    h = conv(s, li, relu_in=True) + h; li += 1  # 1x1 + residual
                # Nearest 2x upsample along time: broadcast + reshape interleave.
                T, C = h.shape
                h = jnp.broadcast_to(h[:, None, :], (T, 2, C)).reshape(2 * T, C)
                h = conv(h, li); li += 1                      # stage CausalConv1d
            h = conv(h, li, relu_out=True); li += 1           # conv_mid + ReLU
            h = conv(h, li); li += 1                          # conv_out (T_out, C_out)
            ht = jnp.transpose(h)                             # NCL: (C_out, T_out)
            if T_pad > T_out:                                 # lane-dense store
                ht = jnp.concatenate(
                    [ht, jnp.zeros((input_emb_width, T_pad - T_out), ht.dtype)],
                    axis=1)
            o_ref[b] = ht.astype(o_ref.dtype)

    flops = sum(2 * B * t_in * K * cin * cout
                for (K, cin, cout, _, t_in) in plan)
    bytes_accessed = 4 * (z.size + w_slab.size + b_slab.size
                          + B * input_emb_width * T_pad)

    out = pl.pallas_call(
        kernel,
        out_shape=jax.ShapeDtypeStruct((B, input_emb_width, T_pad), z.dtype),
        grid=(1,),                                    # one step: whole batch
        in_specs=[
            pl.BlockSpec((B, T0, hidden_size), lambda i: (0, 0, 0)),
            pl.BlockSpec(w_slab.shape, lambda i: (0, 0)),   # resident weight slab
            pl.BlockSpec(b_slab.shape, lambda i: (0, 0)),   # resident bias slab
        ],
        out_specs=pl.BlockSpec((B, input_emb_width, T_pad),
                               lambda i: (0, 0, 0)),
        compiler_params=pltpu.CompilerParams(
            dimension_semantics=("arbitrary",),
            vmem_limit_bytes=32 * 1024 * 1024),
        cost_estimate=pl.CostEstimate(flops=flops, transcendentals=0,
                                      bytes_accessed=bytes_accessed),
    )(z, w_slab, b_slab)
    return out[:, :, :T_out]                          # strip lane padding


# ----------------------------------- main ------------------------------------

if __name__ == "__main__":
    B, T = 2, 8
    input_emb_width, hidden_size, width = 8, 32, 32
    down_t, depth, dilation_growth_rate = 2, 2, 3

    key = jax.random.PRNGKey(0)
    pkey, zkey = jax.random.split(key)
    params = init_causal_decoder(
        pkey, input_emb_width=input_emb_width, hidden_size=hidden_size,
        width=width, down_t=down_t, depth=depth,
        dilation_growth_rate=dilation_growth_rate)
    z = jax.random.normal(zkey, (B, T, hidden_size), jnp.float32)

    fwd = jax.jit(functools.partial(
        causal_decoder_forward,
        input_emb_width=input_emb_width, hidden_size=hidden_size, width=width,
        down_t=down_t, depth=depth,
        dilation_growth_rate=dilation_growth_rate))

    out = jax.block_until_ready(fwd(params, z))

    expected_shape = (B, input_emb_width, T * (2 ** down_t))
    assert out.shape == expected_shape, (out.shape, expected_shape)
    assert bool(jnp.all(jnp.isfinite(out)))
    print("KERNEL_OK")
</pallas_src>

<mosaic_0001>
module attributes {stable_mosaic.version = 11 : i64} {
  func.func @kernel(%arg0: i32, %arg1: memref<2x8x32xf32, #tpu.memory_space<vmem>>, %arg2: memref<992x32xf32, #tpu.memory_space<vmem>>, %arg3: memref<13x32xf32, #tpu.memory_space<vmem>>, %arg4: memref<2x8x128xf32, #tpu.memory_space<vmem>>) attributes {dimension_semantics = [#tpu.dimension_semantics<arbitrary>], iteration_bounds = array<i64: 1>, scalar_prefetch = 0 : i64, scratch_operands = 0 : i64, tpu.core_type = #tpu.core_type<tc>, window_params = [{pipeline_mode = #tpu.pipeline_mode<synchronous>, transform_indices = @transform_0, window_bounds = array<i64: 2, 8, 32>}, {pipeline_mode = #tpu.pipeline_mode<synchronous>, transform_indices = @transform_1, window_bounds = array<i64: 992, 32>}, {pipeline_mode = #tpu.pipeline_mode<synchronous>, transform_indices = @transform_2, window_bounds = array<i64: 13, 32>}, {pipeline_mode = #tpu.pipeline_mode<synchronous>, transform_indices = @transform_3, window_bounds = array<i64: 2, 8, 128>}]} {
    %c0 = arith.constant 0 : index
    %c0_0 = arith.constant 0 : index
    %c0_1 = arith.constant 0 : index
    %0 = vector.load %arg1[%c0, %c0_0, %c0_1] : memref<2x8x32xf32, #tpu.memory_space<vmem>>, vector<1x8x32xf32>
    %1 = vector.shape_cast %0 : vector<1x8x32xf32> to vector<8x32xf32>
    %c2_i32 = arith.constant 2 : i32
    %2 = tpu.dynamic_rotate %1 by %c2_i32 dim 0 : vector<8x32xf32>, i32 -> vector<8x32xf32>
    %3 = tpu.iota {dimensions = array<i32: 0>} : vector<8x32xi32>
    %c2_i32_2 = arith.constant 2 : i32
    %4 = vector.broadcast %c2_i32_2 : i32 to vector<8x32xi32>
    %5 = arith.cmpi slt, %3, %4 : vector<8x32xi32>
    %cst = arith.constant 0.000000e+00 : f32
    %6 = vector.broadcast %cst : f32 to vector<8x32xf32>
    %7 = arith.select %5, %6, %2 : vector<8x32xi1>, vector<8x32xf32>
    %c0_3 = arith.constant 0 : index
    %c0_4 = arith.constant 0 : index
    %8 = vector.load %arg2[%c0_3, %c0_4] : memref<992x32xf32, #tpu.memory_space<vmem>>, vector<32x32xf32>
    %cst_5 = arith.constant dense<0.000000e+00> : vector<8x32xf32>
    %9 = tpu.matmul %7, %8, %cst_5 {dimension_numbers = #tpu.dot_dimension_numbers<[1], [0], [0], [1], [0, 0, 1, 1], [], []>} : vector<8x32xf32>, vector<32x32xf32>, vector<8x32xf32> -> vector<8x32xf32>
    %c1_i32 = arith.constant 1 : i32
    %10 = tpu.dynamic_rotate %1 by %c1_i32 dim 0 : vector<8x32xf32>, i32 -> vector<8x32xf32>
    %11 = tpu.iota {dimensions = array<i32: 0>} : vector<8x32xi32>
    %c1_i32_6 = arith.constant 1 : i32
    %12 = vector.broadcast %c1_i32_6 : i32 to vector<8x32xi32>
    %13 = arith.cmpi slt, %11, %12 : vector<8x32xi32>
    %cst_7 = arith.constant 0.000000e+00 : f32
    %14 = vector.broadcast %cst_7 : f32 to vector<8x32xf32>
    %15 = arith.select %13, %14, %10 : vector<8x32xi1>, vector<8x32xf32>
    %c32 = arith.constant 32 : index
    %c0_8 = arith.constant 0 : index
    %16 = vector.load %arg2[%c32, %c0_8] : memref<992x32xf32, #tpu.memory_space<vmem>>, vector<32x32xf32>
    %cst_9 = arith.constant dense<0.000000e+00> : vector<8x32xf32>
    %17 = tpu.matmul %15, %16, %cst_9 {dimension_numbers = #tpu.dot_dimension_numbers<[1], [0], [0], [1], [0, 0, 1, 1], [], []>} : vector<8x32xf32>, vector<32x32xf32>, vector<8x32xf32> -> vector<8x32xf32>
    %18 = arith.addf %9, %17 : vector<8x32xf32>
    %c64 = arith.constant 64 : index
    %c0_10 = arith.constant 0 : index
    %19 = vector.load %arg2[%c64, %c0_10] : memref<992x32xf32, #tpu.memory_space<vmem>>, vector<32x32xf32>
    %cst_11 = arith.constant dense<0.000000e+00> : vector<8x32xf32>
    %20 = tpu.matmul %1, %19, %cst_11 {dimension_numbers = #tpu.dot_dimension_numbers<[1], [0], [0], [1], [0, 0, 1, 1], [], []>} : vector<8x32xf32>, vector<32x32xf32>, vector<8x32xf32> -> vector<8x32xf32>
    %21 = arith.addf %18, %20 : vector<8x32xf32>
    %c0_12 = arith.constant 0 : index
    %c0_13 = arith.constant 0 : index
    %22 = vector.load %arg3[%c0_12, %c0_13] : memref<13x32xf32, #tpu.memory_space<vmem>>, vector<1x32xf32>
    %23 = vector.broadcast %22 : vector<1x32xf32> to vector<8x32xf32>
    %24 = arith.addf %21, %23 : vector<8x32xf32>
    %cst_14 = arith.constant 0.000000e+00 : f32
    %25 = vector.broadcast %cst_14 : f32 to vector<8x32xf32>
    %26 = arith.maximumf %24, %25 : vector<8x32xf32>
    %cst_15 = arith.constant 0.000000e+00 : f32
    %27 = vector.broadcast %cst_15 : f32 to vector<8x32xf32>
    %28 = arith.maximumf %26, %27 : vector<8x32xf32>
    %c6_i32 = arith.constant 6 : i32
    %29 = tpu.dynamic_rotate %28 by %c6_i32 dim 0 : vector<8x32xf32>, i32 -> vector<8x32xf32>
    %30 = tpu.iota {dimensions = array<i32: 0>} : vector<8x32xi32>
    %c6_i32_16 = arith.constant 6 : i32
    %31 = vector.broadcast %c6_i32_16 : i32 to vector<8x32xi32>
    %32 = arith.cmpi slt, %30, %31 : vector<8x32xi32>
    %cst_17 = arith.constant 0.000000e+00 : f32
    %33 = vector.broadcast %cst_17 : f32 to vector<8x32xf32>
    %34 = arith.select %32, %33, %29 : vector<8x32xi1>, vector<8x32xf32>
    %c96 = arith.constant 96 : index
    %c0_18 = arith.constant 0 : index
    %35 = vector.load %arg2[%c96, %c0_18] : memref<992x32xf32, #tpu.memory_space<vmem>>, vector<32x32xf32>
    %cst_19 = arith.constant dense<0.000000e+00> : vector<8x32xf32>
    %36 = tpu.matmul %34, %35, %cst_19 {dimension_numbers = #tpu.dot_dimension_numbers<[1], [0], [0], [1], [0, 0, 1, 1], [], []>} : vector<8x32xf32>, vector<32x32xf32>, vector<8x32xf32> -> vector<8x32xf32>
    %c3_i32 = arith.constant 3 : i32
    %37 = tpu.dynamic_rotate %28 by %c3_i32 dim 0 : vector<8x32xf32>, i32 -> vector<8x32xf32>
    %38 = tpu.iota {dimensions = array<i32: 0>} : vector<8x32xi32>
    %c3_i32_20 = arith.constant 3 : i32
    %39 = vector.broadcast %c3_i32_20 : i32 to vector<8x32xi32>
    %40 = arith.cmpi slt, %38, %39 : vector<8x32xi32>
    %cst_21 = arith.constant 0.000000e+00 : f32
    %41 = vector.broadcast %cst_21 : f32 to vector<8x32xf32>
    %42 = arith.select %40, %41, %37 : vector<8x32xi1>, vector<8x32xf32>
    %c128 = arith.constant 128 : index
    %c0_22 = arith.constant 0 : index
    %43 = vector.load %arg2[%c128, %c0_22] : memref<992x32xf32, #tpu.memory_space<vmem>>, vector<32x32xf32>
    %cst_23 = arith.constant dense<0.000000e+00> : vector<8x32xf32>
    %44 = tpu.matmul %42, %43, %cst_23 {dimension_numbers = #tpu.dot_dimension_numbers<[1], [0], [0], [1], [0, 0, 1, 1], [], []>} : vector<8x32xf32>, vector<32x32xf32>, vector<8x32xf32> -> vector<8x32xf32>
    %45 = arith.addf %36, %44 : vector<8x32xf32>
    %c160 = arith.constant 160 : index
    %c0_24 = arith.constant 0 : index
    %46 = vector.load %arg2[%c160, %c0_24] : memref<992x32xf32, #tpu.memory_space<vmem>>, vector<32x32xf32>
    %cst_25 = arith.constant dense<0.000000e+00> : vector<8x32xf32>
    %47 = tpu.matmul %28, %46, %cst_25 {dimension_numbers = #tpu.dot_dimension_numbers<[1], [0], [0], [1], [0, 0, 1, 1], [], []>} : vector<8x32xf32>, vector<32x32xf32>, vector<8x32xf32> -> vector<8x32xf32>
    %48 = arith.addf %45, %47 : vector<8x32xf32>
    %c1 = arith.constant 1 : index
    %c0_26 = arith.constant 0 : index
    %49 = vector.load %arg3[%c1, %c0_26] : memref<13x32xf32, #tpu.memory_space<vmem>>, vector<1x32xf32>
    %50 = vector.broadcast %49 : vector<1x32xf32> to vector<8x32xf32>
    %51 = arith.addf %48, %50 : vector<8x32xf32>
    %cst_27 = arith.constant 0.000000e+00 : f32
    %52 = vector.broadcast %cst_27 : f32 to vector<8x32xf32>
    %53 = arith.maximumf %51, %52 : vector<8x32xf32>
    %c192 = arith.constant 192 : index
    %c0_28 = arith.constant 0 : index
    %54 = vector.load %arg2[%c192, %c0_28] : memref<992x32xf32, #tpu.memory_space<vmem>>, vector<32x32xf32>
    %cst_29 = arith.constant dense<0.000000e+00> : vector<8x32xf32>
    %55 = tpu.matmul %53, %54, %cst_29 {dimension_numbers = #tpu.dot_dimension_numbers<[1], [0], [0], [1], [0, 0, 1, 1], [], []>} : vector<8x32xf32>, vector<32x32xf32>, vector<8x32xf32> -> vector<8x32xf32>
    %c2 = arith.constant 2 : index
    %c0_30 = arith.constant 0 : index
    %56 = vector.load %arg3[%c2, %c0_30] : memref<13x32xf32, #tpu.memory_space<vmem>>, vector<1x32xf32>
    %57 = vector.broadcast %56 : vector<1x32xf32> to vector<8x32xf32>
    %58 = arith.addf %55, %57 : vector<8x32xf32>
    %59 = arith.addf %58, %26 : vector<8x32xf32>
    %cst_31 = arith.constant 0.000000e+00 : f32
    %60 = vector.broadcast %cst_31 : f32 to vector<8x32xf32>
    %61 = arith.maximumf %59, %60 : vector<8x32xf32>
    %c2_i32_32 = arith.constant 2 : i32
    %62 = tpu.dynamic_rotate %61 by %c2_i32_32 dim 0 : vector<8x32xf32>, i32 -> vector<8x32xf32>
    %63 = tpu.iota {dimensions = array<i32: 0>} : vector<8x32xi32>
    %c2_i32_33 = arith.constant 2 : i32
    %64 = vector.broadcast %c2_i32_33 : i32 to vector<8x32xi32>
    %65 = arith.cmpi slt, %63, %64 : vector<8x32xi32>
    %cst_34 = arith.constant 0.000000e+00 : f32
    %66 = vector.broadcast %cst_34 : f32 to vector<8x32xf32>
    %67 = arith.select %65, %66, %62 : vector<8x32xi1>, vector<8x32xf32>
    %c224 = arith.constant 224 : index
    %c0_35 = arith.constant 0 : index
    %68 = vector.load %arg2[%c224, %c0_35] : memref<992x32xf32, #tpu.memory_space<vmem>>, vector<32x32xf32>
    %cst_36 = arith.constant dense<0.000000e+00> : vector<8x32xf32>
    %69 = tpu.matmul %67, %68, %cst_36 {dimension_numbers = #tpu.dot_dimension_numbers<[1], [0], [0], [1], [0, 0, 1, 1], [], []>} : vector<8x32xf32>, vector<32x32xf32>, vector<8x32xf32> -> vector<8x32xf32>
    %c1_i32_37 = arith.constant 1 : i32
    %70 = tpu.dynamic_rotate %61 by %c1_i32_37 dim 0 : vector<8x32xf32>, i32 -> vector<8x32xf32>
    %71 = tpu.iota {dimensions = array<i32: 0>} : vector<8x32xi32>
    %c1_i32_38 = arith.constant 1 : i32
    %72 = vector.broadcast %c1_i32_38 : i32 to vector<8x32xi32>
    %73 = arith.cmpi slt, %71, %72 : vector<8x32xi32>
    %cst_39 = arith.constant 0.000000e+00 : f32
    %74 = vector.broadcast %cst_39 : f32 to vector<8x32xf32>
    %75 = arith.select %73, %74, %70 : vector<8x32xi1>, vector<8x32xf32>
    %c256 = arith.constant 256 : index
    %c0_40 = arith.constant 0 : index
    %76 = vector.load %arg2[%c256, %c0_40] : memref<992x32xf32, #tpu.memory_space<vmem>>, vector<32x32xf32>
    %cst_41 = arith.constant dense<0.000000e+00> : vector<8x32xf32>
    %77 = tpu.matmul %75, %76, %cst_41 {dimension_numbers = #tpu.dot_dimension_numbers<[1], [0], [0], [1], [0, 0, 1, 1], [], []>} : vector<8x32xf32>, vector<32x32xf32>, vector<8x32xf32> -> vector<8x32xf32>
    %78 = arith.addf %69, %77 : vector<8x32xf32>
    %c288 = arith.constant 288 : index
    %c0_42 = arith.constant 0 : index
    %79 = vector.load %arg2[%c288, %c0_42] : memref<992x32xf32, #tpu.memory_space<vmem>>, vector<32x32xf32>
    %cst_43 = arith.constant dense<0.000000e+00> : vector<8x32xf32>
    %80 = tpu.matmul %61, %79, %cst_43 {dimension_numbers = #tpu.dot_dimension_numbers<[1], [0], [0], [1], [0, 0, 1, 1], [], []>} : vector<8x32xf32>, vector<32x32xf32>, vector<8x32xf32> -> vector<8x32xf32>
    %81 = arith.addf %78, %80 : vector<8x32xf32>
    %c3 = arith.constant 3 : index
    %c0_44 = arith.constant 0 : index
    %82 = vector.load %arg3[%c3, %c0_44] : memref<13x32xf32, #tpu.memory_space<vmem>>, vector<1x32xf32>
    %83 = vector.broadcast %82 : vector<1x32xf32> to vector<8x32xf32>
    %84 = arith.addf %81, %83 : vector<8x32xf32>
    %cst_45 = arith.constant 0.000000e+00 : f32
    %85 = vector.broadcast %cst_45 : f32 to vector<8x32xf32>
    %86 = arith.maximumf %84, %85 : vector<8x32xf32>
    %c320 = arith.constant 320 : index
    %c0_46 = arith.constant 0 : index
    %87 = vector.load %arg2[%c320, %c0_46] : memref<992x32xf32, #tpu.memory_space<vmem>>, vector<32x32xf32>
    %cst_47 = arith.constant dense<0.000000e+00> : vector<8x32xf32>
    %88 = tpu.matmul %86, %87, %cst_47 {dimension_numbers = #tpu.dot_dimension_numbers<[1], [0], [0], [1], [0, 0, 1, 1], [], []>} : vector<8x32xf32>, vector<32x32xf32>, vector<8x32xf32> -> vector<8x32xf32>
    %c4 = arith.constant 4 : index
    %c0_48 = arith.constant 0 : index
    %89 = vector.load %arg3[%c4, %c0_48] : memref<13x32xf32, #tpu.memory_space<vmem>>, vector<1x32xf32>
    %90 = vector.broadcast %89 : vector<1x32xf32> to vector<8x32xf32>
    %91 = arith.addf %88, %90 : vector<8x32xf32>
    %92 = arith.addf %91, %59 : vector<8x32xf32>
    %93 = vector.shape_cast %92 : vector<8x32xf32> to vector<8x1x32xf32>
    %94 = vector.shape_cast %93 : vector<8x1x32xf32> to vector<8x1x32xf32>
    %95 = vector.broadcast %94 : vector<8x1x32xf32> to vector<8x2x32xf32>
    %96 = vector.shape_cast %95 : vector<8x2x32xf32> to vector<16x32xf32>
    %c2_i32_49 = arith.constant 2 : i32
    %97 = tpu.dynamic_rotate %96 by %c2_i32_49 dim 0 : vector<16x32xf32>, i32 -> vector<16x32xf32>
    %98 = tpu.iota {dimensions = array<i32: 0>} : vector<16x32xi32>
    %c2_i32_50 = arith.constant 2 : i32
    %99 = vector.broadcast %c2_i32_50 : i32 to vector<16x32xi32>
    %100 = arith.cmpi slt, %98, %99 : vector<16x32xi32>
    %cst_51 = arith.constant 0.000000e+00 : f32
    %101 = vector.broadcast %cst_51 : f32 to vector<16x32xf32>
    %102 = arith.select %100, %101, %97 : vector<16x32xi1>, vector<16x32xf32>
    %c352 = arith.constant 352 : index
    %c0_52 = arith.constant 0 : index
    %103 = vector.load %arg2[%c352, %c0_52] : memref<992x32xf32, #tpu.memory_space<vmem>>, vector<32x32xf32>
    %cst_53 = arith.constant dense<0.000000e+00> : vector<16x32xf32>
    %104 = tpu.matmul %102, %103, %cst_53 {dimension_numbers = #tpu.dot_dimension_numbers<[1], [0], [0], [1], [0, 0, 1, 1], [], []>} : vector<16x32xf32>, vector<32x32xf32>, vector<16x32xf32> -> vector<16x32xf32>
    %c1_i32_54 = arith.constant 1 : i32
    %105 = tpu.dynamic_rotate %96 by %c1_i32_54 dim 0 : vector<16x32xf32>, i32 -> vector<16x32xf32>
    %106 = tpu.iota {dimensions = array<i32: 0>} : vector<16x32xi32>
    %c1_i32_55 = arith.constant 1 : i32
    %107 = vector.broadcast %c1_i32_55 : i32 to vector<16x32xi32>
    %108 = arith.cmpi slt, %106, %107 : vector<16x32xi32>
    %cst_56 = arith.constant 0.000000e+00 : f32
    %109 = vector.broadcast %cst_56 : f32 to vector<16x32xf32>
    %110 = arith.select %108, %109, %105 : vector<16x32xi1>, vector<16x32xf32>
    %c384 = arith.constant 384 : index
    %c0_57 = arith.constant 0 : index
    %111 = vector.load %arg2[%c384, %c0_57] : memref<992x32xf32, #tpu.memory_space<vmem>>, vector<32x32xf32>
    %cst_58 = arith.constant dense<0.000000e+00> : vector<16x32xf32>
    %112 = tpu.matmul %110, %111, %cst_58 {dimension_numbers = #tpu.dot_dimension_numbers<[1], [0], [0], [1], [0, 0, 1, 1], [], []>} : vector<16x32xf32>, vector<32x32xf32>, vector<16x32xf32> -> vector<16x32xf32>
    %113 = arith.addf %104, %112 : vector<16x32xf32>
    %c416 = arith.constant 416 : index
    %c0_59 = arith.constant 0 : index
    %114 = vector.load %arg2[%c416, %c0_59] : memref<992x32xf32, #tpu.memory_space<vmem>>, vector<32x32xf32>
    %cst_60 = arith.constant dense<0.000000e+00> : vector<16x32xf32>
    %115 = tpu.matmul %96, %114, %cst_60 {dimension_numbers = #tpu.dot_dimension_numbers<[1], [0], [0], [1], [0, 0, 1, 1], [], []>} : vector<16x32xf32>, vector<32x32xf32>, vector<16x32xf32> -> vector<16x32xf32>
    %116 = arith.addf %113, %115 : vector<16x32xf32>
    %c5 = arith.constant 5 : index
    %c0_61 = arith.constant 0 : index
    %117 = vector.load %arg3[%c5, %c0_61] : memref<13x32xf32, #tpu.memory_space<vmem>>, vector<1x32xf32>
    %118 = vector.broadcast %117 : vector<1x32xf32> to vector<16x32xf32>
    %119 = arith.addf %116, %118 : vector<16x32xf32>
    %cst_62 = arith.constant 0.000000e+00 : f32
    %120 = vector.broadcast %cst_62 : f32 to vector<16x32xf32>
    %121 = arith.maximumf %119, %120 : vector<16x32xf32>
    %c6_i32_63 = arith.constant 6 : i32
    %122 = tpu.dynamic_rotate %121 by %c6_i32_63 dim 0 : vector<16x32xf32>, i32 -> vector<16x32xf32>
    %123 = tpu.iota {dimensions = array<i32: 0>} : vector<16x32xi32>
    %c6_i32_64 = arith.constant 6 : i32
    %124 = vector.broadcast %c6_i32_64 : i32 to vector<16x32xi32>
    %125 = arith.cmpi slt, %123, %124 : vector<16x32xi32>
    %cst_65 = arith.constant 0.000000e+00 : f32
    %126 = vector.broadcast %cst_65 : f32 to vector<16x32xf32>
    %127 = arith.select %125, %126, %122 : vector<16x32xi1>, vector<16x32xf32>
    %c448 = arith.constant 448 : index
    %c0_66 = arith.constant 0 : index
    %128 = vector.load %arg2[%c448, %c0_66] : memref<992x32xf32, #tpu.memory_space<vmem>>, vector<32x32xf32>
    %cst_67 = arith.constant dense<0.000000e+00> : vector<16x32xf32>
    %129 = tpu.matmul %127, %128, %cst_67 {dimension_numbers = #tpu.dot_dimension_numbers<[1], [0], [0], [1], [0, 0, 1, 1], [], []>} : vector<16x32xf32>, vector<32x32xf32>, vector<16x32xf32> -> vector<16x32xf32>
    %c3_i32_68 = arith.constant 3 : i32
    %130 = tpu.dynamic_rotate %121 by %c3_i32_68 dim 0 : vector<16x32xf32>, i32 -> vector<16x32xf32>
    %131 = tpu.iota {dimensions = array<i32: 0>} : vector<16x32xi32>
    %c3_i32_69 = arith.constant 3 : i32
    %132 = vector.broadcast %c3_i32_69 : i32 to vector<16x32xi32>
    %133 = arith.cmpi slt, %131, %132 : vector<16x32xi32>
    %cst_70 = arith.constant 0.000000e+00 : f32
    %134 = vector.broadcast %cst_70 : f32 to vector<16x32xf32>
    %135 = arith.select %133, %134, %130 : vector<16x32xi1>, vector<16x32xf32>
    %c480 = arith.constant 480 : index
    %c0_71 = arith.constant 0 : index
    %136 = vector.load %arg2[%c480, %c0_71] : memref<992x32xf32, #tpu.memory_space<vmem>>, vector<32x32xf32>
    %cst_72 = arith.constant dense<0.000000e+00> : vector<16x32xf32>
    %137 = tpu.matmul %135, %136, %cst_72 {dimension_numbers = #tpu.dot_dimension_numbers<[1], [0], [0], [1], [0, 0, 1, 1], [], []>} : vector<16x32xf32>, vector<32x32xf32>, vector<16x32xf32> -> vector<16x32xf32>
    %138 = arith.addf %129, %137 : vector<16x32xf32>
    %c512 = arith.constant 512 : index
    %c0_73 = arith.constant 0 : index
    %139 = vector.load %arg2[%c512, %c0_73] : memref<992x32xf32, #tpu.memory_space<vmem>>, vector<32x32xf32>
    %cst_74 = arith.constant dense<0.000000e+00> : vector<16x32xf32>
    %140 = tpu.matmul %121, %139, %cst_74 {dimension_numbers = #tpu.dot_dimension_numbers<[1], [0], [0], [1], [0, 0, 1, 1], [], []>} : vector<16x32xf32>, vector<32x32xf32>, vector<16x32xf32> -> vector<16x32xf32>
    %141 = arith.addf %138, %140 : vector<16x32xf32>
    %c6 = arith.constant 6 : index
    %c0_75 = arith.constant 0 : index
    %142 = vector.load %arg3[%c6, %c0_75] : memref<13x32xf32, #tpu.memory_space<vmem>>, vector<1x32xf32>
    %143 = vector.broadcast %142 : vector<1x32xf32> to vector<16x32xf32>
    %144 = arith.addf %141, %143 : vector<16x32xf32>
    %cst_76 = arith.constant 0.000000e+00 : f32
    %145 = vector.broadcast %cst_76 : f32 to vector<16x32xf32>
    %146 = arith.maximumf %144, %145 : vector<16x32xf32>
    %c544 = arith.constant 544 : index
    %c0_77 = arith.constant 0 : index
    %147 = vector.load %arg2[%c544, %c0_77] : memref<992x32xf32, #tpu.memory_space<vmem>>, vector<32x32xf32>
    %cst_78 = arith.constant dense<0.000000e+00> : vector<16x32xf32>
    %148 = tpu.matmul %146, %147, %cst_78 {dimension_numbers = #tpu.dot_dimension_numbers<[1], [0], [0], [1], [0, 0, 1, 1], [], []>} : vector<16x32xf32>, vector<32x32xf32>, vector<16x32xf32> -> vector<16x32xf32>
    %c7 = arith.constant 7 : index
    %c0_79 = arith.constant 0 : index
    %149 = vector.load %arg3[%c7, %c0_79] : memref<13x32xf32, #tpu.memory_space<vmem>>, vector<1x32xf32>
    %150 = vector.broadcast %149 : vector<1x32xf32> to vector<16x32xf32>
    %151 = arith.addf %148, %150 : vector<16x32xf32>
    %152 = arith.addf %151, %119 : vector<16x32xf32>
    %cst_80 = arith.constant 0.000000e+00 : f32
    %153 = vector.broadcast %cst_80 : f32 to vector<16x32xf32>
    %154 = arith.maximumf %152, %153 : vector<16x32xf32>
    %c2_i32_81 = arith.constant 2 : i32
    %155 = tpu.dynamic_rotate %154 by %c2_i32_81 dim 0 : vector<16x32xf32>, i32 -> vector<16x32xf32>
    %156 = tpu.iota {dimensions = array<i32: 0>} : vector<16x32xi32>
    %c2_i32_82 = arith.constant 2 : i32
    %157 = vector.broadcast %c2_i32_82 : i32 to vector<16x32xi32>
    %158 = arith.cmpi slt, %156, %157 : vector<16x32xi32>
    %cst_83 = arith.constant 0.000000e+00 : f32
    %159 = vector.broadcast %cst_83 : f32 to vector<16x32xf32>
    %160 = arith.select %158, %159, %155 : vector<16x32xi1>, vector<16x32xf32>
    %c576 = arith.constant 576 : index
    %c0_84 = arith.constant 0 : index
    %161 = vector.load %arg2[%c576, %c0_84] : memref<992x32xf32, #tpu.memory_space<vmem>>, vector<32x32xf32>
    %cst_85 = arith.constant dense<0.000000e+00> : vector<16x32xf32>
    %162 = tpu.matmul %160, %161, %cst_85 {dimension_numbers = #tpu.dot_dimension_numbers<[1], [0], [0], [1], [0, 0, 1, 1], [], []>} : vector<16x32xf32>, vector<32x32xf32>, vector<16x32xf32> -> vector<16x32xf32>
    %c1_i32_86 = arith.constant 1 : i32
    %163 = tpu.dynamic_rotate %154 by %c1_i32_86 dim 0 : vector<16x32xf32>, i32 -> vector<16x32xf32>
    %164 = tpu.iota {dimensions = array<i32: 0>} : vector<16x32xi32>
    %c1_i32_87 = arith.constant 1 : i32
    %165 = vector.broadcast %c1_i32_87 : i32 to vector<16x32xi32>
    %166 = arith.cmpi slt, %164, %165 : vector<16x32xi32>
    %cst_88 = arith.constant 0.000000e+00 : f32
    %167 = vector.broadcast %cst_88 : f32 to vector<16x32xf32>
    %168 = arith.select %166, %167, %163 : vector<16x32xi1>, vector<16x32xf32>
    %c608 = arith.constant 608 : index
    %c0_89 = arith.constant 0 : index
    %169 = vector.load %arg2[%c608, %c0_89] : memref<992x32xf32, #tpu.memory_space<vmem>>, vector<32x32xf32>
    %cst_90 = arith.constant dense<0.000000e+00> : vector<16x32xf32>
    %170 = tpu.matmul %168, %169, %cst_90 {dimension_numbers = #tpu.dot_dimension_numbers<[1], [0], [0], [1], [0, 0, 1, 1], [], []>} : vector<16x32xf32>, vector<32x32xf32>, vector<16x32xf32> -> vector<16x32xf32>
    %171 = arith.addf %162, %170 : vector<16x32xf32>
    %c640 = arith.constant 640 : index
    %c0_91 = arith.constant 0 : index
    %172 = vector.load %arg2[%c640, %c0_91] : memref<992x32xf32, #tpu.memory_space<vmem>>, vector<32x32xf32>
    %cst_92 = arith.constant dense<0.000000e+00> : vector<16x32xf32>
    %173 = tpu.matmul %154, %172, %cst_92 {dimension_numbers = #tpu.dot_dimension_numbers<[1], [0], [0], [1], [0, 0, 1, 1], [], []>} : vector<16x32xf32>, vector<32x32xf32>, vector<16x32xf32> -> vector<16x32xf32>
    %174 = arith.addf %171, %173 : vector<16x32xf32>
    %c8 = arith.constant 8 : index
    %c0_93 = arith.constant 0 : index
    %175 = vector.load %arg3[%c8, %c0_93] : memref<13x32xf32, #tpu.memory_space<vmem>>, vector<1x32xf32>
    %176 = vector.broadcast %175 : vector<1x32xf32> to vector<16x32xf32>
    %177 = arith.addf %174, %176 : vector<16x32xf32>
    %cst_94 = arith.constant 0.000000e+00 : f32
    %178 = vector.broadcast %cst_94 : f32 to vector<16x32xf32>
    %179 = arith.maximumf %177, %178 : vector<16x32xf32>
    %c672 = arith.constant 672 : index
    %c0_95 = arith.constant 0 : index
    %180 = vector.load %arg2[%c672, %c0_95] : memref<992x32xf32, #tpu.memory_space<vmem>>, vector<32x32xf32>
    %cst_96 = arith.constant dense<0.000000e+00> : vector<16x32xf32>
    %181 = tpu.matmul %179, %180, %cst_96 {dimension_numbers = #tpu.dot_dimension_numbers<[1], [0], [0], [1], [0, 0, 1, 1], [], []>} : vector<16x32xf32>, vector<32x32xf32>, vector<16x32xf32> -> vector<16x32xf32>
    %c9 = arith.constant 9 : index
    %c0_97 = arith.constant 0 : index
    %182 = vector.load %arg3[%c9, %c0_97] : memref<13x32xf32, #tpu.memory_space<vmem>>, vector<1x32xf32>
    %183 = vector.broadcast %182 : vector<1x32xf32> to vector<16x32xf32>
    %184 = arith.addf %181, %183 : vector<16x32xf32>
    %185 = arith.addf %184, %152 : vector<16x32xf32>
    %186 = vector.shape_cast %185 : vector<16x32xf32> to vector<16x1x32xf32>
    %187 = vector.shape_cast %186 : vector<16x1x32xf32> to vector<16x1x32xf32>
    %188 = vector.broadcast %187 : vector<16x1x32xf32> to vector<16x2x32xf32>
    %189 = vector.shape_cast %188 : vector<16x2x32xf32> to vector<32x32xf32>
    %c2_i32_98 = arith.constant 2 : i32
    %190 = tpu.dynamic_rotate %189 by %c2_i32_98 dim 0 : vector<32x32xf32>, i32 -> vector<32x32xf32>
    %191 = tpu.iota {dimensions = array<i32: 0>} : vector<32x32xi32>
    %c2_i32_99 = arith.constant 2 : i32
    %192 = vector.broadcast %c2_i32_99 : i32 to vector<32x32xi32>
    %193 = arith.cmpi slt, %191, %192 : vector<32x32xi32>
    %cst_100 = arith.constant 0.000000e+00 : f32
    %194 = vector.broadcast %cst_100 : f32 to vector<32x32xf32>
    %195 = arith.select %193, %194, %190 : vector<32x32xi1>, vector<32x32xf32>
    %c704 = arith.constant 704 : index
    %c0_101 = arith.constant 0 : index
    %196 = vector.load %arg2[%c704, %c0_101] : memref<992x32xf32, #tpu.memory_space<vmem>>, vector<32x32xf32>
    %cst_102 = arith.constant dense<0.000000e+00> : vector<32x32xf32>
    %197 = tpu.matmul %195, %196, %cst_102 {dimension_numbers = #tpu.dot_dimension_numbers<[1], [0], [0], [1], [0, 0, 1, 1], [], []>} : vector<32x32xf32>, vector<32x32xf32>, vector<32x32xf32> -> vector<32x32xf32>
    %c1_i32_103 = arith.constant 1 : i32
    %198 = tpu.dynamic_rotate %189 by %c1_i32_103 dim 0 : vector<32x32xf32>, i32 -> vector<32x32xf32>
    %199 = tpu.iota {dimensions = array<i32: 0>} : vector<32x32xi32>
    %c1_i32_104 = arith.constant 1 : i32
    %200 = vector.broadcast %c1_i32_104 : i32 to vector<32x32xi32>
    %201 = arith.cmpi slt, %199, %200 : vector<32x32xi32>
    %cst_105 = arith.constant 0.000000e+00 : f32
    %202 = vector.broadcast %cst_105 : f32 to vector<32x32xf32>
    %203 = arith.select %201, %202, %198 : vector<32x32xi1>, vector<32x32xf32>
    %c736 = arith.constant 736 : index
    %c0_106 = arith.constant 0 : index
    %204 = vector.load %arg2[%c736, %c0_106] : memref<992x32xf32, #tpu.memory_space<vmem>>, vector<32x32xf32>
    %cst_107 = arith.constant dense<0.000000e+00> : vector<32x32xf32>
    %205 = tpu.matmul %203, %204, %cst_107 {dimension_numbers = #tpu.dot_dimension_numbers<[1], [0], [0], [1], [0, 0, 1, 1], [], []>} : vector<32x32xf32>, vector<32x32xf32>, vector<32x32xf32> -> vector<32x32xf32>
    %206 = arith.addf %197, %205 : vector<32x32xf32>
    %c768 = arith.constant 768 : index
    %c0_108 = arith.constant 0 : index
    %207 = vector.load %arg2[%c768, %c0_108] : memref<992x32xf32, #tpu.memory_space<vmem>>, vector<32x32xf32>
    %cst_109 = arith.constant dense<0.000000e+00> : vector<32x32xf32>
    %208 = tpu.matmul %189, %207, %cst_109 {dimension_numbers = #tpu.dot_dimension_numbers<[1], [0], [0], [1], [0, 0, 1, 1], [], []>} : vector<32x32xf32>, vector<32x32xf32>, vector<32x32xf32> -> vector<32x32xf32>
    %209 = arith.addf %206, %208 : vector<32x32xf32>
    %c10 = arith.constant 10 : index
    %c0_110 = arith.constant 0 : index
    %210 = vector.load %arg3[%c10, %c0_110] : memref<13x32xf32, #tpu.memory_space<vmem>>, vector<1x32xf32>
    %211 = vector.broadcast %210 : vector<1x32xf32> to vector<32x32xf32>
    %212 = arith.addf %209, %211 : vector<32x32xf32>
    %c2_i32_111 = arith.constant 2 : i32
    %213 = tpu.dynamic_rotate %212 by %c2_i32_111 dim 0 : vector<32x32xf32>, i32 -> vector<32x32xf32>
    %214 = tpu.iota {dimensions = array<i32: 0>} : vector<32x32xi32>
    %c2_i32_112 = arith.constant 2 : i32
    %215 = vector.broadcast %c2_i32_112 : i32 to vector<32x32xi32>
    %216 = arith.cmpi slt, %214, %215 : vector<32x32xi32>
    %cst_113 = arith.constant 0.000000e+00 : f32
    %217 = vector.broadcast %cst_113 : f32 to vector<32x32xf32>
    %218 = arith.select %216, %217, %213 : vector<32x32xi1>, vector<32x32xf32>
    %c800 = arith.constant 800 : index
    %c0_114 = arith.constant 0 : index
    %219 = vector.load %arg2[%c800, %c0_114] : memref<992x32xf32, #tpu.memory_space<vmem>>, vector<32x32xf32>
    %cst_115 = arith.constant dense<0.000000e+00> : vector<32x32xf32>
    %220 = tpu.matmul %218, %219, %cst_115 {dimension_numbers = #tpu.dot_dimension_numbers<[1], [0], [0], [1], [0, 0, 1, 1], [], []>} : vector<32x32xf32>, vector<32x32xf32>, vector<32x32xf32> -> vector<32x32xf32>
    %c1_i32_116 = arith.constant 1 : i32
    %221 = tpu.dynamic_rotate %212 by %c1_i32_116 dim 0 : vector<32x32xf32>, i32 -> vector<32x32xf32>
    %222 = tpu.iota {dimensions = array<i32: 0>} : vector<32x32xi32>
    %c1_i32_117 = arith.constant 1 : i32
    %223 = vector.broadcast %c1_i32_117 : i32 to vector<32x32xi32>
    %224 = arith.cmpi slt, %222, %223 : vector<32x32xi32>
    %cst_118 = arith.constant 0.000000e+00 : f32
    %225 = vector.broadcast %cst_118 : f32 to vector<32x32xf32>
    %226 = arith.select %224, %225, %221 : vector<32x32xi1>, vector<32x32xf32>
    %c832 = arith.constant 832 : index
    %c0_119 = arith.constant 0 : index
    %227 = vector.load %arg2[%c832, %c0_119] : memref<992x32xf32, #tpu.memory_space<vmem>>, vector<32x32xf32>
    %cst_120 = arith.constant dense<0.000000e+00> : vector<32x32xf32>
    %228 = tpu.matmul %226, %227, %cst_120 {dimension_numbers = #tpu.dot_dimension_numbers<[1], [0], [0], [1], [0, 0, 1, 1], [], []>} : vector<32x32xf32>, vector<32x32xf32>, vector<32x32xf32> -> vector<32x32xf32>
    %229 = arith.addf %220, %228 : vector<32x32xf32>
    %c864 = arith.constant 864 : index
    %c0_121 = arith.constant 0 : index
    %230 = vector.load %arg2[%c864, %c0_121] : memref<992x32xf32, #tpu.memory_space<vmem>>, vector<32x32xf32>
    %cst_122 = arith.constant dense<0.000000e+00> : vector<32x32xf32>
    %231 = tpu.matmul %212, %230, %cst_122 {dimension_numbers = #tpu.dot_dimension_numbers<[1], [0], [0], [1], [0, 0, 1, 1], [], []>} : vector<32x32xf32>, vector<32x32xf32>, vector<32x32xf32> -> vector<32x32xf32>
    %232 = arith.addf %229, %231 : vector<32x32xf32>
    %c11 = arith.constant 11 : index
    %c0_123 = arith.constant 0 : index
    %233 = vector.load %arg3[%c11, %c0_123] : memref<13x32xf32, #tpu.memory_space<vmem>>, vector<1x32xf32>
    %234 = vector.broadcast %233 : vector<1x32xf32> to vector<32x32xf32>
    %235 = arith.addf %232, %234 : vector<32x32xf32>
    %cst_124 = arith.constant 0.000000e+00 : f32
    %236 = vector.broadcast %cst_124 : f32 to vector<32x32xf32>
    %237 = arith.maximumf %235, %236 : vector<32x32xf32>
    %c2_i32_125 = arith.constant 2 : i32
    %238 = tpu.dynamic_rotate %237 by %c2_i32_125 dim 0 : vector<32x32xf32>, i32 -> vector<32x32xf32>
    %239 = tpu.iota {dimensions = array<i32: 0>} : vector<32x32xi32>
    %c2_i32_126 = arith.constant 2 : i32
    %240 = vector.broadcast %c2_i32_126 : i32 to vector<32x32xi32>
    %241 = arith.cmpi slt, %239, %240 : vector<32x32xi32>
    %cst_127 = arith.constant 0.000000e+00 : f32
    %242 = vector.broadcast %cst_127 : f32 to vector<32x32xf32>
    %243 = arith.select %241, %242, %238 : vector<32x32xi1>, vector<32x32xf32>
    %c896 = arith.constant 896 : index
    %c0_128 = arith.constant 0 : index
    %244 = vector.load %arg2[%c896, %c0_128] : memref<992x32xf32, #tpu.memory_space<vmem>>, vector<32x8xf32>
    %cst_129 = arith.constant dense<0.000000e+00> : vector<32x8xf32>
    %245 = tpu.matmul %243, %244, %cst_129 {dimension_numbers = #tpu.dot_dimension_numbers<[1], [0], [0], [1], [0, 0, 1, 1], [], []>} : vector<32x32xf32>, vector<32x8xf32>, vector<32x8xf32> -> vector<32x8xf32>
    %c1_i32_130 = arith.constant 1 : i32
    %246 = tpu.dynamic_rotate %237 by %c1_i32_130 dim 0 : vector<32x32xf32>, i32 -> vector<32x32xf32>
    %247 = tpu.iota {dimensions = array<i32: 0>} : vector<32x32xi32>
    %c1_i32_131 = arith.constant 1 : i32
    %248 = vector.broadcast %c1_i32_131 : i32 to vector<32x32xi32>
    %249 = arith.cmpi slt, %247, %248 : vector<32x32xi32>
    %cst_132 = arith.constant 0.000000e+00 : f32
    %250 = vector.broadcast %cst_132 : f32 to vector<32x32xf32>
    %251 = arith.select %249, %250, %246 : vector<32x32xi1>, vector<32x32xf32>
    %c928 = arith.constant 928 : index
    %c0_133 = arith.constant 0 : index
    %252 = vector.load %arg2[%c928, %c0_133] : memref<992x32xf32, #tpu.memory_space<vmem>>, vector<32x8xf32>
    %cst_134 = arith.constant dense<0.000000e+00> : vector<32x8xf32>
    %253 = tpu.matmul %251, %252, %cst_134 {dimension_numbers = #tpu.dot_dimension_numbers<[1], [0], [0], [1], [0, 0, 1, 1], [], []>} : vector<32x32xf32>, vector<32x8xf32>, vector<32x8xf32> -> vector<32x8xf32>
    %254 = arith.addf %245, %253 : vector<32x8xf32>
    %c960 = arith.constant 960 : index
    %c0_135 = arith.constant 0 : index
    %255 = vector.load %arg2[%c960, %c0_135] : memref<992x32xf32, #tpu.memory_space<vmem>>, vector<32x8xf32>
    %cst_136 = arith.constant dense<0.000000e+00> : vector<32x8xf32>
    %256 = tpu.matmul %237, %255, %cst_136 {dimension_numbers = #tpu.dot_dimension_numbers<[1], [0], [0], [1], [0, 0, 1, 1], [], []>} : vector<32x32xf32>, vector<32x8xf32>, vector<32x8xf32> -> vector<32x8xf32>
    %257 = arith.addf %254, %256 : vector<32x8xf32>
    %c12 = arith.constant 12 : index
    %c0_137 = arith.constant 0 : index
    %258 = vector.load %arg3[%c12, %c0_137] : memref<13x32xf32, #tpu.memory_space<vmem>>, vector<1x8xf32>
    %259 = vector.broadcast %258 : vector<1x8xf32> to vector<32x8xf32>
    %260 = arith.addf %257, %259 : vector<32x8xf32>
    %261 = tpu.transpose %260, [1, 0] : vector<32x8xf32> -> vector<8x32xf32>
    %cst_138 = arith.constant 0.000000e+00 : f32
    %262 = vector.broadcast %cst_138 : f32 to vector<8x96xf32>
    %263 = tpu.concatenate %261, %262 in 1 : vector<8x32xf32>, vector<8x96xf32> -> vector<8x128xf32>
    %c0_139 = arith.constant 0 : index
    %c0_140 = arith.constant 0 : index
    %c0_141 = arith.constant 0 : index
    %264 = vector.load %arg4[%c0_139, %c0_140, %c0_141] : memref<2x8x128xf32, #tpu.memory_space<vmem>>, vector<1x8x128xf32>
    %265 = vector.shape_cast %264 : vector<1x8x128xf32> to vector<8x128xf32>
    %266 = vector.shape_cast %263 : vector<8x128xf32> to vector<1x8x128xf32>
    tpu.vector_store %arg4[%c0_139, %c0_140, %c0_141], %266 {strides = array<i32>} : memref<2x8x128xf32, #tpu.memory_space<vmem>>, vector<1x8x128xf32>,
    %c1_142 = arith.constant 1 : index
    %c0_143 = arith.constant 0 : index
    %c0_144 = arith.constant 0 : index
    %267 = vector.load %arg1[%c1_142, %c0_143, %c0_144] : memref<2x8x32xf32, #tpu.memory_space<vmem>>, vector<1x8x32xf32>
    %268 = vector.shape_cast %267 : vector<1x8x32xf32> to vector<8x32xf32>
    %c2_i32_145 = arith.constant 2 : i32
    %269 = tpu.dynamic_rotate %268 by %c2_i32_145 dim 0 : vector<8x32xf32>, i32 -> vector<8x32xf32>
    %270 = tpu.iota {dimensions = array<i32: 0>} : vector<8x32xi32>
    %c2_i32_146 = arith.constant 2 : i32
    %271 = vector.broadcast %c2_i32_146 : i32 to vector<8x32xi32>
    %272 = arith.cmpi slt, %270, %271 : vector<8x32xi32>
    %cst_147 = arith.constant 0.000000e+00 : f32
    %273 = vector.broadcast %cst_147 : f32 to vector<8x32xf32>
    %274 = arith.select %272, %273, %269 : vector<8x32xi1>, vector<8x32xf32>
    %c0_148 = arith.constant 0 : index
    %c0_149 = arith.constant 0 : index
    %275 = vector.load %arg2[%c0_148, %c0_149] : memref<992x32xf32, #tpu.memory_space<vmem>>, vector<32x32xf32>
    %cst_150 = arith.constant dense<0.000000e+00> : vector<8x32xf32>
    %276 = tpu.matmul %274, %275, %cst_150 {dimension_numbers = #tpu.dot_dimension_numbers<[1], [0], [0], [1], [0, 0, 1, 1], [], []>} : vector<8x32xf32>, vector<32x32xf32>, vector<8x32xf32> -> vector<8x32xf32>
    %c1_i32_151 = arith.constant 1 : i32
    %277 = tpu.dynamic_rotate %268 by %c1_i32_151 dim 0 : vector<8x32xf32>, i32 -> vector<8x32xf32>
    %278 = tpu.iota {dimensions = array<i32: 0>} : vector<8x32xi32>
    %c1_i32_152 = arith.constant 1 : i32
    %279 = vector.broadcast %c1_i32_152 : i32 to vector<8x32xi32>
    %280 = arith.cmpi slt, %278, %279 : vector<8x32xi32>
    %cst_153 = arith.constant 0.000000e+00 : f32
    %281 = vector.broadcast %cst_153 : f32 to vector<8x32xf32>
    %282 = arith.select %280, %281, %277 : vector<8x32xi1>, vector<8x32xf32>
    %c32_154 = arith.constant 32 : index
    %c0_155 = arith.constant 0 : index
    %283 = vector.load %arg2[%c32_154, %c0_155] : memref<992x32xf32, #tpu.memory_space<vmem>>, vector<32x32xf32>
    %cst_156 = arith.constant dense<0.000000e+00> : vector<8x32xf32>
    %284 = tpu.matmul %282, %283, %cst_156 {dimension_numbers = #tpu.dot_dimension_numbers<[1], [0], [0], [1], [0, 0, 1, 1], [], []>} : vector<8x32xf32>, vector<32x32xf32>, vector<8x32xf32> -> vector<8x32xf32>
    %285 = arith.addf %276, %284 : vector<8x32xf32>
    %c64_157 = arith.constant 64 : index
    %c0_158 = arith.constant 0 : index
    %286 = vector.load %arg2[%c64_157, %c0_158] : memref<992x32xf32, #tpu.memory_space<vmem>>, vector<32x32xf32>
    %cst_159 = arith.constant dense<0.000000e+00> : vector<8x32xf32>
    %287 = tpu.matmul %268, %286, %cst_159 {dimension_numbers = #tpu.dot_dimension_numbers<[1], [0], [0], [1], [0, 0, 1, 1], [], []>} : vector<8x32xf32>, vector<32x32xf32>, vector<8x32xf32> -> vector<8x32xf32>
    %288 = arith.addf %285, %287 : vector<8x32xf32>
    %c0_160 = arith.constant 0 : index
    %c0_161 = arith.constant 0 : index
    %289 = vector.load %arg3[%c0_160, %c0_161] : memref<13x32xf32, #tpu.memory_space<vmem>>, vector<1x32xf32>
    %290 = vector.broadcast %289 : vector<1x32xf32> to vector<8x32xf32>
    %291 = arith.addf %288, %290 : vector<8x32xf32>
    %cst_162 = arith.constant 0.000000e+00 : f32
    %292 = vector.broadcast %cst_162 : f32 to vector<8x32xf32>
    %293 = arith.maximumf %291, %292 : vector<8x32xf32>
    %cst_163 = arith.constant 0.000000e+00 : f32
    %294 = vector.broadcast %cst_163 : f32 to vector<8x32xf32>
    %295 = arith.maximumf %293, %294 : vector<8x32xf32>
    %c6_i32_164 = arith.constant 6 : i32
    %296 = tpu.dynamic_rotate %295 by %c6_i32_164 dim 0 : vector<8x32xf32>, i32 -> vector<8x32xf32>
    %297 = tpu.iota {dimensions = array<i32: 0>} : vector<8x32xi32>
    %c6_i32_165 = arith.constant 6 : i32
    %298 = vector.broadcast %c6_i32_165 : i32 to vector<8x32xi32>
    %299 = arith.cmpi slt, %297, %298 : vector<8x32xi32>
    %cst_166 = arith.constant 0.000000e+00 : f32
    %300 = vector.broadcast %cst_166 : f32 to vector<8x32xf32>
    %301 = arith.select %299, %300, %296 : vector<8x32xi1>, vector<8x32xf32>
    %c96_167 = arith.constant 96 : index
    %c0_168 = arith.constant 0 : index
    %302 = vector.load %arg2[%c96_167, %c0_168] : memref<992x32xf32, #tpu.memory_space<vmem>>, vector<32x32xf32>
    %cst_169 = arith.constant dense<0.000000e+00> : vector<8x32xf32>
    %303 = tpu.matmul %301, %302, %cst_169 {dimension_numbers = #tpu.dot_dimension_numbers<[1], [0], [0], [1], [0, 0, 1, 1], [], []>} : vector<8x32xf32>, vector<32x32xf32>, vector<8x32xf32> -> vector<8x32xf32>
    %c3_i32_170 = arith.constant 3 : i32
    %304 = tpu.dynamic_rotate %295 by %c3_i32_170 dim 0 : vector<8x32xf32>, i32 -> vector<8x32xf32>
    %305 = tpu.iota {dimensions = array<i32: 0>} : vector<8x32xi32>
    %c3_i32_171 = arith.constant 3 : i32
    %306 = vector.broadcast %c3_i32_171 : i32 to vector<8x32xi32>
    %307 = arith.cmpi slt, %305, %306 : vector<8x32xi32>
    %cst_172 = arith.constant 0.000000e+00 : f32
    %308 = vector.broadcast %cst_172 : f32 to vector<8x32xf32>
    %309 = arith.select %307, %308, %304 : vector<8x32xi1>, vector<8x32xf32>
    %c128_173 = arith.constant 128 : index
    %c0_174 = arith.constant 0 : index
    %310 = vector.load %arg2[%c128_173, %c0_174] : memref<992x32xf32, #tpu.memory_space<vmem>>, vector<32x32xf32>
    %cst_175 = arith.constant dense<0.000000e+00> : vector<8x32xf32>
    %311 = tpu.matmul %309, %310, %cst_175 {dimension_numbers = #tpu.dot_dimension_numbers<[1], [0], [0], [1], [0, 0, 1, 1], [], []>} : vector<8x32xf32>, vector<32x32xf32>, vector<8x32xf32> -> vector<8x32xf32>
    %312 = arith.addf %303, %311 : vector<8x32xf32>
    %c160_176 = arith.constant 160 : index
    %c0_177 = arith.constant 0 : index
    %313 = vector.load %arg2[%c160_176, %c0_177] : memref<992x32xf32, #tpu.memory_space<vmem>>, vector<32x32xf32>
    %cst_178 = arith.constant dense<0.000000e+00> : vector<8x32xf32>
    %314 = tpu.matmul %295, %313, %cst_178 {dimension_numbers = #tpu.dot_dimension_numbers<[1], [0], [0], [1], [0, 0, 1, 1], [], []>} : vector<8x32xf32>, vector<32x32xf32>, vector<8x32xf32> -> vector<8x32xf32>
    %315 = arith.addf %312, %314 : vector<8x32xf32>
    %c1_179 = arith.constant 1 : index
    %c0_180 = arith.constant 0 : index
    %316 = vector.load %arg3[%c1_179, %c0_180] : memref<13x32xf32, #tpu.memory_space<vmem>>, vector<1x32xf32>
    %317 = vector.broadcast %316 : vector<1x32xf32> to vector<8x32xf32>
    %318 = arith.addf %315, %317 : vector<8x32xf32>
    %cst_181 = arith.constant 0.000000e+00 : f32
    %319 = vector.broadcast %cst_181 : f32 to vector<8x32xf32>
    %320 = arith.maximumf %318, %319 : vector<8x32xf32>
    %c192_182 = arith.constant 192 : index
    %c0_183 = arith.constant 0 : index
    %321 = vector.load %arg2[%c192_182, %c0_183] : memref<992x32xf32, #tpu.memory_space<vmem>>, vector<32x32xf32>
    %cst_184 = arith.constant dense<0.000000e+00> : vector<8x32xf32>
    %322 = tpu.matmul %320, %321, %cst_184 {dimension_numbers = #tpu.dot_dimension_numbers<[1], [0], [0], [1], [0, 0, 1, 1], [], []>} : vector<8x32xf32>, vector<32x32xf32>, vector<8x32xf32> -> vector<8x32xf32>
    %c2_185 = arith.constant 2 : index
    %c0_186 = arith.constant 0 : index
    %323 = vector.load %arg3[%c2_185, %c0_186] : memref<13x32xf32, #tpu.memory_space<vmem>>, vector<1x32xf32>
    %324 = vector.broadcast %323 : vector<1x32xf32> to vector<8x32xf32>
    %325 = arith.addf %322, %324 : vector<8x32xf32>
    %326 = arith.addf %325, %293 : vector<8x32xf32>
    %cst_187 = arith.constant 0.000000e+00 : f32
    %327 = vector.broadcast %cst_187 : f32 to vector<8x32xf32>
    %328 = arith.maximumf %326, %327 : vector<8x32xf32>
    %c2_i32_188 = arith.constant 2 : i32
    %329 = tpu.dynamic_rotate %328 by %c2_i32_188 dim 0 : vector<8x32xf32>, i32 -> vector<8x32xf32>
    %330 = tpu.iota {dimensions = array<i32: 0>} : vector<8x32xi32>
    %c2_i32_189 = arith.constant 2 : i32
    %331 = vector.broadcast %c2_i32_189 : i32 to vector<8x32xi32>
    %332 = arith.cmpi slt, %330, %331 : vector<8x32xi32>
    %cst_190 = arith.constant 0.000000e+00 : f32
    %333 = vector.broadcast %cst_190 : f32 to vector<8x32xf32>
    %334 = arith.select %332, %333, %329 : vector<8x32xi1>, vector<8x32xf32>
    %c224_191 = arith.constant 224 : index
    %c0_192 = arith.constant 0 : index
    %335 = vector.load %arg2[%c224_191, %c0_192] : memref<992x32xf32, #tpu.memory_space<vmem>>, vector<32x32xf32>
    %cst_193 = arith.constant dense<0.000000e+00> : vector<8x32xf32>
    %336 = tpu.matmul %334, %335, %cst_193 {dimension_numbers = #tpu.dot_dimension_numbers<[1], [0], [0], [1], [0, 0, 1, 1], [], []>} : vector<8x32xf32>, vector<32x32xf32>, vector<8x32xf32> -> vector<8x32xf32>
    %c1_i32_194 = arith.constant 1 : i32
    %337 = tpu.dynamic_rotate %328 by %c1_i32_194 dim 0 : vector<8x32xf32>, i32 -> vector<8x32xf32>
    %338 = tpu.iota {dimensions = array<i32: 0>} : vector<8x32xi32>
    %c1_i32_195 = arith.constant 1 : i32
    %339 = vector.broadcast %c1_i32_195 : i32 to vector<8x32xi32>
    %340 = arith.cmpi slt, %338, %339 : vector<8x32xi32>
    %cst_196 = arith.constant 0.000000e+00 : f32
    %341 = vector.broadcast %cst_196 : f32 to vector<8x32xf32>
    %342 = arith.select %340, %341, %337 : vector<8x32xi1>, vector<8x32xf32>
    %c256_197 = arith.constant 256 : index
    %c0_198 = arith.constant 0 : index
    %343 = vector.load %arg2[%c256_197, %c0_198] : memref<992x32xf32, #tpu.memory_space<vmem>>, vector<32x32xf32>
    %cst_199 = arith.constant dense<0.000000e+00> : vector<8x32xf32>
    %344 = tpu.matmul %342, %343, %cst_199 {dimension_numbers = #tpu.dot_dimension_numbers<[1], [0], [0], [1], [0, 0, 1, 1], [], []>} : vector<8x32xf32>, vector<32x32xf32>, vector<8x32xf32> -> vector<8x32xf32>
    %345 = arith.addf %336, %344 : vector<8x32xf32>
    %c288_200 = arith.constant 288 : index
    %c0_201 = arith.constant 0 : index
    %346 = vector.load %arg2[%c288_200, %c0_201] : memref<992x32xf32, #tpu.memory_space<vmem>>, vector<32x32xf32>
    %cst_202 = arith.constant dense<0.000000e+00> : vector<8x32xf32>
    %347 = tpu.matmul %328, %346, %cst_202 {dimension_numbers = #tpu.dot_dimension_numbers<[1], [0], [0], [1], [0, 0, 1, 1], [], []>} : vector<8x32xf32>, vector<32x32xf32>, vector<8x32xf32> -> vector<8x32xf32>
    %348 = arith.addf %345, %347 : vector<8x32xf32>
    %c3_203 = arith.constant 3 : index
    %c0_204 = arith.constant 0 : index
    %349 = vector.load %arg3[%c3_203, %c0_204] : memref<13x32xf32, #tpu.memory_space<vmem>>, vector<1x32xf32>
    %350 = vector.broadcast %349 : vector<1x32xf32> to vector<8x32xf32>
    %351 = arith.addf %348, %350 : vector<8x32xf32>
    %cst_205 = arith.constant 0.000000e+00 : f32
    %352 = vector.broadcast %cst_205 : f32 to vector<8x32xf32>
    %353 = arith.maximumf %351, %352 : vector<8x32xf32>
    %c320_206 = arith.constant 320 : index
    %c0_207 = arith.constant 0 : index
    %354 = vector.load %arg2[%c320_206, %c0_207] : memref<992x32xf32, #tpu.memory_space<vmem>>, vector<32x32xf32>
    %cst_208 = arith.constant dense<0.000000e+00> : vector<8x32xf32>
    %355 = tpu.matmul %353, %354, %cst_208 {dimension_numbers = #tpu.dot_dimension_numbers<[1], [0], [0], [1], [0, 0, 1, 1], [], []>} : vector<8x32xf32>, vector<32x32xf32>, vector<8x32xf32> -> vector<8x32xf32>
    %c4_209 = arith.constant 4 : index
    %c0_210 = arith.constant 0 : index
    %356 = vector.load %arg3[%c4_209, %c0_210] : memref<13x32xf32, #tpu.memory_space<vmem>>, vector<1x32xf32>
    %357 = vector.broadcast %356 : vector<1x32xf32> to vector<8x32xf32>
    %358 = arith.addf %355, %357 : vector<8x32xf32>
    %359 = arith.addf %358, %326 : vector<8x32xf32>
    %360 = vector.shape_cast %359 : vector<8x32xf32> to vector<8x1x32xf32>
    %361 = vector.shape_cast %360 : vector<8x1x32xf32> to vector<8x1x32xf32>
    %362 = vector.broadcast %361 : vector<8x1x32xf32> to vector<8x2x32xf32>
    %363 = vector.shape_cast %362 : vector<8x2x32xf32> to vector<16x32xf32>
    %c2_i32_211 = arith.constant 2 : i32
    %364 = tpu.dynamic_rotate %363 by %c2_i32_211 dim 0 : vector<16x32xf32>, i32 -> vector<16x32xf32>
    %365 = tpu.iota {dimensions = array<i32: 0>} : vector<16x32xi32>
    %c2_i32_212 = arith.constant 2 : i32
    %366 = vector.broadcast %c2_i32_212 : i32 to vector<16x32xi32>
    %367 = arith.cmpi slt, %365, %366 : vector<16x32xi32>
    %cst_213 = arith.constant 0.000000e+00 : f32
    %368 = vector.broadcast %cst_213 : f32 to vector<16x32xf32>
    %369 = arith.select %367, %368, %364 : vector<16x32xi1>, vector<16x32xf32>
    %c352_214 = arith.constant 352 : index
    %c0_215 = arith.constant 0 : index
    %370 = vector.load %arg2[%c352_214, %c0_215] : memref<992x32xf32, #tpu.memory_space<vmem>>, vector<32x32xf32>
    %cst_216 = arith.constant dense<0.000000e+00> : vector<16x32xf32>
    %371 = tpu.matmul %369, %370, %cst_216 {dimension_numbers = #tpu.dot_dimension_numbers<[1], [0], [0], [1], [0, 0, 1, 1], [], []>} : vector<16x32xf32>, vector<32x32xf32>, vector<16x32xf32> -> vector<16x32xf32>
    %c1_i32_217 = arith.constant 1 : i32
    %372 = tpu.dynamic_rotate %363 by %c1_i32_217 dim 0 : vector<16x32xf32>, i32 -> vector<16x32xf32>
    %373 = tpu.iota {dimensions = array<i32: 0>} : vector<16x32xi32>
    %c1_i32_218 = arith.constant 1 : i32
    %374 = vector.broadcast %c1_i32_218 : i32 to vector<16x32xi32>
    %375 = arith.cmpi slt, %373, %374 : vector<16x32xi32>
    %cst_219 = arith.constant 0.000000e+00 : f32
    %376 = vector.broadcast %cst_219 : f32 to vector<16x32xf32>
    %377 = arith.select %375, %376, %372 : vector<16x32xi1>, vector<16x32xf32>
    %c384_220 = arith.constant 384 : index
    %c0_221 = arith.constant 0 : index
    %378 = vector.load %arg2[%c384_220, %c0_221] : memref<992x32xf32, #tpu.memory_space<vmem>>, vector<32x32xf32>
    %cst_222 = arith.constant dense<0.000000e+00> : vector<16x32xf32>
    %379 = tpu.matmul %377, %378, %cst_222 {dimension_numbers = #tpu.dot_dimension_numbers<[1], [0], [0], [1], [0, 0, 1, 1], [], []>} : vector<16x32xf32>, vector<32x32xf32>, vector<16x32xf32> -> vector<16x32xf32>
    %380 = arith.addf %371, %379 : vector<16x32xf32>
    %c416_223 = arith.constant 416 : index
    %c0_224 = arith.constant 0 : index
    %381 = vector.load %arg2[%c416_223, %c0_224] : memref<992x32xf32, #tpu.memory_space<vmem>>, vector<32x32xf32>
    %cst_225 = arith.constant dense<0.000000e+00> : vector<16x32xf32>
    %382 = tpu.matmul %363, %381, %cst_225 {dimension_numbers = #tpu.dot_dimension_numbers<[1], [0], [0], [1], [0, 0, 1, 1], [], []>} : vector<16x32xf32>, vector<32x32xf32>, vector<16x32xf32> -> vector<16x32xf32>
    %383 = arith.addf %380, %382 : vector<16x32xf32>
    %c5_226 = arith.constant 5 : index
    %c0_227 = arith.constant 0 : index
    %384 = vector.load %arg3[%c5_226, %c0_227] : memref<13x32xf32, #tpu.memory_space<vmem>>, vector<1x32xf32>
    %385 = vector.broadcast %384 : vector<1x32xf32> to vector<16x32xf32>
    %386 = arith.addf %383, %385 : vector<16x32xf32>
    %cst_228 = arith.constant 0.000000e+00 : f32
    %387 = vector.broadcast %cst_228 : f32 to vector<16x32xf32>
    %388 = arith.maximumf %386, %387 : vector<16x32xf32>
    %c6_i32_229 = arith.constant 6 : i32
    %389 = tpu.dynamic_rotate %388 by %c6_i32_229 dim 0 : vector<16x32xf32>, i32 -> vector<16x32xf32>
    %390 = tpu.iota {dimensions = array<i32: 0>} : vector<16x32xi32>
    %c6_i32_230 = arith.constant 6 : i32
    %391 = vector.broadcast %c6_i32_230 : i32 to vector<16x32xi32>
    %392 = arith.cmpi slt, %390, %391 : vector<16x32xi32>
    %cst_231 = arith.constant 0.000000e+00 : f32
    %393 = vector.broadcast %cst_231 : f32 to vector<16x32xf32>
    %394 = arith.select %392, %393, %389 : vector<16x32xi1>, vector<16x32xf32>
    %c448_232 = arith.constant 448 : index
    %c0_233 = arith.constant 0 : index
    %395 = vector.load %arg2[%c448_232, %c0_233] : memref<992x32xf32, #tpu.memory_space<vmem>>, vector<32x32xf32>
    %cst_234 = arith.constant dense<0.000000e+00> : vector<16x32xf32>
    %396 = tpu.matmul %394, %395, %cst_234 {dimension_numbers = #tpu.dot_dimension_numbers<[1], [0], [0], [1], [0, 0, 1, 1], [], []>} : vector<16x32xf32>, vector<32x32xf32>, vector<16x32xf32> -> vector<16x32xf32>
    %c3_i32_235 = arith.constant 3 : i32
    %397 = tpu.dynamic_rotate %388 by %c3_i32_235 dim 0 : vector<16x32xf32>, i32 -> vector<16x32xf32>
    %398 = tpu.iota {dimensions = array<i32: 0>} : vector<16x32xi32>
    %c3_i32_236 = arith.constant 3 : i32
    %399 = vector.broadcast %c3_i32_236 : i32 to vector<16x32xi32>
    %400 = arith.cmpi slt, %398, %399 : vector<16x32xi32>
    %cst_237 = arith.constant 0.000000e+00 : f32
    %401 = vector.broadcast %cst_237 : f32 to vector<16x32xf32>
    %402 = arith.select %400, %401, %397 : vector<16x32xi1>, vector<16x32xf32>
    %c480_238 = arith.constant 480 : index
    %c0_239 = arith.constant 0 : index
    %403 = vector.load %arg2[%c480_238, %c0_239] : memref<992x32xf32, #tpu.memory_space<vmem>>, vector<32x32xf32>
    %cst_240 = arith.constant dense<0.000000e+00> : vector<16x32xf32>
    %404 = tpu.matmul %402, %403, %cst_240 {dimension_numbers = #tpu.dot_dimension_numbers<[1], [0], [0], [1], [0, 0, 1, 1], [], []>} : vector<16x32xf32>, vector<32x32xf32>, vector<16x32xf32> -> vector<16x32xf32>
    %405 = arith.addf %396, %404 : vector<16x32xf32>
    %c512_241 = arith.constant 512 : index
    %c0_242 = arith.constant 0 : index
    %406 = vector.load %arg2[%c512_241, %c0_242] : memref<992x32xf32, #tpu.memory_space<vmem>>, vector<32x32xf32>
    %cst_243 = arith.constant dense<0.000000e+00> : vector<16x32xf32>
    %407 = tpu.matmul %388, %406, %cst_243 {dimension_numbers = #tpu.dot_dimension_numbers<[1], [0], [0], [1], [0, 0, 1, 1], [], []>} : vector<16x32xf32>, vector<32x32xf32>, vector<16x32xf32> -> vector<16x32xf32>
    %408 = arith.addf %405, %407 : vector<16x32xf32>
    %c6_244 = arith.constant 6 : index
    %c0_245 = arith.constant 0 : index
    %409 = vector.load %arg3[%c6_244, %c0_245] : memref<13x32xf32, #tpu.memory_space<vmem>>, vector<1x32xf32>
    %410 = vector.broadcast %409 : vector<1x32xf32> to vector<16x32xf32>
    %411 = arith.addf %408, %410 : vector<16x32xf32>
    %cst_246 = arith.constant 0.000000e+00 : f32
    %412 = vector.broadcast %cst_246 : f32 to vector<16x32xf32>
    %413 = arith.maximumf %411, %412 : vector<16x32xf32>
    %c544_247 = arith.constant 544 : index
    %c0_248 = arith.constant 0 : index
    %414 = vector.load %arg2[%c544_247, %c0_248] : memref<992x32xf32, #tpu.memory_space<vmem>>, vector<32x32xf32>
    %cst_249 = arith.constant dense<0.000000e+00> : vector<16x32xf32>
    %415 = tpu.matmul %413, %414, %cst_249 {dimension_numbers = #tpu.dot_dimension_numbers<[1], [0], [0], [1], [0, 0, 1, 1], [], []>} : vector<16x32xf32>, vector<32x32xf32>, vector<16x32xf32> -> vector<16x32xf32>
    %c7_250 = arith.constant 7 : index
    %c0_251 = arith.constant 0 : index
    %416 = vector.load %arg3[%c7_250, %c0_251] : memref<13x32xf32, #tpu.memory_space<vmem>>, vector<1x32xf32>
    %417 = vector.broadcast %416 : vector<1x32xf32> to vector<16x32xf32>
    %418 = arith.addf %415, %417 : vector<16x32xf32>
    %419 = arith.addf %418, %386 : vector<16x32xf32>
    %cst_252 = arith.constant 0.000000e+00 : f32
    %420 = vector.broadcast %cst_252 : f32 to vector<16x32xf32>
    %421 = arith.maximumf %419, %420 : vector<16x32xf32>
    %c2_i32_253 = arith.constant 2 : i32
    %422 = tpu.dynamic_rotate %421 by %c2_i32_253 dim 0 : vector<16x32xf32>, i32 -> vector<16x32xf32>
    %423 = tpu.iota {dimensions = array<i32: 0>} : vector<16x32xi32>
    %c2_i32_254 = arith.constant 2 : i32
    %424 = vector.broadcast %c2_i32_254 : i32 to vector<16x32xi32>
    %425 = arith.cmpi slt, %423, %424 : vector<16x32xi32>
    %cst_255 = arith.constant 0.000000e+00 : f32
    %426 = vector.broadcast %cst_255 : f32 to vector<16x32xf32>
    %427 = arith.select %425, %426, %422 : vector<16x32xi1>, vector<16x32xf32>
    %c576_256 = arith.constant 576 : index
    %c0_257 = arith.constant 0 : index
    %428 = vector.load %arg2[%c576_256, %c0_257] : memref<992x32xf32, #tpu.memory_space<vmem>>, vector<32x32xf32>
    %cst_258 = arith.constant dense<0.000000e+00> : vector<16x32xf32>
    %429 = tpu.matmul %427, %428, %cst_258 {dimension_numbers = #tpu.dot_dimension_numbers<[1], [0], [0], [1], [0, 0, 1, 1], [], []>} : vector<16x32xf32>, vector<32x32xf32>, vector<16x32xf32> -> vector<16x32xf32>
    %c1_i32_259 = arith.constant 1 : i32
    %430 = tpu.dynamic_rotate %421 by %c1_i32_259 dim 0 : vector<16x32xf32>, i32 -> vector<16x32xf32>
    %431 = tpu.iota {dimensions = array<i32: 0>} : vector<16x32xi32>
    %c1_i32_260 = arith.constant 1 : i32
    %432 = vector.broadcast %c1_i32_260 : i32 to vector<16x32xi32>
    %433 = arith.cmpi slt, %431, %432 : vector<16x32xi32>
    %cst_261 = arith.constant 0.000000e+00 : f32
    %434 = vector.broadcast %cst_261 : f32 to vector<16x32xf32>
    %435 = arith.select %433, %434, %430 : vector<16x32xi1>, vector<16x32xf32>
    %c608_262 = arith.constant 608 : index
    %c0_263 = arith.constant 0 : index
    %436 = vector.load %arg2[%c608_262, %c0_263] : memref<992x32xf32, #tpu.memory_space<vmem>>, vector<32x32xf32>
    %cst_264 = arith.constant dense<0.000000e+00> : vector<16x32xf32>
    %437 = tpu.matmul %435, %436, %cst_264 {dimension_numbers = #tpu.dot_dimension_numbers<[1], [0], [0], [1], [0, 0, 1, 1], [], []>} : vector<16x32xf32>, vector<32x32xf32>, vector<16x32xf32> -> vector<16x32xf32>
    %438 = arith.addf %429, %437 : vector<16x32xf32>
    %c640_265 = arith.constant 640 : index
    %c0_266 = arith.constant 0 : index
    %439 = vector.load %arg2[%c640_265, %c0_266] : memref<992x32xf32, #tpu.memory_space<vmem>>, vector<32x32xf32>
    %cst_267 = arith.constant dense<0.000000e+00> : vector<16x32xf32>
    %440 = tpu.matmul %421, %439, %cst_267 {dimension_numbers = #tpu.dot_dimension_numbers<[1], [0], [0], [1], [0, 0, 1, 1], [], []>} : vector<16x32xf32>, vector<32x32xf32>, vector<16x32xf32> -> vector<16x32xf32>
    %441 = arith.addf %438, %440 : vector<16x32xf32>
    %c8_268 = arith.constant 8 : index
    %c0_269 = arith.constant 0 : index
    %442 = vector.load %arg3[%c8_268, %c0_269] : memref<13x32xf32, #tpu.memory_space<vmem>>, vector<1x32xf32>
    %443 = vector.broadcast %442 : vector<1x32xf32> to vector<16x32xf32>
    %444 = arith.addf %441, %443 : vector<16x32xf32>
    %cst_270 = arith.constant 0.000000e+00 : f32
    %445 = vector.broadcast %cst_270 : f32 to vector<16x32xf32>
    %446 = arith.maximumf %444, %445 : vector<16x32xf32>
    %c672_271 = arith.constant 672 : index
    %c0_272 = arith.constant 0 : index
    %447 = vector.load %arg2[%c672_271, %c0_272] : memref<992x32xf32, #tpu.memory_space<vmem>>, vector<32x32xf32>
    %cst_273 = arith.constant dense<0.000000e+00> : vector<16x32xf32>
    %448 = tpu.matmul %446, %447, %cst_273 {dimension_numbers = #tpu.dot_dimension_numbers<[1], [0], [0], [1], [0, 0, 1, 1], [], []>} : vector<16x32xf32>, vector<32x32xf32>, vector<16x32xf32> -> vector<16x32xf32>
    %c9_274 = arith.constant 9 : index
    %c0_275 = arith.constant 0 : index
    %449 = vector.load %arg3[%c9_274, %c0_275] : memref<13x32xf32, #tpu.memory_space<vmem>>, vector<1x32xf32>
    %450 = vector.broadcast %449 : vector<1x32xf32> to vector<16x32xf32>
    %451 = arith.addf %448, %450 : vector<16x32xf32>
    %452 = arith.addf %451, %419 : vector<16x32xf32>
    %453 = vector.shape_cast %452 : vector<16x32xf32> to vector<16x1x32xf32>
    %454 = vector.shape_cast %453 : vector<16x1x32xf32> to vector<16x1x32xf32>
    %455 = vector.broadcast %454 : vector<16x1x32xf32> to vector<16x2x32xf32>
    %456 = vector.shape_cast %455 : vector<16x2x32xf32> to vector<32x32xf32>
    %c2_i32_276 = arith.constant 2 : i32
    %457 = tpu.dynamic_rotate %456 by %c2_i32_276 dim 0 : vector<32x32xf32>, i32 -> vector<32x32xf32>
    %458 = tpu.iota {dimensions = array<i32: 0>} : vector<32x32xi32>
    %c2_i32_277 = arith.constant 2 : i32
    %459 = vector.broadcast %c2_i32_277 : i32 to vector<32x32xi32>
    %460 = arith.cmpi slt, %458, %459 : vector<32x32xi32>
    %cst_278 = arith.constant 0.000000e+00 : f32
    %461 = vector.broadcast %cst_278 : f32 to vector<32x32xf32>
    %462 = arith.select %460, %461, %457 : vector<32x32xi1>, vector<32x32xf32>
    %c704_279 = arith.constant 704 : index
    %c0_280 = arith.constant 0 : index
    %463 = vector.load %arg2[%c704_279, %c0_280] : memref<992x32xf32, #tpu.memory_space<vmem>>, vector<32x32xf32>
    %cst_281 = arith.constant dense<0.000000e+00> : vector<32x32xf32>
    %464 = tpu.matmul %462, %463, %cst_281 {dimension_numbers = #tpu.dot_dimension_numbers<[1], [0], [0], [1], [0, 0, 1, 1], [], []>} : vector<32x32xf32>, vector<32x32xf32>, vector<32x32xf32> -> vector<32x32xf32>
    %c1_i32_282 = arith.constant 1 : i32
    %465 = tpu.dynamic_rotate %456 by %c1_i32_282 dim 0 : vector<32x32xf32>, i32 -> vector<32x32xf32>
    %466 = tpu.iota {dimensions = array<i32: 0>} : vector<32x32xi32>
    %c1_i32_283 = arith.constant 1 : i32
    %467 = vector.broadcast %c1_i32_283 : i32 to vector<32x32xi32>
    %468 = arith.cmpi slt, %466, %467 : vector<32x32xi32>
    %cst_284 = arith.constant 0.000000e+00 : f32
    %469 = vector.broadcast %cst_284 : f32 to vector<32x32xf32>
    %470 = arith.select %468, %469, %465 : vector<32x32xi1>, vector<32x32xf32>
    %c736_285 = arith.constant 736 : index
    %c0_286 = arith.constant 0 : index
    %471 = vector.load %arg2[%c736_285, %c0_286] : memref<992x32xf32, #tpu.memory_space<vmem>>, vector<32x32xf32>
    %cst_287 = arith.constant dense<0.000000e+00> : vector<32x32xf32>
    %472 = tpu.matmul %470, %471, %cst_287 {dimension_numbers = #tpu.dot_dimension_numbers<[1], [0], [0], [1], [0, 0, 1, 1], [], []>} : vector<32x32xf32>, vector<32x32xf32>, vector<32x32xf32> -> vector<32x32xf32>
    %473 = arith.addf %464, %472 : vector<32x32xf32>
    %c768_288 = arith.constant 768 : index
    %c0_289 = arith.constant 0 : index
    %474 = vector.load %arg2[%c768_288, %c0_289] : memref<992x32xf32, #tpu.memory_space<vmem>>, vector<32x32xf32>
    %cst_290 = arith.constant dense<0.000000e+00> : vector<32x32xf32>
    %475 = tpu.matmul %456, %474, %cst_290 {dimension_numbers = #tpu.dot_dimension_numbers<[1], [0], [0], [1], [0, 0, 1, 1], [], []>} : vector<32x32xf32>, vector<32x32xf32>, vector<32x32xf32> -> vector<32x32xf32>
    %476 = arith.addf %473, %475 : vector<32x32xf32>
    %c10_291 = arith.constant 10 : index
    %c0_292 = arith.constant 0 : index
    %477 = vector.load %arg3[%c10_291, %c0_292] : memref<13x32xf32, #tpu.memory_space<vmem>>, vector<1x32xf32>
    %478 = vector.broadcast %477 : vector<1x32xf32> to vector<32x32xf32>
    %479 = arith.addf %476, %478 : vector<32x32xf32>
    %c2_i32_293 = arith.constant 2 : i32
    %480 = tpu.dynamic_rotate %479 by %c2_i32_293 dim 0 : vector<32x32xf32>, i32 -> vector<32x32xf32>
    %481 = tpu.iota {dimensions = array<i32: 0>} : vector<32x32xi32>
    %c2_i32_294 = arith.constant 2 : i32
    %482 = vector.broadcast %c2_i32_294 : i32 to vector<32x32xi32>
    %483 = arith.cmpi slt, %481, %482 : vector<32x32xi32>
    %cst_295 = arith.constant 0.000000e+00 : f32
    %484 = vector.broadcast %cst_295 : f32 to vector<32x32xf32>
    %485 = arith.select %483, %484, %480 : vector<32x32xi1>, vector<32x32xf32>
    %c800_296 = arith.constant 800 : index
    %c0_297 = arith.constant 0 : index
    %486 = vector.load %arg2[%c800_296, %c0_297] : memref<992x32xf32, #tpu.memory_space<vmem>>, vector<32x32xf32>
    %cst_298 = arith.constant dense<0.000000e+00> : vector<32x32xf32>
    %487 = tpu.matmul %485, %486, %cst_298 {dimension_numbers = #tpu.dot_dimension_numbers<[1], [0], [0], [1], [0, 0, 1, 1], [], []>} : vector<32x32xf32>, vector<32x32xf32>, vector<32x32xf32> -> vector<32x32xf32>
    %c1_i32_299 = arith.constant 1 : i32
    %488 = tpu.dynamic_rotate %479 by %c1_i32_299 dim 0 : vector<32x32xf32>, i32 -> vector<32x32xf32>
    %489 = tpu.iota {dimensions = array<i32: 0>} : vector<32x32xi32>
    %c1_i32_300 = arith.constant 1 : i32
    %490 = vector.broadcast %c1_i32_300 : i32 to vector<32x32xi32>
    %491 = arith.cmpi slt, %489, %490 : vector<32x32xi32>
    %cst_301 = arith.constant 0.000000e+00 : f32
    %492 = vector.broadcast %cst_301 : f32 to vector<32x32xf32>
    %493 = arith.select %491, %492, %488 : vector<32x32xi1>, vector<32x32xf32>
    %c832_302 = arith.constant 832 : index
    %c0_303 = arith.constant 0 : index
    %494 = vector.load %arg2[%c832_302, %c0_303] : memref<992x32xf32, #tpu.memory_space<vmem>>, vector<32x32xf32>
    %cst_304 = arith.constant dense<0.000000e+00> : vector<32x32xf32>
    %495 = tpu.matmul %493, %494, %cst_304 {dimension_numbers = #tpu.dot_dimension_numbers<[1], [0], [0], [1], [0, 0, 1, 1], [], []>} : vector<32x32xf32>, vector<32x32xf32>, vector<32x32xf32> -> vector<32x32xf32>
    %496 = arith.addf %487, %495 : vector<32x32xf32>
    %c864_305 = arith.constant 864 : index
    %c0_306 = arith.constant 0 : index
    %497 = vector.load %arg2[%c864_305, %c0_306] : memref<992x32xf32, #tpu.memory_space<vmem>>, vector<32x32xf32>
    %cst_307 = arith.constant dense<0.000000e+00> : vector<32x32xf32>
    %498 = tpu.matmul %479, %497, %cst_307 {dimension_numbers = #tpu.dot_dimension_numbers<[1], [0], [0], [1], [0, 0, 1, 1], [], []>} : vector<32x32xf32>, vector<32x32xf32>, vector<32x32xf32> -> vector<32x32xf32>
    %499 = arith.addf %496, %498 : vector<32x32xf32>
    %c11_308 = arith.constant 11 : index
    %c0_309 = arith.constant 0 : index
    %500 = vector.load %arg3[%c11_308, %c0_309] : memref<13x32xf32, #tpu.memory_space<vmem>>, vector<1x32xf32>
    %501 = vector.broadcast %500 : vector<1x32xf32> to vector<32x32xf32>
    %502 = arith.addf %499, %501 : vector<32x32xf32>
    %cst_310 = arith.constant 0.000000e+00 : f32
    %503 = vector.broadcast %cst_310 : f32 to vector<32x32xf32>
    %504 = arith.maximumf %502, %503 : vector<32x32xf32>
    %c2_i32_311 = arith.constant 2 : i32
    %505 = tpu.dynamic_rotate %504 by %c2_i32_311 dim 0 : vector<32x32xf32>, i32 -> vector<32x32xf32>
    %506 = tpu.iota {dimensions = array<i32: 0>} : vector<32x32xi32>
    %c2_i32_312 = arith.constant 2 : i32
    %507 = vector.broadcast %c2_i32_312 : i32 to vector<32x32xi32>
    %508 = arith.cmpi slt, %506, %507 : vector<32x32xi32>
    %cst_313 = arith.constant 0.000000e+00 : f32
    %509 = vector.broadcast %cst_313 : f32 to vector<32x32xf32>
    %510 = arith.select %508, %509, %505 : vector<32x32xi1>, vector<32x32xf32>
    %c896_314 = arith.constant 896 : index
    %c0_315 = arith.constant 0 : index
    %511 = vector.load %arg2[%c896_314, %c0_315] : memref<992x32xf32, #tpu.memory_space<vmem>>, vector<32x8xf32>
    %cst_316 = arith.constant dense<0.000000e+00> : vector<32x8xf32>
    %512 = tpu.matmul %510, %511, %cst_316 {dimension_numbers = #tpu.dot_dimension_numbers<[1], [0], [0], [1], [0, 0, 1, 1], [], []>} : vector<32x32xf32>, vector<32x8xf32>, vector<32x8xf32> -> vector<32x8xf32>
    %c1_i32_317 = arith.constant 1 : i32
    %513 = tpu.dynamic_rotate %504 by %c1_i32_317 dim 0 : vector<32x32xf32>, i32 -> vector<32x32xf32>
    %514 = tpu.iota {dimensions = array<i32: 0>} : vector<32x32xi32>
    %c1_i32_318 = arith.constant 1 : i32
    %515 = vector.broadcast %c1_i32_318 : i32 to vector<32x32xi32>
    %516 = arith.cmpi slt, %514, %515 : vector<32x32xi32>
    %cst_319 = arith.constant 0.000000e+00 : f32
    %517 = vector.broadcast %cst_319 : f32 to vector<32x32xf32>
    %518 = arith.select %516, %517, %513 : vector<32x32xi1>, vector<32x32xf32>
    %c928_320 = arith.constant 928 : index
    %c0_321 = arith.constant 0 : index
    %519 = vector.load %arg2[%c928_320, %c0_321] : memref<992x32xf32, #tpu.memory_space<vmem>>, vector<32x8xf32>
    %cst_322 = arith.constant dense<0.000000e+00> : vector<32x8xf32>
    %520 = tpu.matmul %518, %519, %cst_322 {dimension_numbers = #tpu.dot_dimension_numbers<[1], [0], [0], [1], [0, 0, 1, 1], [], []>} : vector<32x32xf32>, vector<32x8xf32>, vector<32x8xf32> -> vector<32x8xf32>
    %521 = arith.addf %512, %520 : vector<32x8xf32>
    %c960_323 = arith.constant 960 : index
    %c0_324 = arith.constant 0 : index
    %522 = vector.load %arg2[%c960_323, %c0_324] : memref<992x32xf32, #tpu.memory_space<vmem>>, vector<32x8xf32>
    %cst_325 = arith.constant dense<0.000000e+00> : vector<32x8xf32>
    %523 = tpu.matmul %504, %522, %cst_325 {dimension_numbers = #tpu.dot_dimension_numbers<[1], [0], [0], [1], [0, 0, 1, 1], [], []>} : vector<32x32xf32>, vector<32x8xf32>, vector<32x8xf32> -> vector<32x8xf32>
    %524 = arith.addf %521, %523 : vector<32x8xf32>
    %c12_326 = arith.constant 12 : index
    %c0_327 = arith.constant 0 : index
    %525 = vector.load %arg3[%c12_326, %c0_327] : memref<13x32xf32, #tpu.memory_space<vmem>>, vector<1x8xf32>
    %526 = vector.broadcast %525 : vector<1x8xf32> to vector<32x8xf32>
    %527 = arith.addf %524, %526 : vector<32x8xf32>
    %528 = tpu.transpose %527, [1, 0] : vector<32x8xf32> -> vector<8x32xf32>
    %cst_328 = arith.constant 0.000000e+00 : f32
    %529 = vector.broadcast %cst_328 : f32 to vector<8x96xf32>
    %530 = tpu.concatenate %528, %529 in 1 : vector<8x32xf32>, vector<8x96xf32> -> vector<8x128xf32>
    %c1_329 = arith.constant 1 : index
    %c0_330 = arith.constant 0 : index
    %c0_331 = arith.constant 0 : index
    %531 = vector.load %arg4[%c1_329, %c0_330, %c0_331] : memref<2x8x128xf32, #tpu.memory_space<vmem>>, vector<1x8x128xf32>
    %532 = vector.shape_cast %531 : vector<1x8x128xf32> to vector<8x128xf32>
    %533 = vector.shape_cast %530 : vector<8x128xf32> to vector<1x8x128xf32>
    tpu.vector_store %arg4[%c1_329, %c0_330, %c0_331], %533 {strides = array<i32>} : memref<2x8x128xf32, #tpu.memory_space<vmem>>, vector<1x8x128xf32>,
    return
  }
  func.func @transform_0(%arg0: i32) -> (i32, i32, i32) {
    %c0_i32 = arith.constant 0 : i32
    %c0_i32_0 = arith.constant 0 : i32
    %c0_i32_1 = arith.constant 0 : i32
    %c0_i32_2 = arith.constant 0 : i32
    return %c0_i32, %c0_i32_0, %c0_i32_1 : i32, i32, i32
  }
  func.func @transform_1(%arg0: i32) -> (i32, i32) {
    %c0_i32 = arith.constant 0 : i32
    %c0_i32_0 = arith.constant 0 : i32
    %c0_i32_1 = arith.constant 0 : i32
    return %c0_i32, %c0_i32_0 : i32, i32
  }
  func.func @transform_2(%arg0: i32) -> (i32, i32) {
    %c0_i32 = arith.constant 0 : i32
    %c0_i32_0 = arith.constant 0 : i32
    %c0_i32_1 = arith.constant 0 : i32
    return %c0_i32, %c0_i32_0 : i32, i32
  }
  func.func @transform_3(%arg0: i32) -> (i32, i32, i32) {
    %c0_i32 = arith.constant 0 : i32
    %c0_i32_0 = arith.constant 0 : i32
    %c0_i32_1 = arith.constant 0 : i32
    %c0_i32_2 = arith.constant 0 : i32
    return %c0_i32, %c0_i32_0, %c0_i32_1 : i32, i32, i32
  }
}

</mosaic_0001>

<llo_original>
// kernel: causal_decoder_forward.1
$region0: #{causal_decoder_forward.1}
  #allocation0 [shape = 'u32[]', space=smem, size = 0x4, offset = 0x4, fixed_abs, tag = 'smem constant byte address 0x4 - core index']
  #allocation1 [shape = 'u32[72,128]{1,0:T(1,128)}', space=vmem, size = 0x9000, scoped, tag = 'internal scratch']
  %s0 = inlined_call_operand.vmem [shape: f32[2,8,32], index: 0, kind: input, shape index: {}]
  %s1 = inlined_call_operand.vmem [shape: f32[992,32], index: 1, kind: input, shape index: {}]
  %s2 = inlined_call_operand.vmem [shape: f32[13,32], index: 2, kind: input, shape index: {}]
  %s3 = inlined_call_operand.hbm [shape: f32[2,8,128], index: 3, kind: output, shape index: {}]
  %s4 = sld [smem:[#allocation0]]
  $region22: #{causal_decoder_forward.1} parent=0
    _
  %s6 = ssub.s32 1, %s4
  %s7 = scalar_select 0, %s6, %s4
  $region1: #{causal_decoder_forward.1} parent=0
    #allocation2 [shape = 'u8[8192]{0}', space=vmem, size = 0x2000, scoped, tag = 'output window, operand 0, single buffered']
    #allocation3 [shape = 's32[1]{0}', space=sflag, size = 0x4, scoped, tag = 'scoped memory for causal_decoder_forward.1']
    %8 = vsyncpa [#allocation3], 0
    // Predicated region
    $region2: #{causal_decoder_forward.1} parent=1 // pred_check
      _
    $region3: #{causal_decoder_forward.1} parent=1 // pred_check_branch
      %10 = sbr.rel (0) target = $region5
    $region4: #{causal_decoder_forward.1} parent=1 // pred_region
      _
    $region5: #{causal_decoder_forward.1} parent=1 // pred_fallthru
      _
    // Predicated region
    $region6: #{causal_decoder_forward.1} parent=1 // pred_check
      _
    $region7: #{causal_decoder_forward.1} parent=1 // pred_check_branch
      %12 = sbr.rel (0) target = $region9
    $region8: #{causal_decoder_forward.1} parent=1 // pred_region
      _
    $region9: #{causal_decoder_forward.1} parent=1 // pred_fallthru
      _
    // Predicated region
    $region10: #{causal_decoder_forward.1} parent=1 // pred_check
      _
    $region11: #{causal_decoder_forward.1} parent=1 // pred_check_branch
      %14 = sbr.rel (0) target = $region13
    $region12: #{causal_decoder_forward.1} parent=1 // pred_region
      _
    $region13: #{causal_decoder_forward.1} parent=1 // pred_fallthru
      _
    %v15 = vld [vmem:[%s0] sm:$0xff]
    %v16 = vrot.slane %v15, 6
    %v17 = vlaneseq
    %v18 = vshrl.u32 %v17, 7
    %vm19 = vcmp.lt.s32.totalorder %v18, 2
    %v20 = vsel %vm19, 0.0, %v16
    %v21 = vld [vmem:[%s1] sm:$0xff]
    %v22 = vld [vmem:[%s1 + $0x8] sm:$0xff]
    %v23 = vld [vmem:[%s1 + $0x10] sm:$0xff]
    %v24 = vld [vmem:[%s1 + $0x18] sm:$0xff]
    %v25 = vrot.slane %v15, 7
    %vm26 = vcmp.lt.s32.totalorder %v18, 1
    %v27 = vsel %vm26, 0.0, %v25
    %v28 = vld [vmem:[%s1 + $0x20] sm:$0xff]
    %v29 = vld [vmem:[%s1 + $0x28] sm:$0xff]
    %v30 = vld [vmem:[%s1 + $0x30] sm:$0xff]
    %v31 = vld [vmem:[%s1 + $0x38] sm:$0xff]
    %vm32 = vcmask 261120
    %v34 = vsel %vm32, %v27, 0
    %36 = vmatpush.msra.mxu0 0.0
    %37 = vmatpush.msra.mxu0 0.0
    %38 = vmatpush.msra.mxu0 0.0
    %39 = vmatpush.msra.mxu0 0.0
    %40 = vmatpush.msra.mxu0 0.0
    %41 = vmatpush.msra.mxu0 0.0
    %42 = vmatpush.msra.mxu0 0.0
    %43 = vmatpush.msra.mxu0 0.0
    %44 = vmatpush.msra.mxu0 0.0
    %45 = vmatpush.msra.mxu0 0.0
    %46 = vmatpush.msra.mxu0 0.0
    %47 = vmatpush.msra.mxu0 0.0
    %48 = vmatpush.msra.mxu0 %v31
    %49 = vmatpush.msra.mxu0 %v30
    %50 = vmatpush.msra.mxu0 %v29
    %51 = vmatpush.msra.mxu0 %v28
    %52 = vmatmul.f32.gmra.mxu0 %v34
    %v53 = vpop.f32.mrf.mxu0
    %v54 = vadd.f32 0.0, %v53
    %55 = vdwg.mxu0
    %v57 = vsel %vm32, %v20, 0
    %59 = vmatpush.msra.mxu0 0.0
    %60 = vmatpush.msra.mxu0 0.0
    %61 = vmatpush.msra.mxu0 0.0
    %62 = vmatpush.msra.mxu0 0.0
    %63 = vmatpush.msra.mxu0 0.0
    %64 = vmatpush.msra.mxu0 0.0
    %65 = vmatpush.msra.mxu0 0.0
    %66 = vmatpush.msra.mxu0 0.0
    %67 = vmatpush.msra.mxu0 0.0
    %68 = vmatpush.msra.mxu0 0.0
    %69 = vmatpush.msra.mxu0 0.0
    %70 = vmatpush.msra.mxu0 0.0
    %71 = vmatpush.msra.mxu0 %v24
    %72 = vmatpush.msra.mxu0 %v23
    %73 = vmatpush.msra.mxu0 %v22
    %74 = vmatpush.msra.mxu0 %v21
    %75 = vmatmul.f32.gmra.mxu0 %v57
    %v76 = vpop.f32.mrf.mxu0
    %v77 = vadd.f32 %v54, %v76
    %78 = vdwg.mxu0
    %v79 = vld [vmem:[%s1 + $0x40] sm:$0xff]
    %v80 = vld [vmem:[%s1 + $0x48] sm:$0xff]
    %v81 = vld [vmem:[%s1 + $0x50] sm:$0xff]
    %v82 = vld [vmem:[%s1 + $0x58] sm:$0xff]
    %v84 = vsel %vm32, %v15, 0
    %86 = vmatpush.msra.mxu0 0.0
    %87 = vmatpush.msra.mxu0 0.0
    %88 = vmatpush.msra.mxu0 0.0
    %89 = vmatpush.msra.mxu0 0.0
    %90 = vmatpush.msra.mxu0 0.0
    %91 = vmatpush.msra.mxu0 0.0
    %92 = vmatpush.msra.mxu0 0.0
    %93 = vmatpush.msra.mxu0 0.0
    %94 = vmatpush.msra.mxu0 0.0
    %95 = vmatpush.msra.mxu0 0.0
    %96 = vmatpush.msra.mxu0 0.0
    %97 = vmatpush.msra.mxu0 0.0
    %98 = vmatpush.msra.mxu0 %v82
    %99 = vmatpush.msra.mxu0 %v81
    %100 = vmatpush.msra.mxu0 %v80
    %101 = vmatpush.msra.mxu0 %v79
    %102 = vmatmul.f32.gmra.mxu0 %v84
    %v103 = vpop.f32.mrf.mxu0
    %v104 = vadd.f32 0.0, %v103
    %105 = vdwg.mxu0
    %v106 = vadd.f32 %v77, %v104
    %v107 = vld [vmem:[%s2] sm:$0x1]
    %v108 = vperm.slane %v107, 0
    %v109 = vadd.f32 %v106, %v108
    %v110 = vmax.f32 %v109, 0.0
    %v111 = vmax.f32 %v110, 0.0
    %v112 = vrot.slane %v111, 2
    %vm113 = vcmp.lt.s32.totalorder %v18, 6
    %v114 = vsel %vm113, 0.0, %v112
    %v115 = vld [vmem:[%s1 + $0x60] sm:$0xff]
    %v116 = vld [vmem:[%s1 + $0x68] sm:$0xff]
    %v117 = vld [vmem:[%s1 + $0x70] sm:$0xff]
    %v118 = vld [vmem:[%s1 + $0x78] sm:$0xff]
    %v119 = vrot.slane %v111, 5
    %vm120 = vcmp.lt.s32.totalorder %v18, 3
    %v121 = vsel %vm120, 0.0, %v119
    %v122 = vld [vmem:[%s1 + $0x80] sm:$0xff]
    %v123 = vld [vmem:[%s1 + $0x88] sm:$0xff]
    %v124 = vld [vmem:[%s1 + $0x90] sm:$0xff]
    %v125 = vld [vmem:[%s1 + $0x98] sm:$0xff]
    %v127 = vsel %vm32, %v121, 0
    %129 = vmatpush.msra.mxu0 0.0
    %130 = vmatpush.msra.mxu0 0.0
    %131 = vmatpush.msra.mxu0 0.0
    %132 = vmatpush.msra.mxu0 0.0
    %133 = vmatpush.msra.mxu0 0.0
    %134 = vmatpush.msra.mxu0 0.0
    %135 = vmatpush.msra.mxu0 0.0
    %136 = vmatpush.msra.mxu0 0.0
    %137 = vmatpush.msra.mxu0 0.0
    %138 = vmatpush.msra.mxu0 0.0
    %139 = vmatpush.msra.mxu0 0.0
    %140 = vmatpush.msra.mxu0 0.0
    %141 = vmatpush.msra.mxu0 %v125
    %142 = vmatpush.msra.mxu0 %v124
    %143 = vmatpush.msra.mxu0 %v123
    %144 = vmatpush.msra.mxu0 %v122
    %145 = vmatmul.f32.gmra.mxu0 %v127
    %v146 = vpop.f32.mrf.mxu0
    %v147 = vadd.f32 0.0, %v146
    %148 = vdwg.mxu0
    %v150 = vsel %vm32, %v114, 0
    %152 = vmatpush.msra.mxu0 0.0
    %153 = vmatpush.msra.mxu0 0.0
    %154 = vmatpush.msra.mxu0 0.0
    %155 = vmatpush.msra.mxu0 0.0
    %156 = vmatpush.msra.mxu0 0.0
    %157 = vmatpush.msra.mxu0 0.0
    %158 = vmatpush.msra.mxu0 0.0
    %159 = vmatpush.msra.mxu0 0.0
    %160 = vmatpush.msra.mxu0 0.0
    %161 = vmatpush.msra.mxu0 0.0
    %162 = vmatpush.msra.mxu0 0.0
    %163 = vmatpush.msra.mxu0 0.0
    %164 = vmatpush.msra.mxu0 %v118
    %165 = vmatpush.msra.mxu0 %v117
    %166 = vmatpush.msra.mxu0 %v116
    %167 = vmatpush.msra.mxu0 %v115
    %168 = vmatmul.f32.gmra.mxu0 %v150
    %v169 = vpop.f32.mrf.mxu0
    %v170 = vadd.f32 %v147, %v169
    %171 = vdwg.mxu0
    %v172 = vld [vmem:[%s1 + $0xa0] sm:$0xff]
    %v173 = vld [vmem:[%s1 + $0xa8] sm:$0xff]
    %v174 = vld [vmem:[%s1 + $0xb0] sm:$0xff]
    %v175 = vld [vmem:[%s1 + $0xb8] sm:$0xff]
    %v177 = vsel %vm32, %v111, 0
    %179 = vmatpush.msra.mxu0 0.0
    %180 = vmatpush.msra.mxu0 0.0
    %181 = vmatpush.msra.mxu0 0.0
    %182 = vmatpush.msra.mxu0 0.0
    %183 = vmatpush.msra.mxu0 0.0
    %184 = vmatpush.msra.mxu0 0.0
    %185 = vmatpush.msra.mxu0 0.0
    %186 = vmatpush.msra.mxu0 0.0
    %187 = vmatpush.msra.mxu0 0.0
    %188 = vmatpush.msra.mxu0 0.0
    %189 = vmatpush.msra.mxu0 0.0
    %190 = vmatpush.msra.mxu0 0.0
    %191 = vmatpush.msra.mxu0 %v175
    %192 = vmatpush.msra.mxu0 %v174
    %193 = vmatpush.msra.mxu0 %v173
    %194 = vmatpush.msra.mxu0 %v172
    %195 = vmatmul.f32.gmra.mxu0 %v177
    %v196 = vpop.f32.mrf.mxu0
    %v197 = vadd.f32 0.0, %v196
    %198 = vdwg.mxu0
    %v199 = vadd.f32 %v170, %v197
    %v200 = vld [vmem:[%s2 + $0x1] sm:$0x1]
    %v201 = vperm.slane %v200, 0
    %v202 = vadd.f32 %v199, %v201
    %v203 = vmax.f32 %v202, 0.0
    %v204 = vld [vmem:[%s1 + $0xc0] sm:$0xff]
    %v205 = vld [vmem:[%s1 + $0xc8] sm:$0xff]
    %v206 = vld [vmem:[%s1 + $0xd0] sm:$0xff]
    %v207 = vld [vmem:[%s1 + $0xd8] sm:$0xff]
    %v208 = vld [vmem:[%s2 + $0x2] sm:$0x1]
    %v209 = vperm.slane %v208, 0
    %v211 = vsel %vm32, %v203, 0
    %213 = vmatpush.msra.mxu0 0.0
    %214 = vmatpush.msra.mxu0 0.0
    %215 = vmatpush.msra.mxu0 0.0
    %216 = vmatpush.msra.mxu0 0.0
    %217 = vmatpush.msra.mxu0 0.0
    %218 = vmatpush.msra.mxu0 0.0
    %219 = vmatpush.msra.mxu0 0.0
    %220 = vmatpush.msra.mxu0 0.0
    %221 = vmatpush.msra.mxu0 0.0
    %222 = vmatpush.msra.mxu0 0.0
    %223 = vmatpush.msra.mxu0 0.0
    %224 = vmatpush.msra.mxu0 0.0
    %225 = vmatpush.msra.mxu0 %v207
    %226 = vmatpush.msra.mxu0 %v206
    %227 = vmatpush.msra.mxu0 %v205
    %228 = vmatpush.msra.mxu0 %v204
    %229 = vmatmul.f32.gmra.mxu0 %v211
    %v230 = vpop.f32.mrf.mxu0
    %v231 = vadd.f32 %v209, %v230
    %232 = vdwg.mxu0
    %v233 = vadd.f32 %v231, %v110
    %v234 = vmax.f32 %v233, 0.0
    %v235 = vrot.slane %v234, 6
    %v236 = vsel %vm19, 0.0, %v235
    %v237 = vld [vmem:[%s1 + $0xe0] sm:$0xff]
    %v238 = vld [vmem:[%s1 + $0xe8] sm:$0xff]
    %v239 = vld [vmem:[%s1 + $0xf0] sm:$0xff]
    %v240 = vld [vmem:[%s1 + $0xf8] sm:$0xff]
    %v241 = vrot.slane %v234, 7
    %v242 = vsel %vm26, 0.0, %v241
    %v243 = vld [vmem:[%s1 + $0x100] sm:$0xff]
    %v244 = vld [vmem:[%s1 + $0x108] sm:$0xff]
    %v245 = vld [vmem:[%s1 + $0x110] sm:$0xff]
    %v246 = vld [vmem:[%s1 + $0x118] sm:$0xff]
    %v248 = vsel %vm32, %v242, 0
    %250 = vmatpush.msra.mxu0 0.0
    %251 = vmatpush.msra.mxu0 0.0
    %252 = vmatpush.msra.mxu0 0.0
    %253 = vmatpush.msra.mxu0 0.0
    %254 = vmatpush.msra.mxu0 0.0
    %255 = vmatpush.msra.mxu0 0.0
    %256 = vmatpush.msra.mxu0 0.0
    %257 = vmatpush.msra.mxu0 0.0
    %258 = vmatpush.msra.mxu0 0.0
    %259 = vmatpush.msra.mxu0 0.0
    %260 = vmatpush.msra.mxu0 0.0
    %261 = vmatpush.msra.mxu0 0.0
    %262 = vmatpush.msra.mxu0 %v246
    %263 = vmatpush.msra.mxu0 %v245
    %264 = vmatpush.msra.mxu0 %v244
    %265 = vmatpush.msra.mxu0 %v243
    %266 = vmatmul.f32.gmra.mxu0 %v248
    %v267 = vpop.f32.mrf.mxu0
    %v268 = vadd.f32 0.0, %v267
    %269 = vdwg.mxu0
    %v271 = vsel %vm32, %v236, 0
    %273 = vmatpush.msra.mxu0 0.0
    %274 = vmatpush.msra.mxu0 0.0
    %275 = vmatpush.msra.mxu0 0.0
    %276 = vmatpush.msra.mxu0 0.0
    %277 = vmatpush.msra.mxu0 0.0
    %278 = vmatpush.msra.mxu0 0.0
    %279 = vmatpush.msra.mxu0 0.0
    %280 = vmatpush.msra.mxu0 0.0
    %281 = vmatpush.msra.mxu0 0.0
    %282 = vmatpush.msra.mxu0 0.0
    %283 = vmatpush.msra.mxu0 0.0
    %284 = vmatpush.msra.mxu0 0.0
    %285 = vmatpush.msra.mxu0 %v240
    %286 = vmatpush.msra.mxu0 %v239
    %287 = vmatpush.msra.mxu0 %v238
    %288 = vmatpush.msra.mxu0 %v237
    %289 = vmatmul.f32.gmra.mxu0 %v271
    %v290 = vpop.f32.mrf.mxu0
    %v291 = vadd.f32 %v268, %v290
    %292 = vdwg.mxu0
    %v293 = vld [vmem:[%s1 + $0x120] sm:$0xff]
    %v294 = vld [vmem:[%s1 + $0x128] sm:$0xff]
    %v295 = vld [vmem:[%s1 + $0x130] sm:$0xff]
    %v296 = vld [vmem:[%s1 + $0x138] sm:$0xff]
    %v298 = vsel %vm32, %v234, 0
    %300 = vmatpush.msra.mxu0 0.0
    %301 = vmatpush.msra.mxu0 0.0
    %302 = vmatpush.msra.mxu0 0.0
    %303 = vmatpush.msra.mxu0 0.0
    %304 = vmatpush.msra.mxu0 0.0
    %305 = vmatpush.msra.mxu0 0.0
    %306 = vmatpush.msra.mxu0 0.0
    %307 = vmatpush.msra.mxu0 0.0
    %308 = vmatpush.msra.mxu0 0.0
    %309 = vmatpush.msra.mxu0 0.0
    %310 = vmatpush.msra.mxu0 0.0
    %311 = vmatpush.msra.mxu0 0.0
    %312 = vmatpush.msra.mxu0 %v296
    %313 = vmatpush.msra.mxu0 %v295
    %314 = vmatpush.msra.mxu0 %v294
    %315 = vmatpush.msra.mxu0 %v293
    %316 = vmatmul.f32.gmra.mxu0 %v298
    %v317 = vpop.f32.mrf.mxu0
    %v318 = vadd.f32 0.0, %v317
    %319 = vdwg.mxu0
    %v320 = vadd.f32 %v291, %v318
    %v321 = vld [vmem:[%s2 + $0x3] sm:$0x1]
    %v322 = vperm.slane %v321, 0
    %v323 = vadd.f32 %v320, %v322
    %v324 = vmax.f32 %v323, 0.0
    %v325 = vld [vmem:[%s1 + $0x140] sm:$0xff]
    %v326 = vld [vmem:[%s1 + $0x148] sm:$0xff]
    %v327 = vld [vmem:[%s1 + $0x150] sm:$0xff]
    %v328 = vld [vmem:[%s1 + $0x158] sm:$0xff]
    %v329 = vld [vmem:[%s2 + $0x4] sm:$0x1]
    %v330 = vperm.slane %v329, 0
    %v332 = vsel %vm32, %v324, 0
    %334 = vmatpush.msra.mxu0 0.0
    %335 = vmatpush.msra.mxu0 0.0
    %336 = vmatpush.msra.mxu0 0.0
    %337 = vmatpush.msra.mxu0 0.0
    %338 = vmatpush.msra.mxu0 0.0
    %339 = vmatpush.msra.mxu0 0.0
    %340 = vmatpush.msra.mxu0 0.0
    %341 = vmatpush.msra.mxu0 0.0
    %342 = vmatpush.msra.mxu0 0.0
    %343 = vmatpush.msra.mxu0 0.0
    %344 = vmatpush.msra.mxu0 0.0
    %345 = vmatpush.msra.mxu0 0.0
    %346 = vmatpush.msra.mxu0 %v328
    %347 = vmatpush.msra.mxu0 %v327
    %348 = vmatpush.msra.mxu0 %v326
    %349 = vmatpush.msra.mxu0 %v325
    %350 = vmatmul.f32.gmra.mxu0 %v332
    %v351 = vpop.f32.mrf.mxu0
    %v352 = vadd.f32 %v330, %v351
    %353 = vdwg.mxu0
    %v354 = vadd.f32 %v352, %v233
    %v356 = vrot.slane %v354, 1
    %v357 = vrot.slane %v354, 2
    %v358 = vrot.slane %v354, 3
    %v359 = vrot.slane %v354, 4
    %v360 = vrot.slane %v354, 5
    %v361 = vrot.slane %v354, 6
    %v362 = vrot.slane %v354, 7
    %v363 = vperm.slane %v354, 0
    %v364 = vperm.slane %v356, 0
    %v365 = vperm.slane %v357, 0
    %v366 = vperm.slane %v358, 0
    %v367 = vperm.slane %v359, 0
    %v368 = vperm.slane %v360, 0
    %v369 = vperm.slane %v361, 0
    %v370 = vperm.slane %v362, 0
    %371 = vst [vmem:[#allocation1] ss:$4 sm:$0xff] %v363
    %s372 = scalar_lea.vmem [#allocation1], 1
    %373 = vst [vmem:[%s372] ss:$4 sm:$0xff] %v364
    %s374 = scalar_lea.vmem [#allocation1], 2
    %375 = vst [vmem:[%s374] ss:$4 sm:$0xff] %v365
    %s376 = scalar_lea.vmem [#allocation1], 3
    %377 = vst [vmem:[%s376] ss:$4 sm:$0xff] %v366
    %s378 = scalar_lea.vmem [#allocation1], 32
    %379 = vst [vmem:[%s378] ss:$4 sm:$0xff] %v367
    %s380 = scalar_lea.vmem [#allocation1], 33
    %381 = vst [vmem:[%s380] ss:$4 sm:$0xff] %v368
    %s382 = scalar_lea.vmem [#allocation1], 34
    %383 = vst [vmem:[%s382] ss:$4 sm:$0xff] %v369
    %s384 = scalar_lea.vmem [#allocation1], 35
    %385 = vst [vmem:[%s384] ss:$4 sm:$0xff] %v370
    %v386 = vld.sshfl [vmem:[#allocation1] sm:$0xff pattern:$0x73625140]
    %v387 = vld.sshfl [vmem:[#allocation1 + $0x20] sm:$0xff pattern:$0x73625140]
    %v390 = vrot.slane %v386, 6
    %v391 = vrot.slane %v387, 6
    %v392 = vsel %vm19, %v390, %v391
    %v393 = vsel %vm19, %v391, %v390
    %v394 = vadd.s32 %v18, 8
    %vm395 = vcmp.lt.s32.totalorder %v394, 2
    %v396 = vsel %vm19, 0.0, %v393
    %v397 = vsel %vm395, 0.0, %v392
    %v398 = vld [vmem:[%s1 + $0x160] sm:$0xff]
    %v399 = vld [vmem:[%s1 + $0x168] sm:$0xff]
    %v400 = vld [vmem:[%s1 + $0x170] sm:$0xff]
    %v401 = vld [vmem:[%s1 + $0x178] sm:$0xff]
    %402 = vst [vmem:[#allocation1] ss:$4 sm:$0xff] %v363
    %s403 = scalar_lea.vmem [#allocation1], 1
    %404 = vst [vmem:[%s403] ss:$4 sm:$0xff] %v364
    %s405 = scalar_lea.vmem [#allocation1], 2
    %406 = vst [vmem:[%s405] ss:$4 sm:$0xff] %v365
    %s407 = scalar_lea.vmem [#allocation1], 3
    %408 = vst [vmem:[%s407] ss:$4 sm:$0xff] %v366
    %s409 = scalar_lea.vmem [#allocation1], 32
    %410 = vst [vmem:[%s409] ss:$4 sm:$0xff] %v367
    %s411 = scalar_lea.vmem [#allocation1], 33
    %412 = vst [vmem:[%s411] ss:$4 sm:$0xff] %v368
    %s413 = scalar_lea.vmem [#allocation1], 34
    %414 = vst [vmem:[%s413] ss:$4 sm:$0xff] %v369
    %s415 = scalar_lea.vmem [#allocation1], 35
    %416 = vst [vmem:[%s415] ss:$4 sm:$0xff] %v370
    %v417 = vld.sshfl [vmem:[#allocation1] sm:$0xff pattern:$0x73625140]
    %v418 = vld.sshfl [vmem:[#allocation1 + $0x20] sm:$0xff pattern:$0x73625140]
    %v421 = vrot.slane %v417, 7
    %v422 = vrot.slane %v418, 7
    %v423 = vsel %vm26, %v421, %v422
    %v424 = vsel %vm26, %v422, %v421
    %vm425 = vcmp.lt.s32.totalorder %v394, 1
    %v426 = vsel %vm26, 0.0, %v424
    %v427 = vsel %vm425, 0.0, %v423
    %v428 = vld [vmem:[%s1 + $0x180] sm:$0xff]
    %v429 = vld [vmem:[%s1 + $0x188] sm:$0xff]
    %v430 = vld [vmem:[%s1 + $0x190] sm:$0xff]
    %v431 = vld [vmem:[%s1 + $0x198] sm:$0xff]
    %v433 = vsel %vm32, %v426, 0
    %v436 = vsel %vm32, %v427, 0
    %438 = vmatpush.msra.mxu0 0.0
    %439 = vmatpush.msra.mxu0 0.0
    %440 = vmatpush.msra.mxu0 0.0
    %441 = vmatpush.msra.mxu0 0.0
    %442 = vmatpush.msra.mxu0 0.0
    %443 = vmatpush.msra.mxu0 0.0
    %444 = vmatpush.msra.mxu0 0.0
    %445 = vmatpush.msra.mxu0 0.0
    %446 = vmatpush.msra.mxu0 0.0
    %447 = vmatpush.msra.mxu0 0.0
    %448 = vmatpush.msra.mxu0 0.0
    %449 = vmatpush.msra.mxu0 0.0
    %450 = vmatpush.msra.mxu0 %v431
    %451 = vmatpush.msra.mxu0 %v430
    %452 = vmatpush.msra.mxu0 %v429
    %453 = vmatpush.msra.mxu0 %v428
    %454 = vmatmul.f32.gmra.mxu0 %v433
    %v455 = vpop.f32.mrf.mxu0
    %v456 = vadd.f32 0.0, %v455
    %457 = vmatmul.f32.gmra.mxu0 %v436
    %v458 = vpop.f32.mrf.mxu0
    %v459 = vadd.f32 0.0, %v458
    %460 = vdwg.mxu0
    %v462 = vsel %vm32, %v396, 0
    %v465 = vsel %vm32, %v397, 0
    %467 = vmatpush.msra.mxu0 0.0
    %468 = vmatpush.msra.mxu0 0.0
    %469 = vmatpush.msra.mxu0 0.0
    %470 = vmatpush.msra.mxu0 0.0
    %471 = vmatpush.msra.mxu0 0.0
    %472 = vmatpush.msra.mxu0 0.0
    %473 = vmatpush.msra.mxu0 0.0
    %474 = vmatpush.msra.mxu0 0.0
    %475 = vmatpush.msra.mxu0 0.0
    %476 = vmatpush.msra.mxu0 0.0
    %477 = vmatpush.msra.mxu0 0.0
    %478 = vmatpush.msra.mxu0 0.0
    %479 = vmatpush.msra.mxu0 %v401
    %480 = vmatpush.msra.mxu0 %v400
    %481 = vmatpush.msra.mxu0 %v399
    %482 = vmatpush.msra.mxu0 %v398
    %483 = vmatmul.f32.gmra.mxu0 %v462
    %v484 = vpop.f32.mrf.mxu0
    %v485 = vadd.f32 %v456, %v484
    %486 = vmatmul.f32.gmra.mxu0 %v465
    %v487 = vpop.f32.mrf.mxu0
    %v488 = vadd.f32 %v459, %v487
    %489 = vdwg.mxu0
    %v490 = vld [vmem:[%s1 + $0x1a0] sm:$0xff]
    %v491 = vld [vmem:[%s1 + $0x1a8] sm:$0xff]
    %v492 = vld [vmem:[%s1 + $0x1b0] sm:$0xff]
    %v493 = vld [vmem:[%s1 + $0x1b8] sm:$0xff]
    %494 = vst [vmem:[#allocation1] ss:$4 sm:$0xff] %v363
    %s495 = scalar_lea.vmem [#allocation1], 1
    %496 = vst [vmem:[%s495] ss:$4 sm:$0xff] %v364
    %s497 = scalar_lea.vmem [#allocation1], 2
    %498 = vst [vmem:[%s497] ss:$4 sm:$0xff] %v365
    %s499 = scalar_lea.vmem [#allocation1], 3
    %500 = vst [vmem:[%s499] ss:$4 sm:$0xff] %v366
    %s501 = scalar_lea.vmem [#allocation1], 32
    %502 = vst [vmem:[%s501] ss:$4 sm:$0xff] %v367
    %s503 = scalar_lea.vmem [#allocation1], 33
    %504 = vst [vmem:[%s503] ss:$4 sm:$0xff] %v368
    %s505 = scalar_lea.vmem [#allocation1], 34
    %506 = vst [vmem:[%s505] ss:$4 sm:$0xff] %v369
    %s507 = scalar_lea.vmem [#allocation1], 35
    %508 = vst [vmem:[%s507] ss:$4 sm:$0xff] %v370
    %v509 = vld.sshfl [vmem:[#allocation1] sm:$0xff pattern:$0x73625140]
    %v510 = vld.sshfl [vmem:[#allocation1 + $0x20] sm:$0xff pattern:$0x73625140]
    %v511 = vsel %vm32, %v509, 0
    %v513 = vsel %vm32, %v510, 0
    %515 = vmatpush.msra.mxu0 0.0
    %516 = vmatpush.msra.mxu0 0.0
    %517 = vmatpush.msra.mxu0 0.0
    %518 = vmatpush.msra.mxu0 0.0
    %519 = vmatpush.msra.mxu0 0.0
    %520 = vmatpush.msra.mxu0 0.0
    %521 = vmatpush.msra.mxu0 0.0
    %522 = vmatpush.msra.mxu0 0.0
    %523 = vmatpush.msra.mxu0 0.0
    %524 = vmatpush.msra.mxu0 0.0
    %525 = vmatpush.msra.mxu0 0.0
    %526 = vmatpush.msra.mxu0 0.0
    %527 = vmatpush.msra.mxu0 %v493
    %528 = vmatpush.msra.mxu0 %v492
    %529 = vmatpush.msra.mxu0 %v491
    %530 = vmatpush.msra.mxu0 %v490
    %531 = vmatmul.f32.gmra.mxu0 %v511
    %v532 = vpop.f32.mrf.mxu0
    %v533 = vadd.f32 0.0, %v532
    %534 = vmatmul.f32.gmra.mxu0 %v513
    %v535 = vpop.f32.mrf.mxu0
    %v536 = vadd.f32 0.0, %v535
    %537 = vdwg.mxu0
    %v538 = vadd.f32 %v485, %v533
    %v539 = vadd.f32 %v488, %v536
    %v540 = vld [vmem:[%s2 + $0x5] sm:$0x1]
    %v541 = vperm.slane %v540, 0
    %v542 = vadd.f32 %v538, %v541
    %v543 = vadd.f32 %v539, %v541
    %v544 = vmax.f32 %v542, 0.0
    %v545 = vmax.f32 %v543, 0.0
    %v546 = vrot.slane %v544, 2
    %v547 = vrot.slane %v545, 2
    %v548 = vsel %vm113, %v546, %v547
    %v549 = vsel %vm113, %v547, %v546
    %vm550 = vcmp.lt.s32.totalorder %v394, 6
    %v551 = vsel %vm113, 0.0, %v549
    %v552 = vsel %vm550, 0.0, %v548
    %v553 = vld [vmem:[%s1 + $0x1c0] sm:$0xff]
    %v554 = vld [vmem:[%s1 + $0x1c8] sm:$0xff]
    %v555 = vld [vmem:[%s1 + $0x1d0] sm:$0xff]
    %v556 = vld [vmem:[%s1 + $0x1d8] sm:$0xff]
    %v557 = vrot.slane %v544, 5
    %v558 = vrot.slane %v545, 5
    %v559 = vsel %vm120, %v557, %v558
    %v560 = vsel %vm120, %v558, %v557
    %vm561 = vcmp.lt.s32.totalorder %v394, 3
    %v562 = vsel %vm120, 0.0, %v560
    %v563 = vsel %vm561, 0.0, %v559
    %v564 = vld [vmem:[%s1 + $0x1e0] sm:$0xff]
    %v565 = vld [vmem:[%s1 + $0x1e8] sm:$0xff]
    %v566 = vld [vmem:[%s1 + $0x1f0] sm:$0xff]
    %v567 = vld [vmem:[%s1 + $0x1f8] sm:$0xff]
    %v569 = vsel %vm32, %v562, 0
    %v572 = vsel %vm32, %v563, 0
    %574 = vmatpush.msra.mxu0 0.0
    %575 = vmatpush.msra.mxu0 0.0
    %576 = vmatpush.msra.mxu0 0.0
    %577 = vmatpush.msra.mxu0 0.0
    %578 = vmatpush.msra.mxu0 0.0
    %579 = vmatpush.msra.mxu0 0.0
    %580 = vmatpush.msra.mxu0 0.0
    %581 = vmatpush.msra.mxu0 0.0
    %582 = vmatpush.msra.mxu0 0.0
    %583 = vmatpush.msra.mxu0 0.0
    %584 = vmatpush.msra.mxu0 0.0
    %585 = vmatpush.msra.mxu0 0.0
    %586 = vmatpush.msra.mxu0 %v567
    %587 = vmatpush.msra.mxu0 %v566
    %588 = vmatpush.msra.mxu0 %v565
    %589 = vmatpush.msra.mxu0 %v564
    %590 = vmatmul.f32.gmra.mxu0 %v569
    %v591 = vpop.f32.mrf.mxu0
    %v592 = vadd.f32 0.0, %v591
    %593 = vmatmul.f32.gmra.mxu0 %v572
    %v594 = vpop.f32.mrf.mxu0
    %v595 = vadd.f32 0.0, %v594
    %596 = vdwg.mxu0
    %v598 = vsel %vm32, %v551, 0
    %v601 = vsel %vm32, %v552, 0
    %603 = vmatpush.msra.mxu0 0.0
    %604 = vmatpush.msra.mxu0 0.0
    %605 = vmatpush.msra.mxu0 0.0
    %606 = vmatpush.msra.mxu0 0.0
    %607 = vmatpush.msra.mxu0 0.0
    %608 = vmatpush.msra.mxu0 0.0
    %609 = vmatpush.msra.mxu0 0.0
    %610 = vmatpush.msra.mxu0 0.0
    %611 = vmatpush.msra.mxu0 0.0
    %612 = vmatpush.msra.mxu0 0.0
    %613 = vmatpush.msra.mxu0 0.0
    %614 = vmatpush.msra.mxu0 0.0
    %615 = vmatpush.msra.mxu0 %v556
    %616 = vmatpush.msra.mxu0 %v555
    %617 = vmatpush.msra.mxu0 %v554
    %618 = vmatpush.msra.mxu0 %v553
    %619 = vmatmul.f32.gmra.mxu0 %v598
    %v620 = vpop.f32.mrf.mxu0
    %v621 = vadd.f32 %v592, %v620
    %622 = vmatmul.f32.gmra.mxu0 %v601
    %v623 = vpop.f32.mrf.mxu0
    %v624 = vadd.f32 %v595, %v623
    %625 = vdwg.mxu0
    %v626 = vld [vmem:[%s1 + $0x200] sm:$0xff]
    %v627 = vld [vmem:[%s1 + $0x208] sm:$0xff]
    %v628 = vld [vmem:[%s1 + $0x210] sm:$0xff]
    %v629 = vld [vmem:[%s1 + $0x218] sm:$0xff]
    %v631 = vsel %vm32, %v544, 0
    %v634 = vsel %vm32, %v545, 0
    %636 = vmatpush.msra.mxu0 0.0
    %637 = vmatpush.msra.mxu0 0.0
    %638 = vmatpush.msra.mxu0 0.0
    %639 = vmatpush.msra.mxu0 0.0
    %640 = vmatpush.msra.mxu0 0.0
    %641 = vmatpush.msra.mxu0 0.0
    %642 = vmatpush.msra.mxu0 0.0
    %643 = vmatpush.msra.mxu0 0.0
    %644 = vmatpush.msra.mxu0 0.0
    %645 = vmatpush.msra.mxu0 0.0
    %646 = vmatpush.msra.mxu0 0.0
    %647 = vmatpush.msra.mxu0 0.0
    %648 = vmatpush.msra.mxu0 %v629
    %649 = vmatpush.msra.mxu0 %v628
    %650 = vmatpush.msra.mxu0 %v627
    %651 = vmatpush.msra.mxu0 %v626
    %652 = vmatmul.f32.gmra.mxu0 %v631
    %v653 = vpop.f32.mrf.mxu0
    %v654 = vadd.f32 0.0, %v653
    %655 = vmatmul.f32.gmra.mxu0 %v634
    %v656 = vpop.f32.mrf.mxu0
    %v657 = vadd.f32 0.0, %v656
    %658 = vdwg.mxu0
    %v659 = vadd.f32 %v621, %v654
    %v660 = vadd.f32 %v624, %v657
    %v661 = vld [vmem:[%s2 + $0x6] sm:$0x1]
    %v662 = vperm.slane %v661, 0
    %v663 = vadd.f32 %v659, %v662
    %v664 = vadd.f32 %v660, %v662
    %v665 = vmax.f32 %v663, 0.0
    %v666 = vmax.f32 %v664, 0.0
    %v667 = vld [vmem:[%s1 + $0x220] sm:$0xff]
    %v668 = vld [vmem:[%s1 + $0x228] sm:$0xff]
    %v669 = vld [vmem:[%s1 + $0x230] sm:$0xff]
    %v670 = vld [vmem:[%s1 + $0x238] sm:$0xff]
    %v671 = vld [vmem:[%s2 + $0x7] sm:$0x1]
    %v672 = vperm.slane %v671, 0
    %v674 = vsel %vm32, %v665, 0
    %v677 = vsel %vm32, %v666, 0
    %679 = vmatpush.msra.mxu0 0.0
    %680 = vmatpush.msra.mxu0 0.0
    %681 = vmatpush.msra.mxu0 0.0
    %682 = vmatpush.msra.mxu0 0.0
    %683 = vmatpush.msra.mxu0 0.0
    %684 = vmatpush.msra.mxu0 0.0
    %685 = vmatpush.msra.mxu0 0.0
    %686 = vmatpush.msra.mxu0 0.0
    %687 = vmatpush.msra.mxu0 0.0
    %688 = vmatpush.msra.mxu0 0.0
    %689 = vmatpush.msra.mxu0 0.0
    %690 = vmatpush.msra.mxu0 0.0
    %691 = vmatpush.msra.mxu0 %v670
    %692 = vmatpush.msra.mxu0 %v669
    %693 = vmatpush.msra.mxu0 %v668
    %694 = vmatpush.msra.mxu0 %v667
    %695 = vmatmul.f32.gmra.mxu0 %v674
    %v696 = vpop.f32.mrf.mxu0
    %v697 = vadd.f32 %v672, %v696
    %698 = vmatmul.f32.gmra.mxu0 %v677
    %v699 = vpop.f32.mrf.mxu0
    %v700 = vadd.f32 %v672, %v699
    %701 = vdwg.mxu0
    %v702 = vadd.f32 %v697, %v542
    %v703 = vadd.f32 %v700, %v543
    %v704 = vmax.f32 %v702, 0.0
    %v705 = vmax.f32 %v703, 0.0
    %v706 = vrot.slane %v704, 6
    %v707 = vrot.slane %v705, 6
    %v708 = vsel %vm19, %v706, %v707
    %v709 = vsel %vm19, %v707, %v706
    %v710 = vsel %vm19, 0.0, %v709
    %v711 = vsel %vm395, 0.0, %v708
    %v712 = vld [vmem:[%s1 + $0x240] sm:$0xff]
    %v713 = vld [vmem:[%s1 + $0x248] sm:$0xff]
    %v714 = vld [vmem:[%s1 + $0x250] sm:$0xff]
    %v715 = vld [vmem:[%s1 + $0x258] sm:$0xff]
    %v716 = vrot.slane %v704, 7
    %v717 = vrot.slane %v705, 7
    %v718 = vsel %vm26, %v716, %v717
    %v719 = vsel %vm26, %v717, %v716
    %v720 = vsel %vm26, 0.0, %v719
    %v721 = vsel %vm425, 0.0, %v718
    %v722 = vld [vmem:[%s1 + $0x260] sm:$0xff]
    %v723 = vld [vmem:[%s1 + $0x268] sm:$0xff]
    %v724 = vld [vmem:[%s1 + $0x270] sm:$0xff]
    %v725 = vld [vmem:[%s1 + $0x278] sm:$0xff]
    %v727 = vsel %vm32, %v720, 0
    %v730 = vsel %vm32, %v721, 0
    %732 = vmatpush.msra.mxu0 0.0
    %733 = vmatpush.msra.mxu0 0.0
    %734 = vmatpush.msra.mxu0 0.0
    %735 = vmatpush.msra.mxu0 0.0
    %736 = vmatpush.msra.mxu0 0.0
    %737 = vmatpush.msra.mxu0 0.0
    %738 = vmatpush.msra.mxu0 0.0
    %739 = vmatpush.msra.mxu0 0.0
    %740 = vmatpush.msra.mxu0 0.0
    %741 = vmatpush.msra.mxu0 0.0
    %742 = vmatpush.msra.mxu0 0.0
    %743 = vmatpush.msra.mxu0 0.0
    %744 = vmatpush.msra.mxu0 %v725
    %745 = vmatpush.msra.mxu0 %v724
    %746 = vmatpush.msra.mxu0 %v723
    %747 = vmatpush.msra.mxu0 %v722
    %748 = vmatmul.f32.gmra.mxu0 %v727
    %v749 = vpop.f32.mrf.mxu0
    %v750 = vadd.f32 0.0, %v749
    %751 = vmatmul.f32.gmra.mxu0 %v730
    %v752 = vpop.f32.mrf.mxu0
    %v753 = vadd.f32 0.0, %v752
    %754 = vdwg.mxu0
    %v756 = vsel %vm32, %v710, 0
    %v759 = vsel %vm32, %v711, 0
    %761 = vmatpush.msra.mxu0 0.0
    %762 = vmatpush.msra.mxu0 0.0
    %763 = vmatpush.msra.mxu0 0.0
    %764 = vmatpush.msra.mxu0 0.0
    %765 = vmatpush.msra.mxu0 0.0
    %766 = vmatpush.msra.mxu0 0.0
    %767 = vmatpush.msra.mxu0 0.0
    %768 = vmatpush.msra.mxu0 0.0
    %769 = vmatpush.msra.mxu0 0.0
    %770 = vmatpush.msra.mxu0 0.0
    %771 = vmatpush.msra.mxu0 0.0
    %772 = vmatpush.msra.mxu0 0.0
    %773 = vmatpush.msra.mxu0 %v715
    %774 = vmatpush.msra.mxu0 %v714
    %775 = vmatpush.msra.mxu0 %v713
    %776 = vmatpush.msra.mxu0 %v712
    %777 = vmatmul.f32.gmra.mxu0 %v756
    %v778 = vpop.f32.mrf.mxu0
    %v779 = vadd.f32 %v750, %v778
    %780 = vmatmul.f32.gmra.mxu0 %v759
    %v781 = vpop.f32.mrf.mxu0
    %v782 = vadd.f32 %v753, %v781
    %783 = vdwg.mxu0
    %v784 = vld [vmem:[%s1 + $0x280] sm:$0xff]
    %v785 = vld [vmem:[%s1 + $0x288] sm:$0xff]
    %v786 = vld [vmem:[%s1 + $0x290] sm:$0xff]
    %v787 = vld [vmem:[%s1 + $0x298] sm:$0xff]
    %v789 = vsel %vm32, %v704, 0
    %v792 = vsel %vm32, %v705, 0
    %794 = vmatpush.msra.mxu0 0.0
    %795 = vmatpush.msra.mxu0 0.0
    %796 = vmatpush.msra.mxu0 0.0
    %797 = vmatpush.msra.mxu0 0.0
    %798 = vmatpush.msra.mxu0 0.0
    %799 = vmatpush.msra.mxu0 0.0
    %800 = vmatpush.msra.mxu0 0.0
    %801 = vmatpush.msra.mxu0 0.0
    %802 = vmatpush.msra.mxu0 0.0
    %803 = vmatpush.msra.mxu0 0.0
    %804 = vmatpush.msra.mxu0 0.0
    %805 = vmatpush.msra.mxu0 0.0
    %806 = vmatpush.msra.mxu0 %v787
    %807 = vmatpush.msra.mxu0 %v786
    %808 = vmatpush.msra.mxu0 %v785
    %809 = vmatpush.msra.mxu0 %v784
    %810 = vmatmul.f32.gmra.mxu0 %v789
    %v811 = vpop.f32.mrf.mxu0
    %v812 = vadd.f32 0.0, %v811
    %813 = vmatmul.f32.gmra.mxu0 %v792
    %v814 = vpop.f32.mrf.mxu0
    %v815 = vadd.f32 0.0, %v814
    %816 = vdwg.mxu0
    %v817 = vadd.f32 %v779, %v812
    %v818 = vadd.f32 %v782, %v815
    %v819 = vld [vmem:[%s2 + $0x8] sm:$0x1]
    %v820 = vperm.slane %v819, 0
    %v821 = vadd.f32 %v817, %v820
    %v822 = vadd.f32 %v818, %v820
    %v823 = vmax.f32 %v821, 0.0
    %v824 = vmax.f32 %v822, 0.0
    %v825 = vld [vmem:[%s1 + $0x2a0] sm:$0xff]
    %v826 = vld [vmem:[%s1 + $0x2a8] sm:$0xff]
    %v827 = vld [vmem:[%s1 + $0x2b0] sm:$0xff]
    %v828 = vld [vmem:[%s1 + $0x2b8] sm:$0xff]
    %v829 = vld [vmem:[%s2 + $0x9] sm:$0x1]
    %v830 = vperm.slane %v829, 0
    %v832 = vsel %vm32, %v823, 0
    %v835 = vsel %vm32, %v824, 0
    %837 = vmatpush.msra.mxu0 0.0
    %838 = vmatpush.msra.mxu0 0.0
    %839 = vmatpush.msra.mxu0 0.0
    %840 = vmatpush.msra.mxu0 0.0
    %841 = vmatpush.msra.mxu0 0.0
    %842 = vmatpush.msra.mxu0 0.0
    %843 = vmatpush.msra.mxu0 0.0
    %844 = vmatpush.msra.mxu0 0.0
    %845 = vmatpush.msra.mxu0 0.0
    %846 = vmatpush.msra.mxu0 0.0
    %847 = vmatpush.msra.mxu0 0.0
    %848 = vmatpush.msra.mxu0 0.0
    %849 = vmatpush.msra.mxu0 %v828
    %850 = vmatpush.msra.mxu0 %v827
    %851 = vmatpush.msra.mxu0 %v826
    %852 = vmatpush.msra.mxu0 %v825
    %853 = vmatmul.f32.gmra.mxu0 %v832
    %v854 = vpop.f32.mrf.mxu0
    %v855 = vadd.f32 %v830, %v854
    %856 = vmatmul.f32.gmra.mxu0 %v835
    %v857 = vpop.f32.mrf.mxu0
    %v858 = vadd.f32 %v830, %v857
    %859 = vdwg.mxu0
    %v860 = vadd.f32 %v855, %v702
    %v861 = vadd.f32 %v858, %v703
    %v864 = vrot.slane %v860, 1
    %v865 = vrot.slane %v860, 2
    %v866 = vrot.slane %v860, 3
    %v867 = vrot.slane %v860, 4
    %v868 = vrot.slane %v860, 5
    %v869 = vrot.slane %v860, 6
    %v870 = vrot.slane %v860, 7
    %v871 = vrot.slane %v861, 1
    %v872 = vrot.slane %v861, 2
    %v873 = vrot.slane %v861, 3
    %v874 = vrot.slane %v861, 4
    %v875 = vrot.slane %v861, 5
    %v876 = vrot.slane %v861, 6
    %v877 = vrot.slane %v861, 7
    %v878 = vperm.slane %v860, 0
    %v879 = vperm.slane %v864, 0
    %v880 = vperm.slane %v865, 0
    %v881 = vperm.slane %v866, 0
    %v882 = vperm.slane %v867, 0
    %v883 = vperm.slane %v868, 0
    %v884 = vperm.slane %v869, 0
    %v885 = vperm.slane %v870, 0
    %v886 = vperm.slane %v861, 0
    %v887 = vperm.slane %v871, 0
    %v888 = vperm.slane %v872, 0
    %v889 = vperm.slane %v873, 0
    %v890 = vperm.slane %v874, 0
    %v891 = vperm.slane %v875, 0
    %v892 = vperm.slane %v876, 0
    %v893 = vperm.slane %v877, 0
    %894 = vst [vmem:[#allocation1] ss:$4 sm:$0xff] %v878
    %s895 = scalar_lea.vmem [#allocation1], 1
    %896 = vst [vmem:[%s895] ss:$4 sm:$0xff] %v879
    %s897 = scalar_lea.vmem [#allocation1], 2
    %898 = vst [vmem:[%s897] ss:$4 sm:$0xff] %v880
    %s899 = scalar_lea.vmem [#allocation1], 3
    %900 = vst [vmem:[%s899] ss:$4 sm:$0xff] %v881
    %s901 = scalar_lea.vmem [#allocation1], 32
    %902 = vst [vmem:[%s901] ss:$4 sm:$0xff] %v882
    %s903 = scalar_lea.vmem [#allocation1], 33
    %904 = vst [vmem:[%s903] ss:$4 sm:$0xff] %v883
    %s905 = scalar_lea.vmem [#allocation1], 34
    %906 = vst [vmem:[%s905] ss:$4 sm:$0xff] %v884
    %s907 = scalar_lea.vmem [#allocation1], 35
    %908 = vst [vmem:[%s907] ss:$4 sm:$0xff] %v885
    %v909 = vld.sshfl [vmem:[#allocation1] sm:$0xff pattern:$0x73625140]
    %v910 = vld.sshfl [vmem:[#allocation1 + $0x20] sm:$0xff pattern:$0x73625140]
    %911 = vst [vmem:[#allocation1] ss:$4 sm:$0xff] %v886
    %912 = vst [vmem:[%s895] ss:$4 sm:$0xff] %v887
    %913 = vst [vmem:[%s897] ss:$4 sm:$0xff] %v888
    %914 = vst [vmem:[%s899] ss:$4 sm:$0xff] %v889
    %915 = vst [vmem:[%s901] ss:$4 sm:$0xff] %v890
    %916 = vst [vmem:[%s903] ss:$4 sm:$0xff] %v891
    %917 = vst [vmem:[%s905] ss:$4 sm:$0xff] %v892
    %918 = vst [vmem:[%s907] ss:$4 sm:$0xff] %v893
    %v919 = vld.sshfl [vmem:[#allocation1] sm:$0xff pattern:$0x73625140]
    %v920 = vld.sshfl [vmem:[#allocation1 + $0x20] sm:$0xff pattern:$0x73625140]
    %v925 = vrot.slane %v909, 6
    %v926 = vrot.slane %v910, 6
    %v927 = vrot.slane %v919, 6
    %v928 = vrot.slane %v920, 6
    %v929 = vsel %vm19, %v927, %v928
    %v930 = vsel %vm19, %v926, %v927
    %v931 = vsel %vm19, %v925, %v926
    %v932 = vsel %vm19, %v928, %v925
    %v933 = vadd.s32 %v18, 16
    %v934 = vadd.s32 %v18, 24
    %vm935 = vcmp.lt.s32.totalorder %v933, 2
    %vm936 = vcmp.lt.s32.totalorder %v934, 2
    %v937 = vsel %vm19, 0.0, %v932
    %v938 = vsel %vm395, 0.0, %v931
    %v939 = vsel %vm935, 0.0, %v930
    %v940 = vsel %vm936, 0.0, %v929
    %v941 = vld [vmem:[%s1 + $0x2c0] sm:$0xff]
    %v942 = vld [vmem:[%s1 + $0x2c8] sm:$0xff]
    %v943 = vld [vmem:[%s1 + $0x2d0] sm:$0xff]
    %v944 = vld [vmem:[%s1 + $0x2d8] sm:$0xff]
    %945 = vst [vmem:[#allocation1] ss:$4 sm:$0xff] %v878
    %s946 = scalar_lea.vmem [#allocation1], 1
    %947 = vst [vmem:[%s946] ss:$4 sm:$0xff] %v879
    %s948 = scalar_lea.vmem [#allocation1], 2
    %949 = vst [vmem:[%s948] ss:$4 sm:$0xff] %v880
    %s950 = scalar_lea.vmem [#allocation1], 3
    %951 = vst [vmem:[%s950] ss:$4 sm:$0xff] %v881
    %s952 = scalar_lea.vmem [#allocation1], 32
    %953 = vst [vmem:[%s952] ss:$4 sm:$0xff] %v882
    %s954 = scalar_lea.vmem [#allocation1], 33
    %955 = vst [vmem:[%s954] ss:$4 sm:$0xff] %v883
    %s956 = scalar_lea.vmem [#allocation1], 34
    %957 = vst [vmem:[%s956] ss:$4 sm:$0xff] %v884
    %s958 = scalar_lea.vmem [#allocation1], 35
    %959 = vst [vmem:[%s958] ss:$4 sm:$0xff] %v885
    %v960 = vld.sshfl [vmem:[#allocation1] sm:$0xff pattern:$0x73625140]
    %v961 = vld.sshfl [vmem:[#allocation1 + $0x20] sm:$0xff pattern:$0x73625140]
    %962 = vst [vmem:[#allocation1] ss:$4 sm:$0xff] %v886
    %963 = vst [vmem:[%s946] ss:$4 sm:$0xff] %v887
    %964 = vst [vmem:[%s948] ss:$4 sm:$0xff] %v888
    %965 = vst [vmem:[%s950] ss:$4 sm:$0xff] %v889
    %966 = vst [vmem:[%s952] ss:$4 sm:$0xff] %v890
    %967 = vst [vmem:[%s954] ss:$4 sm:$0xff] %v891
    %968 = vst [vmem:[%s956] ss:$4 sm:$0xff] %v892
    %969 = vst [vmem:[%s958] ss:$4 sm:$0xff] %v893
    %v970 = vld.sshfl [vmem:[#allocation1] sm:$0xff pattern:$0x73625140]
    %v971 = vld.sshfl [vmem:[#allocation1 + $0x20] sm:$0xff pattern:$0x73625140]
    %v976 = vrot.slane %v960, 7
    %v977 = vrot.slane %v961, 7
    %v978 = vrot.slane %v970, 7
    %v979 = vrot.slane %v971, 7
    %v980 = vsel %vm26, %v978, %v979
    %v981 = vsel %vm26, %v977, %v978
    %v982 = vsel %vm26, %v976, %v977
    %v983 = vsel %vm26, %v979, %v976
    %vm984 = vcmp.lt.s32.totalorder %v933, 1
    %vm985 = vcmp.lt.s32.totalorder %v934, 1
    %v986 = vsel %vm26, 0.0, %v983
    %v987 = vsel %vm425, 0.0, %v982
    %v988 = vsel %vm984, 0.0, %v981
    %v989 = vsel %vm985, 0.0, %v980
    %v990 = vld [vmem:[%s1 + $0x2e0] sm:$0xff]
    %v991 = vld [vmem:[%s1 + $0x2e8] sm:$0xff]
    %v992 = vld [vmem:[%s1 + $0x2f0] sm:$0xff]
    %v993 = vld [vmem:[%s1 + $0x2f8] sm:$0xff]
    %v995 = vsel %vm32, %v986, 0
    %v998 = vsel %vm32, %v987, 0
    %v1001 = vsel %vm32, %v988, 0
    %v1004 = vsel %vm32, %v989, 0
    %1006 = vmatpush.msra.mxu0 0.0
    %1007 = vmatpush.msra.mxu0 0.0
    %1008 = vmatpush.msra.mxu0 0.0
    %1009 = vmatpush.msra.mxu0 0.0
    %1010 = vmatpush.msra.mxu0 0.0
    %1011 = vmatpush.msra.mxu0 0.0
    %1012 = vmatpush.msra.mxu0 0.0
    %1013 = vmatpush.msra.mxu0 0.0
    %1014 = vmatpush.msra.mxu0 0.0
    %1015 = vmatpush.msra.mxu0 0.0
    %1016 = vmatpush.msra.mxu0 0.0
    %1017 = vmatpush.msra.mxu0 0.0
    %1018 = vmatpush.msra.mxu0 %v993
    %1019 = vmatpush.msra.mxu0 %v992
    %1020 = vmatpush.msra.mxu0 %v991
    %1021 = vmatpush.msra.mxu0 %v990
    %1022 = vmatmul.f32.gmra.mxu0 %v995
    %v1023 = vpop.f32.mrf.mxu0
    %v1024 = vadd.f32 0.0, %v1023
    %1025 = vmatmul.f32.gmra.mxu0 %v998
    %v1026 = vpop.f32.mrf.mxu0
    %v1027 = vadd.f32 0.0, %v1026
    %1028 = vmatmul.f32.gmra.mxu0 %v1001
    %v1029 = vpop.f32.mrf.mxu0
    %v1030 = vadd.f32 0.0, %v1029
    %1031 = vmatmul.f32.gmra.mxu0 %v1004
    %v1032 = vpop.f32.mrf.mxu0
    %v1033 = vadd.f32 0.0, %v1032
    %1034 = vdwg.mxu0
    %v1036 = vsel %vm32, %v937, 0
    %v1039 = vsel %vm32, %v938, 0
    %v1042 = vsel %vm32, %v939, 0
    %v1045 = vsel %vm32, %v940, 0
    %1047 = vmatpush.msra.mxu0 0.0
    %1048 = vmatpush.msra.mxu0 0.0
    %1049 = vmatpush.msra.mxu0 0.0
    %1050 = vmatpush.msra.mxu0 0.0
    %1051 = vmatpush.msra.mxu0 0.0
    %1052 = vmatpush.msra.mxu0 0.0
    %1053 = vmatpush.msra.mxu0 0.0
    %1054 = vmatpush.msra.mxu0 0.0
    %1055 = vmatpush.msra.mxu0 0.0
    %1056 = vmatpush.msra.mxu0 0.0
    %1057 = vmatpush.msra.mxu0 0.0
    %1058 = vmatpush.msra.mxu0 0.0
    %1059 = vmatpush.msra.mxu0 %v944
    %1060 = vmatpush.msra.mxu0 %v943
    %1061 = vmatpush.msra.mxu0 %v942
    %1062 = vmatpush.msra.mxu0 %v941
    %1063 = vmatmul.f32.gmra.mxu0 %v1036
    %v1064 = vpop.f32.mrf.mxu0
    %v1065 = vadd.f32 %v1024, %v1064
    %1066 = vmatmul.f32.gmra.mxu0 %v1039
    %v1067 = vpop.f32.mrf.mxu0
    %v1068 = vadd.f32 %v1027, %v1067
    %1069 = vmatmul.f32.gmra.mxu0 %v1042
    %v1070 = vpop.f32.mrf.mxu0
    %v1071 = vadd.f32 %v1030, %v1070
    %1072 = vmatmul.f32.gmra.mxu0 %v1045
    %v1073 = vpop.f32.mrf.mxu0
    %v1074 = vadd.f32 %v1033, %v1073
    %1075 = vdwg.mxu0
    %v1076 = vld [vmem:[%s1 + $0x300] sm:$0xff]
    %v1077 = vld [vmem:[%s1 + $0x308] sm:$0xff]
    %v1078 = vld [vmem:[%s1 + $0x310] sm:$0xff]
    %v1079 = vld [vmem:[%s1 + $0x318] sm:$0xff]
    %1080 = vst [vmem:[#allocation1] ss:$4 sm:$0xff] %v878
    %s1081 = scalar_lea.vmem [#allocation1], 1
    %1082 = vst [vmem:[%s1081] ss:$4 sm:$0xff] %v879
    %s1083 = scalar_lea.vmem [#allocation1], 2
    %1084 = vst [vmem:[%s1083] ss:$4 sm:$0xff] %v880
    %s1085 = scalar_lea.vmem [#allocation1], 3
    %1086 = vst [vmem:[%s1085] ss:$4 sm:$0xff] %v881
    %s1087 = scalar_lea.vmem [#allocation1], 32
    %1088 = vst [vmem:[%s1087] ss:$4 sm:$0xff] %v882
    %s1089 = scalar_lea.vmem [#allocation1], 33
    %1090 = vst [vmem:[%s1089] ss:$4 sm:$0xff] %v883
    %s1091 = scalar_lea.vmem [#allocation1], 34
    %1092 = vst [vmem:[%s1091] ss:$4 sm:$0xff] %v884
    %s1093 = scalar_lea.vmem [#allocation1], 35
    %1094 = vst [vmem:[%s1093] ss:$4 sm:$0xff] %v885
    %v1095 = vld.sshfl [vmem:[#allocation1] sm:$0xff pattern:$0x73625140]
    %v1096 = vld.sshfl [vmem:[#allocation1 + $0x20] sm:$0xff pattern:$0x73625140]
    %1097 = vst [vmem:[#allocation1] ss:$4 sm:$0xff] %v886
    %1098 = vst [vmem:[%s1081] ss:$4 sm:$0xff] %v887
    %1099 = vst [vmem:[%s1083] ss:$4 sm:$0xff] %v888
    %1100 = vst [vmem:[%s1085] ss:$4 sm:$0xff] %v889
    %1101 = vst [vmem:[%s1087] ss:$4 sm:$0xff] %v890
    %1102 = vst [vmem:[%s1089] ss:$4 sm:$0xff] %v891
    %1103 = vst [vmem:[%s1091] ss:$4 sm:$0xff] %v892
    %1104 = vst [vmem:[%s1093] ss:$4 sm:$0xff] %v893
    %v1105 = vld.sshfl [vmem:[#allocation1] sm:$0xff pattern:$0x73625140]
    %v1106 = vld.sshfl [vmem:[#allocation1 + $0x20] sm:$0xff pattern:$0x73625140]
    %v1107 = vsel %vm32, %v1095, 0
    %v1109 = vsel %vm32, %v1096, 0
    %v1111 = vsel %vm32, %v1105, 0
    %v1113 = vsel %vm32, %v1106, 0
    %1115 = vmatpush.msra.mxu0 0.0
    %1116 = vmatpush.msra.mxu0 0.0
    %1117 = vmatpush.msra.mxu0 0.0
    %1118 = vmatpush.msra.mxu0 0.0
    %1119 = vmatpush.msra.mxu0 0.0
    %1120 = vmatpush.msra.mxu0 0.0
    %1121 = vmatpush.msra.mxu0 0.0
    %1122 = vmatpush.msra.mxu0 0.0
    %1123 = vmatpush.msra.mxu0 0.0
    %1124 = vmatpush.msra.mxu0 0.0
    %1125 = vmatpush.msra.mxu0 0.0
    %1126 = vmatpush.msra.mxu0 0.0
    %1127 = vmatpush.msra.mxu0 %v1079
    %1128 = vmatpush.msra.mxu0 %v1078
    %1129 = vmatpush.msra.mxu0 %v1077
    %1130 = vmatpush.msra.mxu0 %v1076
    %1131 = vmatmul.f32.gmra.mxu0 %v1107
    %v1132 = vpop.f32.mrf.mxu0
    %v1133 = vadd.f32 0.0, %v1132
    %1134 = vmatmul.f32.gmra.mxu0 %v1109
    %v1135 = vpop.f32.mrf.mxu0
    %v1136 = vadd.f32 0.0, %v1135
    %1137 = vmatmul.f32.gmra.mxu0 %v1111
    %v1138 = vpop.f32.mrf.mxu0
    %v1139 = vadd.f32 0.0, %v1138
    %1140 = vmatmul.f32.gmra.mxu0 %v1113
    %v1141 = vpop.f32.mrf.mxu0
    %v1142 = vadd.f32 0.0, %v1141
    %1143 = vdwg.mxu0
    %v1144 = vadd.f32 %v1065, %v1133
    %v1145 = vadd.f32 %v1068, %v1136
    %v1146 = vadd.f32 %v1071, %v1139
    %v1147 = vadd.f32 %v1074, %v1142
    %v1148 = vld [vmem:[%s2 + $0xa] sm:$0x1]
    %v1149 = vperm.slane %v1148, 0
    %v1150 = vadd.f32 %v1144, %v1149
    %v1151 = vadd.f32 %v1145, %v1149
    %v1152 = vadd.f32 %v1146, %v1149
    %v1153 = vadd.f32 %v1147, %v1149
    %v1154 = vrot.slane %v1150, 6
    %v1155 = vrot.slane %v1151, 6
    %v1156 = vrot.slane %v1152, 6
    %v1157 = vrot.slane %v1153, 6
    %v1158 = vsel %vm19, %v1156, %v1157
    %v1159 = vsel %vm19, %v1155, %v1156
    %v1160 = vsel %vm19, %v1154, %v1155
    %v1161 = vsel %vm19, %v1157, %v1154
    %v1162 = vsel %vm19, 0.0, %v1161
    %v1163 = vsel %vm395, 0.0, %v1160
    %v1164 = vsel %vm935, 0.0, %v1159
    %v1165 = vsel %vm936, 0.0, %v1158
    %v1166 = vld [vmem:[%s1 + $0x320] sm:$0xff]
    %v1167 = vld [vmem:[%s1 + $0x328] sm:$0xff]
    %v1168 = vld [vmem:[%s1 + $0x330] sm:$0xff]
    %v1169 = vld [vmem:[%s1 + $0x338] sm:$0xff]
    %v1170 = vrot.slane %v1150, 7
    %v1171 = vrot.slane %v1151, 7
    %v1172 = vrot.slane %v1152, 7
    %v1173 = vrot.slane %v1153, 7
    %v1174 = vsel %vm26, %v1172, %v1173
    %v1175 = vsel %vm26, %v1171, %v1172
    %v1176 = vsel %vm26, %v1170, %v1171
    %v1177 = vsel %vm26, %v1173, %v1170
    %v1178 = vsel %vm26, 0.0, %v1177
    %v1179 = vsel %vm425, 0.0, %v1176
    %v1180 = vsel %vm984, 0.0, %v1175
    %v1181 = vsel %vm985, 0.0, %v1174
    %v1182 = vld [vmem:[%s1 + $0x340] sm:$0xff]
    %v1183 = vld [vmem:[%s1 + $0x348] sm:$0xff]
    %v1184 = vld [vmem:[%s1 + $0x350] sm:$0xff]
    %v1185 = vld [vmem:[%s1 + $0x358] sm:$0xff]
    %v1187 = vsel %vm32, %v1178, 0
    %v1190 = vsel %vm32, %v1179, 0
    %v1193 = vsel %vm32, %v1180, 0
    %v1196 = vsel %vm32, %v1181, 0
    %1198 = vmatpush.msra.mxu0 0.0
    %1199 = vmatpush.msra.mxu0 0.0
    %1200 = vmatpush.msra.mxu0 0.0
    %1201 = vmatpush.msra.mxu0 0.0
    %1202 = vmatpush.msra.mxu0 0.0
    %1203 = vmatpush.msra.mxu0 0.0
    %1204 = vmatpush.msra.mxu0 0.0
    %1205 = vmatpush.msra.mxu0 0.0
    %1206 = vmatpush.msra.mxu0 0.0
    %1207 = vmatpush.msra.mxu0 0.0
    %1208 = vmatpush.msra.mxu0 0.0
    %1209 = vmatpush.msra.mxu0 0.0
    %1210 = vmatpush.msra.mxu0 %v1185
    %1211 = vmatpush.msra.mxu0 %v1184
    %1212 = vmatpush.msra.mxu0 %v1183
    %1213 = vmatpush.msra.mxu0 %v1182
    %1214 = vmatmul.f32.gmra.mxu0 %v1187
    %v1215 = vpop.f32.mrf.mxu0
    %v1216 = vadd.f32 0.0, %v1215
    %1217 = vmatmul.f32.gmra.mxu0 %v1190
    %v1218 = vpop.f32.mrf.mxu0
    %v1219 = vadd.f32 0.0, %v1218
    %1220 = vmatmul.f32.gmra.mxu0 %v1193
    %v1221 = vpop.f32.mrf.mxu0
    %v1222 = vadd.f32 0.0, %v1221
    %1223 = vmatmul.f32.gmra.mxu0 %v1196
    %v1224 = vpop.f32.mrf.mxu0
    %v1225 = vadd.f32 0.0, %v1224
    %1226 = vdwg.mxu0
    %v1228 = vsel %vm32, %v1162, 0
    %v1231 = vsel %vm32, %v1163, 0
    %v1234 = vsel %vm32, %v1164, 0
    %v1237 = vsel %vm32, %v1165, 0
    %1239 = vmatpush.msra.mxu0 0.0
    %1240 = vmatpush.msra.mxu0 0.0
    %1241 = vmatpush.msra.mxu0 0.0
    %1242 = vmatpush.msra.mxu0 0.0
    %1243 = vmatpush.msra.mxu0 0.0
    %1244 = vmatpush.msra.mxu0 0.0
    %1245 = vmatpush.msra.mxu0 0.0
    %1246 = vmatpush.msra.mxu0 0.0
    %1247 = vmatpush.msra.mxu0 0.0
    %1248 = vmatpush.msra.mxu0 0.0
    %1249 = vmatpush.msra.mxu0 0.0
    %1250 = vmatpush.msra.mxu0 0.0
    %1251 = vmatpush.msra.mxu0 %v1169
    %1252 = vmatpush.msra.mxu0 %v1168
    %1253 = vmatpush.msra.mxu0 %v1167
    %1254 = vmatpush.msra.mxu0 %v1166
    %1255 = vmatmul.f32.gmra.mxu0 %v1228
    %v1256 = vpop.f32.mrf.mxu0
    %v1257 = vadd.f32 %v1216, %v1256
    %1258 = vmatmul.f32.gmra.mxu0 %v1231
    %v1259 = vpop.f32.mrf.mxu0
    %v1260 = vadd.f32 %v1219, %v1259
    %1261 = vmatmul.f32.gmra.mxu0 %v1234
    %v1262 = vpop.f32.mrf.mxu0
    %v1263 = vadd.f32 %v1222, %v1262
    %1264 = vmatmul.f32.gmra.mxu0 %v1237
    %v1265 = vpop.f32.mrf.mxu0
    %v1266 = vadd.f32 %v1225, %v1265
    %1267 = vdwg.mxu0
    %v1268 = vld [vmem:[%s1 + $0x360] sm:$0xff]
    %v1269 = vld [vmem:[%s1 + $0x368] sm:$0xff]
    %v1270 = vld [vmem:[%s1 + $0x370] sm:$0xff]
    %v1271 = vld [vmem:[%s1 + $0x378] sm:$0xff]
    %v1273 = vsel %vm32, %v1150, 0
    %v1276 = vsel %vm32, %v1151, 0
    %v1279 = vsel %vm32, %v1152, 0
    %v1282 = vsel %vm32, %v1153, 0
    %1284 = vmatpush.msra.mxu0 0.0
    %1285 = vmatpush.msra.mxu0 0.0
    %1286 = vmatpush.msra.mxu0 0.0
    %1287 = vmatpush.msra.mxu0 0.0
    %1288 = vmatpush.msra.mxu0 0.0
    %1289 = vmatpush.msra.mxu0 0.0
    %1290 = vmatpush.msra.mxu0 0.0
    %1291 = vmatpush.msra.mxu0 0.0
    %1292 = vmatpush.msra.mxu0 0.0
    %1293 = vmatpush.msra.mxu0 0.0
    %1294 = vmatpush.msra.mxu0 0.0
    %1295 = vmatpush.msra.mxu0 0.0
    %1296 = vmatpush.msra.mxu0 %v1271
    %1297 = vmatpush.msra.mxu0 %v1270
    %1298 = vmatpush.msra.mxu0 %v1269
    %1299 = vmatpush.msra.mxu0 %v1268
    %1300 = vmatmul.f32.gmra.mxu0 %v1273
    %v1301 = vpop.f32.mrf.mxu0
    %v1302 = vadd.f32 0.0, %v1301
    %1303 = vmatmul.f32.gmra.mxu0 %v1276
    %v1304 = vpop.f32.mrf.mxu0
    %v1305 = vadd.f32 0.0, %v1304
    %1306 = vmatmul.f32.gmra.mxu0 %v1279
    %v1307 = vpop.f32.mrf.mxu0
    %v1308 = vadd.f32 0.0, %v1307
    %1309 = vmatmul.f32.gmra.mxu0 %v1282
    %v1310 = vpop.f32.mrf.mxu0
    %v1311 = vadd.f32 0.0, %v1310
    %1312 = vdwg.mxu0
    %v1313 = vadd.f32 %v1257, %v1302
    %v1314 = vadd.f32 %v1260, %v1305
    %v1315 = vadd.f32 %v1263, %v1308
    %v1316 = vadd.f32 %v1266, %v1311
    %v1317 = vld [vmem:[%s2 + $0xb] sm:$0x1]
    %v1318 = vperm.slane %v1317, 0
    %v1319 = vadd.f32 %v1313, %v1318
    %v1320 = vadd.f32 %v1314, %v1318
    %v1321 = vadd.f32 %v1315, %v1318
    %v1322 = vadd.f32 %v1316, %v1318
    %v1323 = vmax.f32 %v1319, 0.0
    %v1324 = vmax.f32 %v1320, 0.0
    %v1325 = vmax.f32 %v1321, 0.0
    %v1326 = vmax.f32 %v1322, 0.0
    %v1327 = vrot.slane %v1323, 6
    %v1328 = vrot.slane %v1324, 6
    %v1329 = vrot.slane %v1325, 6
    %v1330 = vrot.slane %v1326, 6
    %v1331 = vsel %vm19, %v1329, %v1330
    %v1332 = vsel %vm19, %v1328, %v1329
    %v1333 = vsel %vm19, %v1327, %v1328
    %v1334 = vsel %vm19, %v1330, %v1327
    %v1335 = vsel %vm19, 0.0, %v1334
    %v1336 = vsel %vm395, 0.0, %v1333
    %v1337 = vsel %vm935, 0.0, %v1332
    %v1338 = vsel %vm936, 0.0, %v1331
    %v1339 = vld [vmem:[%s1 + $0x380] sm:$0xff]
    %v1340 = vld [vmem:[%s1 + $0x388] sm:$0xff]
    %v1341 = vld [vmem:[%s1 + $0x390] sm:$0xff]
    %v1342 = vld [vmem:[%s1 + $0x398] sm:$0xff]
    %v1343 = vrot.slane %v1323, 7
    %v1344 = vrot.slane %v1324, 7
    %v1345 = vrot.slane %v1325, 7
    %v1346 = vrot.slane %v1326, 7
    %v1347 = vsel %vm26, %v1345, %v1346
    %v1348 = vsel %vm26, %v1344, %v1345
    %v1349 = vsel %vm26, %v1343, %v1344
    %v1350 = vsel %vm26, %v1346, %v1343
    %v1351 = vsel %vm26, 0.0, %v1350
    %v1352 = vsel %vm425, 0.0, %v1349
    %v1353 = vsel %vm984, 0.0, %v1348
    %v1354 = vsel %vm985, 0.0, %v1347
    %v1355 = vld [vmem:[%s1 + $0x3a0] sm:$0xff]
    %v1356 = vld [vmem:[%s1 + $0x3a8] sm:$0xff]
    %v1357 = vld [vmem:[%s1 + $0x3b0] sm:$0xff]
    %v1358 = vld [vmem:[%s1 + $0x3b8] sm:$0xff]
    %v1360 = vsel %vm32, %v1351, 0
    %v1363 = vsel %vm32, %v1352, 0
    %v1366 = vsel %vm32, %v1353, 0
    %v1369 = vsel %vm32, %v1354, 0
    %1371 = vmatpush.msra.mxu0 0.0
    %1372 = vmatpush.msra.mxu0 0.0
    %1373 = vmatpush.msra.mxu0 0.0
    %1374 = vmatpush.msra.mxu0 0.0
    %1375 = vmatpush.msra.mxu0 0.0
    %1376 = vmatpush.msra.mxu0 0.0
    %1377 = vmatpush.msra.mxu0 0.0
    %1378 = vmatpush.msra.mxu0 0.0
    %1379 = vmatpush.msra.mxu0 0.0
    %1380 = vmatpush.msra.mxu0 0.0
    %1381 = vmatpush.msra.mxu0 0.0
    %1382 = vmatpush.msra.mxu0 0.0
    %1383 = vmatpush.msra.mxu0 %v1358
    %1384 = vmatpush.msra.mxu0 %v1357
    %1385 = vmatpush.msra.mxu0 %v1356
    %1386 = vmatpush.msra.mxu0 %v1355
    %1387 = vmatmul.f32.gmra.mxu0 %v1360
    %v1388 = vpop.f32.mrf.mxu0
    %v1389 = vadd.f32 0.0, %v1388
    %1390 = vmatmul.f32.gmra.mxu0 %v1363
    %v1391 = vpop.f32.mrf.mxu0
    %v1392 = vadd.f32 0.0, %v1391
    %1393 = vmatmul.f32.gmra.mxu0 %v1366
    %v1394 = vpop.f32.mrf.mxu0
    %v1395 = vadd.f32 0.0, %v1394
    %1396 = vmatmul.f32.gmra.mxu0 %v1369
    %v1397 = vpop.f32.mrf.mxu0
    %v1398 = vadd.f32 0.0, %v1397
    %1399 = vdwg.mxu0
    %v1401 = vsel %vm32, %v1335, 0
    %v1404 = vsel %vm32, %v1336, 0
    %v1407 = vsel %vm32, %v1337, 0
    %v1410 = vsel %vm32, %v1338, 0
    %1412 = vmatpush.msra.mxu0 0.0
    %1413 = vmatpush.msra.mxu0 0.0
    %1414 = vmatpush.msra.mxu0 0.0
    %1415 = vmatpush.msra.mxu0 0.0
    %1416 = vmatpush.msra.mxu0 0.0
    %1417 = vmatpush.msra.mxu0 0.0
    %1418 = vmatpush.msra.mxu0 0.0
    %1419 = vmatpush.msra.mxu0 0.0
    %1420 = vmatpush.msra.mxu0 0.0
    %1421 = vmatpush.msra.mxu0 0.0
    %1422 = vmatpush.msra.mxu0 0.0
    %1423 = vmatpush.msra.mxu0 0.0
    %1424 = vmatpush.msra.mxu0 %v1342
    %1425 = vmatpush.msra.mxu0 %v1341
    %1426 = vmatpush.msra.mxu0 %v1340
    %1427 = vmatpush.msra.mxu0 %v1339
    %1428 = vmatmul.f32.gmra.mxu0 %v1401
    %v1429 = vpop.f32.mrf.mxu0
    %v1430 = vadd.f32 %v1389, %v1429
    %1431 = vmatmul.f32.gmra.mxu0 %v1404
    %v1432 = vpop.f32.mrf.mxu0
    %v1433 = vadd.f32 %v1392, %v1432
    %1434 = vmatmul.f32.gmra.mxu0 %v1407
    %v1435 = vpop.f32.mrf.mxu0
    %v1436 = vadd.f32 %v1395, %v1435
    %1437 = vmatmul.f32.gmra.mxu0 %v1410
    %v1438 = vpop.f32.mrf.mxu0
    %v1439 = vadd.f32 %v1398, %v1438
    %1440 = vdwg.mxu0
    %v1441 = vld [vmem:[%s1 + $0x3c0] sm:$0xff]
    %v1442 = vld [vmem:[%s1 + $0x3c8] sm:$0xff]
    %v1443 = vld [vmem:[%s1 + $0x3d0] sm:$0xff]
    %v1444 = vld [vmem:[%s1 + $0x3d8] sm:$0xff]
    %v1446 = vsel %vm32, %v1323, 0
    %v1449 = vsel %vm32, %v1324, 0
    %v1452 = vsel %vm32, %v1325, 0
    %v1455 = vsel %vm32, %v1326, 0
    %1457 = vmatpush.msra.mxu0 0.0
    %1458 = vmatpush.msra.mxu0 0.0
    %1459 = vmatpush.msra.mxu0 0.0
    %1460 = vmatpush.msra.mxu0 0.0
    %1461 = vmatpush.msra.mxu0 0.0
    %1462 = vmatpush.msra.mxu0 0.0
    %1463 = vmatpush.msra.mxu0 0.0
    %1464 = vmatpush.msra.mxu0 0.0
    %1465 = vmatpush.msra.mxu0 0.0
    %1466 = vmatpush.msra.mxu0 0.0
    %1467 = vmatpush.msra.mxu0 0.0
    %1468 = vmatpush.msra.mxu0 0.0
    %1469 = vmatpush.msra.mxu0 %v1444
    %1470 = vmatpush.msra.mxu0 %v1443
    %1471 = vmatpush.msra.mxu0 %v1442
    %1472 = vmatpush.msra.mxu0 %v1441
    %1473 = vmatmul.f32.gmra.mxu0 %v1446
    %v1474 = vpop.f32.mrf.mxu0
    %v1475 = vadd.f32 0.0, %v1474
    %1476 = vmatmul.f32.gmra.mxu0 %v1449
    %v1477 = vpop.f32.mrf.mxu0
    %v1478 = vadd.f32 0.0, %v1477
    %1479 = vmatmul.f32.gmra.mxu0 %v1452
    %v1480 = vpop.f32.mrf.mxu0
    %v1481 = vadd.f32 0.0, %v1480
    %1482 = vmatmul.f32.gmra.mxu0 %v1455
    %v1483 = vpop.f32.mrf.mxu0
    %v1484 = vadd.f32 0.0, %v1483
    %1485 = vdwg.mxu0
    %v1486 = vadd.f32 %v1430, %v1475
    %v1487 = vadd.f32 %v1433, %v1478
    %v1488 = vadd.f32 %v1436, %v1481
    %v1489 = vadd.f32 %v1439, %v1484
    %v1490 = vld [vmem:[%s2 + $0xc] sm:$0x1]
    %v1491 = vperm.slane %v1490, 0
    %v1492 = vadd.f32 %v1486, %v1491
    %v1493 = vadd.f32 %v1487, %v1491
    %v1494 = vadd.f32 %v1488, %v1491
    %v1495 = vadd.f32 %v1489, %v1491
    %1496 = vxpose.xlu0.b32.start [1/16] %v1492, 128
    %1497 = vxpose.xlu0.b32.cont [2/16] %v1493, 128
    %1498 = vxpose.xlu0.b32.cont [3/16] %v1494, 128
    %1499 = vxpose.xlu0.b32.cont [4/16] %v1495, 128
    %1500 = vxpose.xlu0.b32.cont [5/16] 0.0, 128
    %1501 = vxpose.xlu0.b32.cont [6/16] 0.0, 128
    %1502 = vxpose.xlu0.b32.cont [7/16] 0.0, 128
    %1503 = vxpose.xlu0.b32.cont [8/16] 0.0, 128
    %1504 = vxpose.xlu0.b32.cont [9/16] 0.0, 128
    %1505 = vxpose.xlu0.b32.cont [10/16] 0.0, 128
    %1506 = vxpose.xlu0.b32.cont [11/16] 0.0, 128
    %1507 = vxpose.xlu0.b32.cont [12/16] 0.0, 128
    %1508 = vxpose.xlu0.b32.cont [13/16] 0.0, 128
    %1509 = vxpose.xlu0.b32.cont [14/16] 0.0, 128
    %1510 = vxpose.xlu0.b32.cont [15/16] 0.0, 128
    %1511 = vxpose.xlu0.b32.end [16/16] 0.0, 128
    %v1512 = vpop.trf.xlu0
    %v1513 = vpop.trf.xlu0
    %v1514 = vpop.trf.xlu0
    %v1515 = vpop.trf.xlu0
    %v1516 = vpop.trf.xlu0
    %v1517 = vpop.trf.xlu0
    %v1518 = vpop.trf.xlu0
    %v1519 = vpop.trf.xlu0
    %v1520 = vpop.trf.xlu0
    %v1521 = vpop.trf.xlu0
    %v1522 = vpop.trf.xlu0
    %v1523 = vpop.trf.xlu0
    %v1524 = vpop.trf.xlu0
    %v1525 = vpop.trf.xlu0
    %v1526 = vpop.trf.xlu0
    %v1527 = vpop.trf.xlu0
    %v1528 = vsel %vm32, %v1512, 0.0
    %1529 = vst [vmem:[#allocation2] sm:$0xff] %v1528
    %s1530 = scalar_lea.vmem %s0, 8
    %v1531 = vld [vmem:[%s1530] sm:$0xff]
    %v1532 = vrot.slane %v1531, 6
    %v1533 = vsel %vm19, 0.0, %v1532
    %v1534 = vld [vmem:[%s1] sm:$0xff]
    %v1535 = vld [vmem:[%s1 + $0x8] sm:$0xff]
    %v1536 = vld [vmem:[%s1 + $0x10] sm:$0xff]
    %v1537 = vld [vmem:[%s1 + $0x18] sm:$0xff]
    %v1538 = vrot.slane %v1531, 7
    %v1539 = vsel %vm26, 0.0, %v1538
    %v1540 = vld [vmem:[%s1 + $0x20] sm:$0xff]
    %v1541 = vld [vmem:[%s1 + $0x28] sm:$0xff]
    %v1542 = vld [vmem:[%s1 + $0x30] sm:$0xff]
    %v1543 = vld [vmem:[%s1 + $0x38] sm:$0xff]
    %v1545 = vsel %vm32, %v1539, 0
    %1547 = vmatpush.msra.mxu0 0.0
    %1548 = vmatpush.msra.mxu0 0.0
    %1549 = vmatpush.msra.mxu0 0.0
    %1550 = vmatpush.msra.mxu0 0.0
    %1551 = vmatpush.msra.mxu0 0.0
    %1552 = vmatpush.msra.mxu0 0.0
    %1553 = vmatpush.msra.mxu0 0.0
    %1554 = vmatpush.msra.mxu0 0.0
    %1555 = vmatpush.msra.mxu0 0.0
    %1556 = vmatpush.msra.mxu0 0.0
    %1557 = vmatpush.msra.mxu0 0.0
    %1558 = vmatpush.msra.mxu0 0.0
    %1559 = vmatpush.msra.mxu0 %v1543
    %1560 = vmatpush.msra.mxu0 %v1542
    %1561 = vmatpush.msra.mxu0 %v1541
    %1562 = vmatpush.msra.mxu0 %v1540
    %1563 = vmatmul.f32.gmra.mxu0 %v1545
    %v1564 = vpop.f32.mrf.mxu0
    %v1565 = vadd.f32 0.0, %v1564
    %1566 = vdwg.mxu0
    %v1568 = vsel %vm32, %v1533, 0
    %1570 = vmatpush.msra.mxu0 0.0
    %1571 = vmatpush.msra.mxu0 0.0
    %1572 = vmatpush.msra.mxu0 0.0
    %1573 = vmatpush.msra.mxu0 0.0
    %1574 = vmatpush.msra.mxu0 0.0
    %1575 = vmatpush.msra.mxu0 0.0
    %1576 = vmatpush.msra.mxu0 0.0
    %1577 = vmatpush.msra.mxu0 0.0
    %1578 = vmatpush.msra.mxu0 0.0
    %1579 = vmatpush.msra.mxu0 0.0
    %1580 = vmatpush.msra.mxu0 0.0
    %1581 = vmatpush.msra.mxu0 0.0
    %1582 = vmatpush.msra.mxu0 %v1537
    %1583 = vmatpush.msra.mxu0 %v1536
    %1584 = vmatpush.msra.mxu0 %v1535
    %1585 = vmatpush.msra.mxu0 %v1534
    %1586 = vmatmul.f32.gmra.mxu0 %v1568
    %v1587 = vpop.f32.mrf.mxu0
    %v1588 = vadd.f32 %v1565, %v1587
    %1589 = vdwg.mxu0
    %v1590 = vld [vmem:[%s1 + $0x40] sm:$0xff]
    %v1591 = vld [vmem:[%s1 + $0x48] sm:$0xff]
    %v1592 = vld [vmem:[%s1 + $0x50] sm:$0xff]
    %v1593 = vld [vmem:[%s1 + $0x58] sm:$0xff]
    %v1595 = vsel %vm32, %v1531, 0
    %1597 = vmatpush.msra.mxu0 0.0
    %1598 = vmatpush.msra.mxu0 0.0
    %1599 = vmatpush.msra.mxu0 0.0
    %1600 = vmatpush.msra.mxu0 0.0
    %1601 = vmatpush.msra.mxu0 0.0
    %1602 = vmatpush.msra.mxu0 0.0
    %1603 = vmatpush.msra.mxu0 0.0
    %1604 = vmatpush.msra.mxu0 0.0
    %1605 = vmatpush.msra.mxu0 0.0
    %1606 = vmatpush.msra.mxu0 0.0
    %1607 = vmatpush.msra.mxu0 0.0
    %1608 = vmatpush.msra.mxu0 0.0
    %1609 = vmatpush.msra.mxu0 %v1593
    %1610 = vmatpush.msra.mxu0 %v1592
    %1611 = vmatpush.msra.mxu0 %v1591
    %1612 = vmatpush.msra.mxu0 %v1590
    %1613 = vmatmul.f32.gmra.mxu0 %v1595
    %v1614 = vpop.f32.mrf.mxu0
    %v1615 = vadd.f32 0.0, %v1614
    %1616 = vdwg.mxu0
    %v1617 = vadd.f32 %v1588, %v1615
    %v1618 = vld [vmem:[%s2] sm:$0x1]
    %v1619 = vperm.slane %v1618, 0
    %v1620 = vadd.f32 %v1617, %v1619
    %v1621 = vmax.f32 %v1620, 0.0
    %v1622 = vmax.f32 %v1621, 0.0
    %v1623 = vrot.slane %v1622, 2
    %v1624 = vsel %vm113, 0.0, %v1623
    %v1625 = vld [vmem:[%s1 + $0x60] sm:$0xff]
    %v1626 = vld [vmem:[%s1 + $0x68] sm:$0xff]
    %v1627 = vld [vmem:[%s1 + $0x70] sm:$0xff]
    %v1628 = vld [vmem:[%s1 + $0x78] sm:$0xff]
    %v1629 = vrot.slane %v1622, 5
    %v1630 = vsel %vm120, 0.0, %v1629
    %v1631 = vld [vmem:[%s1 + $0x80] sm:$0xff]
    %v1632 = vld [vmem:[%s1 + $0x88] sm:$0xff]
    %v1633 = vld [vmem:[%s1 + $0x90] sm:$0xff]
    %v1634 = vld [vmem:[%s1 + $0x98] sm:$0xff]
    %v1636 = vsel %vm32, %v1630, 0
    %1638 = vmatpush.msra.mxu0 0.0
    %1639 = vmatpush.msra.mxu0 0.0
    %1640 = vmatpush.msra.mxu0 0.0
    %1641 = vmatpush.msra.mxu0 0.0
    %1642 = vmatpush.msra.mxu0 0.0
    %1643 = vmatpush.msra.mxu0 0.0
    %1644 = vmatpush.msra.mxu0 0.0
    %1645 = vmatpush.msra.mxu0 0.0
    %1646 = vmatpush.msra.mxu0 0.0
    %1647 = vmatpush.msra.mxu0 0.0
    %1648 = vmatpush.msra.mxu0 0.0
    %1649 = vmatpush.msra.mxu0 0.0
    %1650 = vmatpush.msra.mxu0 %v1634
    %1651 = vmatpush.msra.mxu0 %v1633
    %1652 = vmatpush.msra.mxu0 %v1632
    %1653 = vmatpush.msra.mxu0 %v1631
    %1654 = vmatmul.f32.gmra.mxu0 %v1636
    %v1655 = vpop.f32.mrf.mxu0
    %v1656 = vadd.f32 0.0, %v1655
    %1657 = vdwg.mxu0
    %v1659 = vsel %vm32, %v1624, 0
    %1661 = vmatpush.msra.mxu0 0.0
    %1662 = vmatpush.msra.mxu0 0.0
    %1663 = vmatpush.msra.mxu0 0.0
    %1664 = vmatpush.msra.mxu0 0.0
    %1665 = vmatpush.msra.mxu0 0.0
    %1666 = vmatpush.msra.mxu0 0.0
    %1667 = vmatpush.msra.mxu0 0.0
    %1668 = vmatpush.msra.mxu0 0.0
    %1669 = vmatpush.msra.mxu0 0.0
    %1670 = vmatpush.msra.mxu0 0.0
    %1671 = vmatpush.msra.mxu0 0.0
    %1672 = vmatpush.msra.mxu0 0.0
    %1673 = vmatpush.msra.mxu0 %v1628
    %1674 = vmatpush.msra.mxu0 %v1627
    %1675 = vmatpush.msra.mxu0 %v1626
    %1676 = vmatpush.msra.mxu0 %v1625
    %1677 = vmatmul.f32.gmra.mxu0 %v1659
    %v1678 = vpop.f32.mrf.mxu0
    %v1679 = vadd.f32 %v1656, %v1678
    %1680 = vdwg.mxu0
    %v1681 = vld [vmem:[%s1 + $0xa0] sm:$0xff]
    %v1682 = vld [vmem:[%s1 + $0xa8] sm:$0xff]
    %v1683 = vld [vmem:[%s1 + $0xb0] sm:$0xff]
    %v1684 = vld [vmem:[%s1 + $0xb8] sm:$0xff]
    %v1686 = vsel %vm32, %v1622, 0
    %1688 = vmatpush.msra.mxu0 0.0
    %1689 = vmatpush.msra.mxu0 0.0
    %1690 = vmatpush.msra.mxu0 0.0
    %1691 = vmatpush.msra.mxu0 0.0
    %1692 = vmatpush.msra.mxu0 0.0
    %1693 = vmatpush.msra.mxu0 0.0
    %1694 = vmatpush.msra.mxu0 0.0
    %1695 = vmatpush.msra.mxu0 0.0
    %1696 = vmatpush.msra.mxu0 0.0
    %1697 = vmatpush.msra.mxu0 0.0
    %1698 = vmatpush.msra.mxu0 0.0
    %1699 = vmatpush.msra.mxu0 0.0
    %1700 = vmatpush.msra.mxu0 %v1684
    %1701 = vmatpush.msra.mxu0 %v1683
    %1702 = vmatpush.msra.mxu0 %v1682
    %1703 = vmatpush.msra.mxu0 %v1681
    %1704 = vmatmul.f32.gmra.mxu0 %v1686
    %v1705 = vpop.f32.mrf.mxu0
    %v1706 = vadd.f32 0.0, %v1705
    %1707 = vdwg.mxu0
    %v1708 = vadd.f32 %v1679, %v1706
    %v1709 = vld [vmem:[%s2 + $0x1] sm:$0x1]
    %v1710 = vperm.slane %v1709, 0
    %v1711 = vadd.f32 %v1708, %v1710
    %v1712 = vmax.f32 %v1711, 0.0
    %v1713 = vld [vmem:[%s1 + $0xc0] sm:$0xff]
    %v1714 = vld [vmem:[%s1 + $0xc8] sm:$0xff]
    %v1715 = vld [vmem:[%s1 + $0xd0] sm:$0xff]
    %v1716 = vld [vmem:[%s1 + $0xd8] sm:$0xff]
    %v1717 = vld [vmem:[%s2 + $0x2] sm:$0x1]
    %v1718 = vperm.slane %v1717, 0
    %v1720 = vsel %vm32, %v1712, 0
    %1722 = vmatpush.msra.mxu0 0.0
    %1723 = vmatpush.msra.mxu0 0.0
    %1724 = vmatpush.msra.mxu0 0.0
    %1725 = vmatpush.msra.mxu0 0.0
    %1726 = vmatpush.msra.mxu0 0.0
    %1727 = vmatpush.msra.mxu0 0.0
    %1728 = vmatpush.msra.mxu0 0.0
    %1729 = vmatpush.msra.mxu0 0.0
    %1730 = vmatpush.msra.mxu0 0.0
    %1731 = vmatpush.msra.mxu0 0.0
    %1732 = vmatpush.msra.mxu0 0.0
    %1733 = vmatpush.msra.mxu0 0.0
    %1734 = vmatpush.msra.mxu0 %v1716
    %1735 = vmatpush.msra.mxu0 %v1715
    %1736 = vmatpush.msra.mxu0 %v1714
    %1737 = vmatpush.msra.mxu0 %v1713
    %1738 = vmatmul.f32.gmra.mxu0 %v1720
    %v1739 = vpop.f32.mrf.mxu0
    %v1740 = vadd.f32 %v1718, %v1739
    %1741 = vdwg.mxu0
    %v1742 = vadd.f32 %v1740, %v1621
    %v1743 = vmax.f32 %v1742, 0.0
    %v1744 = vrot.slane %v1743, 6
    %v1745 = vsel %vm19, 0.0, %v1744
    %v1746 = vld [vmem:[%s1 + $0xe0] sm:$0xff]
    %v1747 = vld [vmem:[%s1 + $0xe8] sm:$0xff]
    %v1748 = vld [vmem:[%s1 + $0xf0] sm:$0xff]
    %v1749 = vld [vmem:[%s1 + $0xf8] sm:$0xff]
    %v1750 = vrot.slane %v1743, 7
    %v1751 = vsel %vm26, 0.0, %v1750
    %v1752 = vld [vmem:[%s1 + $0x100] sm:$0xff]
    %v1753 = vld [vmem:[%s1 + $0x108] sm:$0xff]
    %v1754 = vld [vmem:[%s1 + $0x110] sm:$0xff]
    %v1755 = vld [vmem:[%s1 + $0x118] sm:$0xff]
    %v1757 = vsel %vm32, %v1751, 0
    %1759 = vmatpush.msra.mxu0 0.0
    %1760 = vmatpush.msra.mxu0 0.0
    %1761 = vmatpush.msra.mxu0 0.0
    %1762 = vmatpush.msra.mxu0 0.0
    %1763 = vmatpush.msra.mxu0 0.0
    %1764 = vmatpush.msra.mxu0 0.0
    %1765 = vmatpush.msra.mxu0 0.0
    %1766 = vmatpush.msra.mxu0 0.0
    %1767 = vmatpush.msra.mxu0 0.0
    %1768 = vmatpush.msra.mxu0 0.0
    %1769 = vmatpush.msra.mxu0 0.0
    %1770 = vmatpush.msra.mxu0 0.0
    %1771 = vmatpush.msra.mxu0 %v1755
    %1772 = vmatpush.msra.mxu0 %v1754
    %1773 = vmatpush.msra.mxu0 %v1753
    %1774 = vmatpush.msra.mxu0 %v1752
    %1775 = vmatmul.f32.gmra.mxu0 %v1757
    %v1776 = vpop.f32.mrf.mxu0
    %v1777 = vadd.f32 0.0, %v1776
    %1778 = vdwg.mxu0
    %v1780 = vsel %vm32, %v1745, 0
    %1782 = vmatpush.msra.mxu0 0.0
    %1783 = vmatpush.msra.mxu0 0.0
    %1784 = vmatpush.msra.mxu0 0.0
    %1785 = vmatpush.msra.mxu0 0.0
    %1786 = vmatpush.msra.mxu0 0.0
    %1787 = vmatpush.msra.mxu0 0.0
    %1788 = vmatpush.msra.mxu0 0.0
    %1789 = vmatpush.msra.mxu0 0.0
    %1790 = vmatpush.msra.mxu0 0.0
    %1791 = vmatpush.msra.mxu0 0.0
    %1792 = vmatpush.msra.mxu0 0.0
    %1793 = vmatpush.msra.mxu0 0.0
    %1794 = vmatpush.msra.mxu0 %v1749
    %1795 = vmatpush.msra.mxu0 %v1748
    %1796 = vmatpush.msra.mxu0 %v1747
    %1797 = vmatpush.msra.mxu0 %v1746
    %1798 = vmatmul.f32.gmra.mxu0 %v1780
    %v1799 = vpop.f32.mrf.mxu0
    %v1800 = vadd.f32 %v1777, %v1799
    %1801 = vdwg.mxu0
    %v1802 = vld [vmem:[%s1 + $0x120] sm:$0xff]
    %v1803 = vld [vmem:[%s1 + $0x128] sm:$0xff]
    %v1804 = vld [vmem:[%s1 + $0x130] sm:$0xff]
    %v1805 = vld [vmem:[%s1 + $0x138] sm:$0xff]
    %v1807 = vsel %vm32, %v1743, 0
    %1809 = vmatpush.msra.mxu0 0.0
    %1810 = vmatpush.msra.mxu0 0.0
    %1811 = vmatpush.msra.mxu0 0.0
    %1812 = vmatpush.msra.mxu0 0.0
    %1813 = vmatpush.msra.mxu0 0.0
    %1814 = vmatpush.msra.mxu0 0.0
    %1815 = vmatpush.msra.mxu0 0.0
    %1816 = vmatpush.msra.mxu0 0.0
    %1817 = vmatpush.msra.mxu0 0.0
    %1818 = vmatpush.msra.mxu0 0.0
    %1819 = vmatpush.msra.mxu0 0.0
    %1820 = vmatpush.msra.mxu0 0.0
    %1821 = vmatpush.msra.mxu0 %v1805
    %1822 = vmatpush.msra.mxu0 %v1804
    %1823 = vmatpush.msra.mxu0 %v1803
    %1824 = vmatpush.msra.mxu0 %v1802
    %1825 = vmatmul.f32.gmra.mxu0 %v1807
    %v1826 = vpop.f32.mrf.mxu0
    %v1827 = vadd.f32 0.0, %v1826
    %1828 = vdwg.mxu0
    %v1829 = vadd.f32 %v1800, %v1827
    %v1830 = vld [vmem:[%s2 + $0x3] sm:$0x1]
    %v1831 = vperm.slane %v1830, 0
    %v1832 = vadd.f32 %v1829, %v1831
    %v1833 = vmax.f32 %v1832, 0.0
    %v1834 = vld [vmem:[%s1 + $0x140] sm:$0xff]
    %v1835 = vld [vmem:[%s1 + $0x148] sm:$0xff]
    %v1836 = vld [vmem:[%s1 + $0x150] sm:$0xff]
    %v1837 = vld [vmem:[%s1 + $0x158] sm:$0xff]
    %v1838 = vld [vmem:[%s2 + $0x4] sm:$0x1]
    %v1839 = vperm.slane %v1838, 0
    %v1841 = vsel %vm32, %v1833, 0
    %1843 = vmatpush.msra.mxu0 0.0
    %1844 = vmatpush.msra.mxu0 0.0
    %1845 = vmatpush.msra.mxu0 0.0
    %1846 = vmatpush.msra.mxu0 0.0
    %1847 = vmatpush.msra.mxu0 0.0
    %1848 = vmatpush.msra.mxu0 0.0
    %1849 = vmatpush.msra.mxu0 0.0
    %1850 = vmatpush.msra.mxu0 0.0
    %1851 = vmatpush.msra.mxu0 0.0
    %1852 = vmatpush.msra.mxu0 0.0
    %1853 = vmatpush.msra.mxu0 0.0
    %1854 = vmatpush.msra.mxu0 0.0
    %1855 = vmatpush.msra.mxu0 %v1837
    %1856 = vmatpush.msra.mxu0 %v1836
    %1857 = vmatpush.msra.mxu0 %v1835
    %1858 = vmatpush.msra.mxu0 %v1834
    %1859 = vmatmul.f32.gmra.mxu0 %v1841
    %v1860 = vpop.f32.mrf.mxu0
    %v1861 = vadd.f32 %v1839, %v1860
    %1862 = vdwg.mxu0
    %v1863 = vadd.f32 %v1861, %v1742
    %v1865 = vrot.slane %v1863, 1
    %v1866 = vrot.slane %v1863, 2
    %v1867 = vrot.slane %v1863, 3
    %v1868 = vrot.slane %v1863, 4
    %v1869 = vrot.slane %v1863, 5
    %v1870 = vrot.slane %v1863, 6
    %v1871 = vrot.slane %v1863, 7
    %v1872 = vperm.slane %v1863, 0
    %v1873 = vperm.slane %v1865, 0
    %v1874 = vperm.slane %v1866, 0
    %v1875 = vperm.slane %v1867, 0
    %v1876 = vperm.slane %v1868, 0
    %v1877 = vperm.slane %v1869, 0
    %v1878 = vperm.slane %v1870, 0
    %v1879 = vperm.slane %v1871, 0
    %1880 = vst [vmem:[#allocation1] ss:$4 sm:$0xff] %v1872
    %s1881 = scalar_lea.vmem [#allocation1], 1
    %1882 = vst [vmem:[%s1881] ss:$4 sm:$0xff] %v1873
    %s1883 = scalar_lea.vmem [#allocation1], 2
    %1884 = vst [vmem:[%s1883] ss:$4 sm:$0xff] %v1874
    %s1885 = scalar_lea.vmem [#allocation1], 3
    %1886 = vst [vmem:[%s1885] ss:$4 sm:$0xff] %v1875
    %s1887 = scalar_lea.vmem [#allocation1], 32
    %1888 = vst [vmem:[%s1887] ss:$4 sm:$0xff] %v1876
    %s1889 = scalar_lea.vmem [#allocation1], 33
    %1890 = vst [vmem:[%s1889] ss:$4 sm:$0xff] %v1877
    %s1891 = scalar_lea.vmem [#allocation1], 34
    %1892 = vst [vmem:[%s1891] ss:$4 sm:$0xff] %v1878
    %s1893 = scalar_lea.vmem [#allocation1], 35
    %1894 = vst [vmem:[%s1893] ss:$4 sm:$0xff] %v1879
    %v1895 = vld.sshfl [vmem:[#allocation1] sm:$0xff pattern:$0x73625140]
    %v1896 = vld.sshfl [vmem:[#allocation1 + $0x20] sm:$0xff pattern:$0x73625140]
    %v1899 = vrot.slane %v1895, 6
    %v1900 = vrot.slane %v1896, 6
    %v1901 = vsel %vm19, %v1899, %v1900
    %v1902 = vsel %vm19, %v1900, %v1899
    %v1903 = vsel %vm19, 0.0, %v1902
    %v1904 = vsel %vm395, 0.0, %v1901
    %v1905 = vld [vmem:[%s1 + $0x160] sm:$0xff]
    %v1906 = vld [vmem:[%s1 + $0x168] sm:$0xff]
    %v1907 = vld [vmem:[%s1 + $0x170] sm:$0xff]
    %v1908 = vld [vmem:[%s1 + $0x178] sm:$0xff]
    %1909 = vst [vmem:[#allocation1] ss:$4 sm:$0xff] %v1872
    %s1910 = scalar_lea.vmem [#allocation1], 1
    %1911 = vst [vmem:[%s1910] ss:$4 sm:$0xff] %v1873
    %s1912 = scalar_lea.vmem [#allocation1], 2
    %1913 = vst [vmem:[%s1912] ss:$4 sm:$0xff] %v1874
    %s1914 = scalar_lea.vmem [#allocation1], 3
    %1915 = vst [vmem:[%s1914] ss:$4 sm:$0xff] %v1875
    %s1916 = scalar_lea.vmem [#allocation1], 32
    %1917 = vst [vmem:[%s1916] ss:$4 sm:$0xff] %v1876
    %s1918 = scalar_lea.vmem [#allocation1], 33
    %1919 = vst [vmem:[%s1918] ss:$4 sm:$0xff] %v1877
    %s1920 = scalar_lea.vmem [#allocation1], 34
    %1921 = vst [vmem:[%s1920] ss:$4 sm:$0xff] %v1878
    %s1922 = scalar_lea.vmem [#allocation1], 35
    %1923 = vst [vmem:[%s1922] ss:$4 sm:$0xff] %v1879
    %v1924 = vld.sshfl [vmem:[#allocation1] sm:$0xff pattern:$0x73625140]
    %v1925 = vld.sshfl [vmem:[#allocation1 + $0x20] sm:$0xff pattern:$0x73625140]
    %v1928 = vrot.slane %v1924, 7
    %v1929 = vrot.slane %v1925, 7
    %v1930 = vsel %vm26, %v1928, %v1929
    %v1931 = vsel %vm26, %v1929, %v1928
    %v1932 = vsel %vm26, 0.0, %v1931
    %v1933 = vsel %vm425, 0.0, %v1930
    %v1934 = vld [vmem:[%s1 + $0x180] sm:$0xff]
    %v1935 = vld [vmem:[%s1 + $0x188] sm:$0xff]
    %v1936 = vld [vmem:[%s1 + $0x190] sm:$0xff]
    %v1937 = vld [vmem:[%s1 + $0x198] sm:$0xff]
    %v1939 = vsel %vm32, %v1932, 0
    %v1942 = vsel %vm32, %v1933, 0
    %1944 = vmatpush.msra.mxu0 0.0
    %1945 = vmatpush.msra.mxu0 0.0
    %1946 = vmatpush.msra.mxu0 0.0
    %1947 = vmatpush.msra.mxu0 0.0
    %1948 = vmatpush.msra.mxu0 0.0
    %1949 = vmatpush.msra.mxu0 0.0
    %1950 = vmatpush.msra.mxu0 0.0
    %1951 = vmatpush.msra.mxu0 0.0
    %1952 = vmatpush.msra.mxu0 0.0
    %1953 = vmatpush.msra.mxu0 0.0
    %1954 = vmatpush.msra.mxu0 0.0
    %1955 = vmatpush.msra.mxu0 0.0
    %1956 = vmatpush.msra.mxu0 %v1937
    %1957 = vmatpush.msra.mxu0 %v1936
    %1958 = vmatpush.msra.mxu0 %v1935
    %1959 = vmatpush.msra.mxu0 %v1934
    %1960 = vmatmul.f32.gmra.mxu0 %v1939
    %v1961 = vpop.f32.mrf.mxu0
    %v1962 = vadd.f32 0.0, %v1961
    %1963 = vmatmul.f32.gmra.mxu0 %v1942
    %v1964 = vpop.f32.mrf.mxu0
    %v1965 = vadd.f32 0.0, %v1964
    %1966 = vdwg.mxu0
    %v1968 = vsel %vm32, %v1903, 0
    %v1971 = vsel %vm32, %v1904, 0
    %1973 = vmatpush.msra.mxu0 0.0
    %1974 = vmatpush.msra.mxu0 0.0
    %1975 = vmatpush.msra.mxu0 0.0
    %1976 = vmatpush.msra.mxu0 0.0
    %1977 = vmatpush.msra.mxu0 0.0
    %1978 = vmatpush.msra.mxu0 0.0
    %1979 = vmatpush.msra.mxu0 0.0
    %1980 = vmatpush.msra.mxu0 0.0
    %1981 = vmatpush.msra.mxu0 0.0
    %1982 = vmatpush.msra.mxu0 0.0
    %1983 = vmatpush.msra.mxu0 0.0
    %1984 = vmatpush.msra.mxu0 0.0
    %1985 = vmatpush.msra.mxu0 %v1908
    %1986 = vmatpush.msra.mxu0 %v1907
    %1987 = vmatpush.msra.mxu0 %v1906
    %1988 = vmatpush.msra.mxu0 %v1905
    %1989 = vmatmul.f32.gmra.mxu0 %v1968
    %v1990 = vpop.f32.mrf.mxu0
    %v1991 = vadd.f32 %v1962, %v1990
    %1992 = vmatmul.f32.gmra.mxu0 %v1971
    %v1993 = vpop.f32.mrf.mxu0
    %v1994 = vadd.f32 %v1965, %v1993
    %1995 = vdwg.mxu0
    %v1996 = vld [vmem:[%s1 + $0x1a0] sm:$0xff]
    %v1997 = vld [vmem:[%s1 + $0x1a8] sm:$0xff]
    %v1998 = vld [vmem:[%s1 + $0x1b0] sm:$0xff]
    %v1999 = vld [vmem:[%s1 + $0x1b8] sm:$0xff]
    %2000 = vst [vmem:[#allocation1] ss:$4 sm:$0xff] %v1872
    %s2001 = scalar_lea.vmem [#allocation1], 1
    %2002 = vst [vmem:[%s2001] ss:$4 sm:$0xff] %v1873
    %s2003 = scalar_lea.vmem [#allocation1], 2
    %2004 = vst [vmem:[%s2003] ss:$4 sm:$0xff] %v1874
    %s2005 = scalar_lea.vmem [#allocation1], 3
    %2006 = vst [vmem:[%s2005] ss:$4 sm:$0xff] %v1875
    %s2007 = scalar_lea.vmem [#allocation1], 32
    %2008 = vst [vmem:[%s2007] ss:$4 sm:$0xff] %v1876
    %s2009 = scalar_lea.vmem [#allocation1], 33
    %2010 = vst [vmem:[%s2009] ss:$4 sm:$0xff] %v1877
    %s2011 = scalar_lea.vmem [#allocation1], 34
    %2012 = vst [vmem:[%s2011] ss:$4 sm:$0xff] %v1878
    %s2013 = scalar_lea.vmem [#allocation1], 35
    %2014 = vst [vmem:[%s2013] ss:$4 sm:$0xff] %v1879
    %v2015 = vld.sshfl [vmem:[#allocation1] sm:$0xff pattern:$0x73625140]
    %v2016 = vld.sshfl [vmem:[#allocation1 + $0x20] sm:$0xff pattern:$0x73625140]
    %v2017 = vsel %vm32, %v2015, 0
    %v2019 = vsel %vm32, %v2016, 0
    %2021 = vmatpush.msra.mxu0 0.0
    %2022 = vmatpush.msra.mxu0 0.0
    %2023 = vmatpush.msra.mxu0 0.0
    %2024 = vmatpush.msra.mxu0 0.0
    %2025 = vmatpush.msra.mxu0 0.0
    %2026 = vmatpush.msra.mxu0 0.0
    %2027 = vmatpush.msra.mxu0 0.0
    %2028 = vmatpush.msra.mxu0 0.0
    %2029 = vmatpush.msra.mxu0 0.0
    %2030 = vmatpush.msra.mxu0 0.0
    %2031 = vmatpush.msra.mxu0 0.0
    %2032 = vmatpush.msra.mxu0 0.0
    %2033 = vmatpush.msra.mxu0 %v1999
    %2034 = vmatpush.msra.mxu0 %v1998
    %2035 = vmatpush.msra.mxu0 %v1997
    %2036 = vmatpush.msra.mxu0 %v1996
    %2037 = vmatmul.f32.gmra.mxu0 %v2017
    %v2038 = vpop.f32.mrf.mxu0
    %v2039 = vadd.f32 0.0, %v2038
    %2040 = vmatmul.f32.gmra.mxu0 %v2019
    %v2041 = vpop.f32.mrf.mxu0
    %v2042 = vadd.f32 0.0, %v2041
    %2043 = vdwg.mxu0
    %v2044 = vadd.f32 %v1991, %v2039
    %v2045 = vadd.f32 %v1994, %v2042
    %v2046 = vld [vmem:[%s2 + $0x5] sm:$0x1]
    %v2047 = vperm.slane %v2046, 0
    %v2048 = vadd.f32 %v2044, %v2047
    %v2049 = vadd.f32 %v2045, %v2047
    %v2050 = vmax.f32 %v2048, 0.0
    %v2051 = vmax.f32 %v2049, 0.0
    %v2052 = vrot.slane %v2050, 2
    %v2053 = vrot.slane %v2051, 2
    %v2054 = vsel %vm113, %v2052, %v2053
    %v2055 = vsel %vm113, %v2053, %v2052
    %v2056 = vsel %vm113, 0.0, %v2055
    %v2057 = vsel %vm550, 0.0, %v2054
    %v2058 = vld [vmem:[%s1 + $0x1c0] sm:$0xff]
    %v2059 = vld [vmem:[%s1 + $0x1c8] sm:$0xff]
    %v2060 = vld [vmem:[%s1 + $0x1d0] sm:$0xff]
    %v2061 = vld [vmem:[%s1 + $0x1d8] sm:$0xff]
    %v2062 = vrot.slane %v2050, 5
    %v2063 = vrot.slane %v2051, 5
    %v2064 = vsel %vm120, %v2062, %v2063
    %v2065 = vsel %vm120, %v2063, %v2062
    %v2066 = vsel %vm120, 0.0, %v2065
    %v2067 = vsel %vm561, 0.0, %v2064
    %v2068 = vld [vmem:[%s1 + $0x1e0] sm:$0xff]
    %v2069 = vld [vmem:[%s1 + $0x1e8] sm:$0xff]
    %v2070 = vld [vmem:[%s1 + $0x1f0] sm:$0xff]
    %v2071 = vld [vmem:[%s1 + $0x1f8] sm:$0xff]
    %v2073 = vsel %vm32, %v2066, 0
    %v2076 = vsel %vm32, %v2067, 0
    %2078 = vmatpush.msra.mxu0 0.0
    %2079 = vmatpush.msra.mxu0 0.0
    %2080 = vmatpush.msra.mxu0 0.0
    %2081 = vmatpush.msra.mxu0 0.0
    %2082 = vmatpush.msra.mxu0 0.0
    %2083 = vmatpush.msra.mxu0 0.0
    %2084 = vmatpush.msra.mxu0 0.0
    %2085 = vmatpush.msra.mxu0 0.0
    %2086 = vmatpush.msra.mxu0 0.0
    %2087 = vmatpush.msra.mxu0 0.0
    %2088 = vmatpush.msra.mxu0 0.0
    %2089 = vmatpush.msra.mxu0 0.0
    %2090 = vmatpush.msra.mxu0 %v2071
    %2091 = vmatpush.msra.mxu0 %v2070
    %2092 = vmatpush.msra.mxu0 %v2069
    %2093 = vmatpush.msra.mxu0 %v2068
    %2094 = vmatmul.f32.gmra.mxu0 %v2073
    %v2095 = vpop.f32.mrf.mxu0
    %v2096 = vadd.f32 0.0, %v2095
    %2097 = vmatmul.f32.gmra.mxu0 %v2076
    %v2098 = vpop.f32.mrf.mxu0
    %v2099 = vadd.f32 0.0, %v2098
    %2100 = vdwg.mxu0
    %v2102 = vsel %vm32, %v2056, 0
    %v2105 = vsel %vm32, %v2057, 0
    %2107 = vmatpush.msra.mxu0 0.0
    %2108 = vmatpush.msra.mxu0 0.0
    %2109 = vmatpush.msra.mxu0 0.0
    %2110 = vmatpush.msra.mxu0 0.0
    %2111 = vmatpush.msra.mxu0 0.0
    %2112 = vmatpush.msra.mxu0 0.0
    %2113 = vmatpush.msra.mxu0 0.0
    %2114 = vmatpush.msra.mxu0 0.0
    %2115 = vmatpush.msra.mxu0 0.0
    %2116 = vmatpush.msra.mxu0 0.0
    %2117 = vmatpush.msra.mxu0 0.0
    %2118 = vmatpush.msra.mxu0 0.0
    %2119 = vmatpush.msra.mxu0 %v2061
    %2120 = vmatpush.msra.mxu0 %v2060
    %2121 = vmatpush.msra.mxu0 %v2059
    %2122 = vmatpush.msra.mxu0 %v2058
    %2123 = vmatmul.f32.gmra.mxu0 %v2102
    %v2124 = vpop.f32.mrf.mxu0
    %v2125 = vadd.f32 %v2096, %v2124
    %2126 = vmatmul.f32.gmra.mxu0 %v2105
    %v2127 = vpop.f32.mrf.mxu0
    %v2128 = vadd.f32 %v2099, %v2127
    %2129 = vdwg.mxu0
    %v2130 = vld [vmem:[%s1 + $0x200] sm:$0xff]
    %v2131 = vld [vmem:[%s1 + $0x208] sm:$0xff]
    %v2132 = vld [vmem:[%s1 + $0x210] sm:$0xff]
    %v2133 = vld [vmem:[%s1 + $0x218] sm:$0xff]
    %v2135 = vsel %vm32, %v2050, 0
    %v2138 = vsel %vm32, %v2051, 0
    %2140 = vmatpush.msra.mxu0 0.0
    %2141 = vmatpush.msra.mxu0 0.0
    %2142 = vmatpush.msra.mxu0 0.0
    %2143 = vmatpush.msra.mxu0 0.0
    %2144 = vmatpush.msra.mxu0 0.0
    %2145 = vmatpush.msra.mxu0 0.0
    %2146 = vmatpush.msra.mxu0 0.0
    %2147 = vmatpush.msra.mxu0 0.0
    %2148 = vmatpush.msra.mxu0 0.0
    %2149 = vmatpush.msra.mxu0 0.0
    %2150 = vmatpush.msra.mxu0 0.0
    %2151 = vmatpush.msra.mxu0 0.0
    %2152 = vmatpush.msra.mxu0 %v2133
    %2153 = vmatpush.msra.mxu0 %v2132
    %2154 = vmatpush.msra.mxu0 %v2131
    %2155 = vmatpush.msra.mxu0 %v2130
    %2156 = vmatmul.f32.gmra.mxu0 %v2135
    %v2157 = vpop.f32.mrf.mxu0
    %v2158 = vadd.f32 0.0, %v2157
    %2159 = vmatmul.f32.gmra.mxu0 %v2138
    %v2160 = vpop.f32.mrf.mxu0
    %v2161 = vadd.f32 0.0, %v2160
    %2162 = vdwg.mxu0
    %v2163 = vadd.f32 %v2125, %v2158
    %v2164 = vadd.f32 %v2128, %v2161
    %v2165 = vld [vmem:[%s2 + $0x6] sm:$0x1]
    %v2166 = vperm.slane %v2165, 0
    %v2167 = vadd.f32 %v2163, %v2166
    %v2168 = vadd.f32 %v2164, %v2166
    %v2169 = vmax.f32 %v2167, 0.0
    %v2170 = vmax.f32 %v2168, 0.0
    %v2171 = vld [vmem:[%s1 + $0x220] sm:$0xff]
    %v2172 = vld [vmem:[%s1 + $0x228] sm:$0xff]
    %v2173 = vld [vmem:[%s1 + $0x230] sm:$0xff]
    %v2174 = vld [vmem:[%s1 + $0x238] sm:$0xff]
    %v2175 = vld [vmem:[%s2 + $0x7] sm:$0x1]
    %v2176 = vperm.slane %v2175, 0
    %v2178 = vsel %vm32, %v2169, 0
    %v2181 = vsel %vm32, %v2170, 0
    %2183 = vmatpush.msra.mxu0 0.0
    %2184 = vmatpush.msra.mxu0 0.0
    %2185 = vmatpush.msra.mxu0 0.0
    %2186 = vmatpush.msra.mxu0 0.0
    %2187 = vmatpush.msra.mxu0 0.0
    %2188 = vmatpush.msra.mxu0 0.0
    %2189 = vmatpush.msra.mxu0 0.0
    %2190 = vmatpush.msra.mxu0 0.0
    %2191 = vmatpush.msra.mxu0 0.0
    %2192 = vmatpush.msra.mxu0 0.0
    %2193 = vmatpush.msra.mxu0 0.0
    %2194 = vmatpush.msra.mxu0 0.0
    %2195 = vmatpush.msra.mxu0 %v2174
    %2196 = vmatpush.msra.mxu0 %v2173
    %2197 = vmatpush.msra.mxu0 %v2172
    %2198 = vmatpush.msra.mxu0 %v2171
    %2199 = vmatmul.f32.gmra.mxu0 %v2178
    %v2200 = vpop.f32.mrf.mxu0
    %v2201 = vadd.f32 %v2176, %v2200
    %2202 = vmatmul.f32.gmra.mxu0 %v2181
    %v2203 = vpop.f32.mrf.mxu0
    %v2204 = vadd.f32 %v2176, %v2203
    %2205 = vdwg.mxu0
    %v2206 = vadd.f32 %v2201, %v2048
    %v2207 = vadd.f32 %v2204, %v2049
    %v2208 = vmax.f32 %v2206, 0.0
    %v2209 = vmax.f32 %v2207, 0.0
    %v2210 = vrot.slane %v2208, 6
    %v2211 = vrot.slane %v2209, 6
    %v2212 = vsel %vm19, %v2210, %v2211
    %v2213 = vsel %vm19, %v2211, %v2210
    %v2214 = vsel %vm19, 0.0, %v2213
    %v2215 = vsel %vm395, 0.0, %v2212
    %v2216 = vld [vmem:[%s1 + $0x240] sm:$0xff]
    %v2217 = vld [vmem:[%s1 + $0x248] sm:$0xff]
    %v2218 = vld [vmem:[%s1 + $0x250] sm:$0xff]
    %v2219 = vld [vmem:[%s1 + $0x258] sm:$0xff]
    %v2220 = vrot.slane %v2208, 7
    %v2221 = vrot.slane %v2209, 7
    %v2222 = vsel %vm26, %v2220, %v2221
    %v2223 = vsel %vm26, %v2221, %v2220
    %v2224 = vsel %vm26, 0.0, %v2223
    %v2225 = vsel %vm425, 0.0, %v2222
    %v2226 = vld [vmem:[%s1 + $0x260] sm:$0xff]
    %v2227 = vld [vmem:[%s1 + $0x268] sm:$0xff]
    %v2228 = vld [vmem:[%s1 + $0x270] sm:$0xff]
    %v2229 = vld [vmem:[%s1 + $0x278] sm:$0xff]
    %v2231 = vsel %vm32, %v2224, 0
    %v2234 = vsel %vm32, %v2225, 0
    %2236 = vmatpush.msra.mxu0 0.0
    %2237 = vmatpush.msra.mxu0 0.0
    %2238 = vmatpush.msra.mxu0 0.0
    %2239 = vmatpush.msra.mxu0 0.0
    %2240 = vmatpush.msra.mxu0 0.0
    %2241 = vmatpush.msra.mxu0 0.0
    %2242 = vmatpush.msra.mxu0 0.0
    %2243 = vmatpush.msra.mxu0 0.0
    %2244 = vmatpush.msra.mxu0 0.0
    %2245 = vmatpush.msra.mxu0 0.0
    %2246 = vmatpush.msra.mxu0 0.0
    %2247 = vmatpush.msra.mxu0 0.0
    %2248 = vmatpush.msra.mxu0 %v2229
    %2249 = vmatpush.msra.mxu0 %v2228
    %2250 = vmatpush.msra.mxu0 %v2227
    %2251 = vmatpush.msra.mxu0 %v2226
    %2252 = vmatmul.f32.gmra.mxu0 %v2231
    %v2253 = vpop.f32.mrf.mxu0
    %v2254 = vadd.f32 0.0, %v2253
    %2255 = vmatmul.f32.gmra.mxu0 %v2234
    %v2256 = vpop.f32.mrf.mxu0
    %v2257 = vadd.f32 0.0, %v2256
    %2258 = vdwg.mxu0
    %v2260 = vsel %vm32, %v2214, 0
    %v2263 = vsel %vm32, %v2215, 0
    %2265 = vmatpush.msra.mxu0 0.0
    %2266 = vmatpush.msra.mxu0 0.0
    %2267 = vmatpush.msra.mxu0 0.0
    %2268 = vmatpush.msra.mxu0 0.0
    %2269 = vmatpush.msra.mxu0 0.0
    %2270 = vmatpush.msra.mxu0 0.0
    %2271 = vmatpush.msra.mxu0 0.0
    %2272 = vmatpush.msra.mxu0 0.0
    %2273 = vmatpush.msra.mxu0 0.0
    %2274 = vmatpush.msra.mxu0 0.0
    %2275 = vmatpush.msra.mxu0 0.0
    %2276 = vmatpush.msra.mxu0 0.0
    %2277 = vmatpush.msra.mxu0 %v2219
    %2278 = vmatpush.msra.mxu0 %v2218
    %2279 = vmatpush.msra.mxu0 %v2217
    %2280 = vmatpush.msra.mxu0 %v2216
    %2281 = vmatmul.f32.gmra.mxu0 %v2260
    %v2282 = vpop.f32.mrf.mxu0
    %v2283 = vadd.f32 %v2254, %v2282
    %2284 = vmatmul.f32.gmra.mxu0 %v2263
    %v2285 = vpop.f32.mrf.mxu0
    %v2286 = vadd.f32 %v2257, %v2285
    %2287 = vdwg.mxu0
    %v2288 = vld [vmem:[%s1 + $0x280] sm:$0xff]
    %v2289 = vld [vmem:[%s1 + $0x288] sm:$0xff]
    %v2290 = vld [vmem:[%s1 + $0x290] sm:$0xff]
    %v2291 = vld [vmem:[%s1 + $0x298] sm:$0xff]
    %v2293 = vsel %vm32, %v2208, 0
    %v2296 = vsel %vm32, %v2209, 0
    %2298 = vmatpush.msra.mxu0 0.0
    %2299 = vmatpush.msra.mxu0 0.0
    %2300 = vmatpush.msra.mxu0 0.0
    %2301 = vmatpush.msra.mxu0 0.0
    %2302 = vmatpush.msra.mxu0 0.0
    %2303 = vmatpush.msra.mxu0 0.0
    %2304 = vmatpush.msra.mxu0 0.0
    %2305 = vmatpush.msra.mxu0 0.0
    %2306 = vmatpush.msra.mxu0 0.0
    %2307 = vmatpush.msra.mxu0 0.0
    %2308 = vmatpush.msra.mxu0 0.0
    %2309 = vmatpush.msra.mxu0 0.0
    %2310 = vmatpush.msra.mxu0 %v2291
    %2311 = vmatpush.msra.mxu0 %v2290
    %2312 = vmatpush.msra.mxu0 %v2289
    %2313 = vmatpush.msra.mxu0 %v2288
    %2314 = vmatmul.f32.gmra.mxu0 %v2293
    %v2315 = vpop.f32.mrf.mxu0
    %v2316 = vadd.f32 0.0, %v2315
    %2317 = vmatmul.f32.gmra.mxu0 %v2296
    %v2318 = vpop.f32.mrf.mxu0
    %v2319 = vadd.f32 0.0, %v2318
    %2320 = vdwg.mxu0
    %v2321 = vadd.f32 %v2283, %v2316
    %v2322 = vadd.f32 %v2286, %v2319
    %v2323 = vld [vmem:[%s2 + $0x8] sm:$0x1]
    %v2324 = vperm.slane %v2323, 0
    %v2325 = vadd.f32 %v2321, %v2324
    %v2326 = vadd.f32 %v2322, %v2324
    %v2327 = vmax.f32 %v2325, 0.0
    %v2328 = vmax.f32 %v2326, 0.0
    %v2329 = vld [vmem:[%s1 + $0x2a0] sm:$0xff]
    %v2330 = vld [vmem:[%s1 + $0x2a8] sm:$0xff]
    %v2331 = vld [vmem:[%s1 + $0x2b0] sm:$0xff]
    %v2332 = vld [vmem:[%s1 + $0x2b8] sm:$0xff]
    %v2333 = vld [vmem:[%s2 + $0x9] sm:$0x1]
    %v2334 = vperm.slane %v2333, 0
    %v2336 = vsel %vm32, %v2327, 0
    %v2339 = vsel %vm32, %v2328, 0
    %2341 = vmatpush.msra.mxu0 0.0
    %2342 = vmatpush.msra.mxu0 0.0
    %2343 = vmatpush.msra.mxu0 0.0
    %2344 = vmatpush.msra.mxu0 0.0
    %2345 = vmatpush.msra.mxu0 0.0
    %2346 = vmatpush.msra.mxu0 0.0
    %2347 = vmatpush.msra.mxu0 0.0
    %2348 = vmatpush.msra.mxu0 0.0
    %2349 = vmatpush.msra.mxu0 0.0
    %2350 = vmatpush.msra.mxu0 0.0
    %2351 = vmatpush.msra.mxu0 0.0
    %2352 = vmatpush.msra.mxu0 0.0
    %2353 = vmatpush.msra.mxu0 %v2332
    %2354 = vmatpush.msra.mxu0 %v2331
    %2355 = vmatpush.msra.mxu0 %v2330
    %2356 = vmatpush.msra.mxu0 %v2329
    %2357 = vmatmul.f32.gmra.mxu0 %v2336
    %v2358 = vpop.f32.mrf.mxu0
    %v2359 = vadd.f32 %v2334, %v2358
    %2360 = vmatmul.f32.gmra.mxu0 %v2339
    %v2361 = vpop.f32.mrf.mxu0
    %v2362 = vadd.f32 %v2334, %v2361
    %2363 = vdwg.mxu0
    %v2364 = vadd.f32 %v2359, %v2206
    %v2365 = vadd.f32 %v2362, %v2207
    %v2368 = vrot.slane %v2364, 1
    %v2369 = vrot.slane %v2364, 2
    %v2370 = vrot.slane %v2364, 3
    %v2371 = vrot.slane %v2364, 4
    %v2372 = vrot.slane %v2364, 5
    %v2373 = vrot.slane %v2364, 6
    %v2374 = vrot.slane %v2364, 7
    %v2375 = vrot.slane %v2365, 1
    %v2376 = vrot.slane %v2365, 2
    %v2377 = vrot.slane %v2365, 3
    %v2378 = vrot.slane %v2365, 4
    %v2379 = vrot.slane %v2365, 5
    %v2380 = vrot.slane %v2365, 6
    %v2381 = vrot.slane %v2365, 7
    %v2382 = vperm.slane %v2364, 0
    %v2383 = vperm.slane %v2368, 0
    %v2384 = vperm.slane %v2369, 0
    %v2385 = vperm.slane %v2370, 0
    %v2386 = vperm.slane %v2371, 0
    %v2387 = vperm.slane %v2372, 0
    %v2388 = vperm.slane %v2373, 0
    %v2389 = vperm.slane %v2374, 0
    %v2390 = vperm.slane %v2365, 0
    %v2391 = vperm.slane %v2375, 0
    %v2392 = vperm.slane %v2376, 0
    %v2393 = vperm.slane %v2377, 0
    %v2394 = vperm.slane %v2378, 0
    %v2395 = vperm.slane %v2379, 0
    %v2396 = vperm.slane %v2380, 0
    %v2397 = vperm.slane %v2381, 0
    %2398 = vst [vmem:[#allocation1] ss:$4 sm:$0xff] %v2382
    %s2399 = scalar_lea.vmem [#allocation1], 1
    %2400 = vst [vmem:[%s2399] ss:$4 sm:$0xff] %v2383
    %s2401 = scalar_lea.vmem [#allocation1], 2
    %2402 = vst [vmem:[%s2401] ss:$4 sm:$0xff] %v2384
    %s2403 = scalar_lea.vmem [#allocation1], 3
    %2404 = vst [vmem:[%s2403] ss:$4 sm:$0xff] %v2385
    %s2405 = scalar_lea.vmem [#allocation1], 32
    %2406 = vst [vmem:[%s2405] ss:$4 sm:$0xff] %v2386
    %s2407 = scalar_lea.vmem [#allocation1], 33
    %2408 = vst [vmem:[%s2407] ss:$4 sm:$0xff] %v2387
    %s2409 = scalar_lea.vmem [#allocation1], 34
    %2410 = vst [vmem:[%s2409] ss:$4 sm:$0xff] %v2388
    %s2411 = scalar_lea.vmem [#allocation1], 35
    %2412 = vst [vmem:[%s2411] ss:$4 sm:$0xff] %v2389
    %v2413 = vld.sshfl [vmem:[#allocation1] sm:$0xff pattern:$0x73625140]
    %v2414 = vld.sshfl [vmem:[#allocation1 + $0x20] sm:$0xff pattern:$0x73625140]
    %2415 = vst [vmem:[#allocation1] ss:$4 sm:$0xff] %v2390
    %2416 = vst [vmem:[%s2399] ss:$4 sm:$0xff] %v2391
    %2417 = vst [vmem:[%s2401] ss:$4 sm:$0xff] %v2392
    %2418 = vst [vmem:[%s2403] ss:$4 sm:$0xff] %v2393
    %2419 = vst [vmem:[%s2405] ss:$4 sm:$0xff] %v2394
    %2420 = vst [vmem:[%s2407] ss:$4 sm:$0xff] %v2395
    %2421 = vst [vmem:[%s2409] ss:$4 sm:$0xff] %v2396
    %2422 = vst [vmem:[%s2411] ss:$4 sm:$0xff] %v2397
    %v2423 = vld.sshfl [vmem:[#allocation1] sm:$0xff pattern:$0x73625140]
    %v2424 = vld.sshfl [vmem:[#allocation1 + $0x20] sm:$0xff pattern:$0x73625140]
    %v2429 = vrot.slane %v2413, 6
    %v2430 = vrot.slane %v2414, 6
    %v2431 = vrot.slane %v2423, 6
    %v2432 = vrot.slane %v2424, 6
    %v2433 = vsel %vm19, %v2431, %v2432
    %v2434 = vsel %vm19, %v2430, %v2431
    %v2435 = vsel %vm19, %v2429, %v2430
    %v2436 = vsel %vm19, %v2432, %v2429
    %v2437 = vsel %vm19, 0.0, %v2436
    %v2438 = vsel %vm395, 0.0, %v2435
    %v2439 = vsel %vm935, 0.0, %v2434
    %v2440 = vsel %vm936, 0.0, %v2433
    %v2441 = vld [vmem:[%s1 + $0x2c0] sm:$0xff]
    %v2442 = vld [vmem:[%s1 + $0x2c8] sm:$0xff]
    %v2443 = vld [vmem:[%s1 + $0x2d0] sm:$0xff]
    %v2444 = vld [vmem:[%s1 + $0x2d8] sm:$0xff]
    %2445 = vst [vmem:[#allocation1] ss:$4 sm:$0xff] %v2382
    %s2446 = scalar_lea.vmem [#allocation1], 1
    %2447 = vst [vmem:[%s2446] ss:$4 sm:$0xff] %v2383
    %s2448 = scalar_lea.vmem [#allocation1], 2
    %2449 = vst [vmem:[%s2448] ss:$4 sm:$0xff] %v2384
    %s2450 = scalar_lea.vmem [#allocation1], 3
    %2451 = vst [vmem:[%s2450] ss:$4 sm:$0xff] %v2385
    %s2452 = scalar_lea.vmem [#allocation1], 32
    %2453 = vst [vmem:[%s2452] ss:$4 sm:$0xff] %v2386
    %s2454 = scalar_lea.vmem [#allocation1], 33
    %2455 = vst [vmem:[%s2454] ss:$4 sm:$0xff] %v2387
    %s2456 = scalar_lea.vmem [#allocation1], 34
    %2457 = vst [vmem:[%s2456] ss:$4 sm:$0xff] %v2388
    %s2458 = scalar_lea.vmem [#allocation1], 35
    %2459 = vst [vmem:[%s2458] ss:$4 sm:$0xff] %v2389
    %v2460 = vld.sshfl [vmem:[#allocation1] sm:$0xff pattern:$0x73625140]
    %v2461 = vld.sshfl [vmem:[#allocation1 + $0x20] sm:$0xff pattern:$0x73625140]
    %2462 = vst [vmem:[#allocation1] ss:$4 sm:$0xff] %v2390
    %2463 = vst [vmem:[%s2446] ss:$4 sm:$0xff] %v2391
    %2464 = vst [vmem:[%s2448] ss:$4 sm:$0xff] %v2392
    %2465 = vst [vmem:[%s2450] ss:$4 sm:$0xff] %v2393
    %2466 = vst [vmem:[%s2452] ss:$4 sm:$0xff] %v2394
    %2467 = vst [vmem:[%s2454] ss:$4 sm:$0xff] %v2395
    %2468 = vst [vmem:[%s2456] ss:$4 sm:$0xff] %v2396
    %2469 = vst [vmem:[%s2458] ss:$4 sm:$0xff] %v2397
    %v2470 = vld.sshfl [vmem:[#allocation1] sm:$0xff pattern:$0x73625140]
    %v2471 = vld.sshfl [vmem:[#allocation1 + $0x20] sm:$0xff pattern:$0x73625140]
    %v2476 = vrot.slane %v2460, 7
    %v2477 = vrot.slane %v2461, 7
    %v2478 = vrot.slane %v2470, 7
    %v2479 = vrot.slane %v2471, 7
    %v2480 = vsel %vm26, %v2478, %v2479
    %v2481 = vsel %vm26, %v2477, %v2478
    %v2482 = vsel %vm26, %v2476, %v2477
    %v2483 = vsel %vm26, %v2479, %v2476
    %v2484 = vsel %vm26, 0.0, %v2483
    %v2485 = vsel %vm425, 0.0, %v2482
    %v2486 = vsel %vm984, 0.0, %v2481
    %v2487 = vsel %vm985, 0.0, %v2480
    %v2488 = vld [vmem:[%s1 + $0x2e0] sm:$0xff]
    %v2489 = vld [vmem:[%s1 + $0x2e8] sm:$0xff]
    %v2490 = vld [vmem:[%s1 + $0x2f0] sm:$0xff]
    %v2491 = vld [vmem:[%s1 + $0x2f8] sm:$0xff]
    %v2493 = vsel %vm32, %v2484, 0
    %v2496 = vsel %vm32, %v2485, 0
    %v2499 = vsel %vm32, %v2486, 0
    %v2502 = vsel %vm32, %v2487, 0
    %2504 = vmatpush.msra.mxu0 0.0
    %2505 = vmatpush.msra.mxu0 0.0
    %2506 = vmatpush.msra.mxu0 0.0
    %2507 = vmatpush.msra.mxu0 0.0
    %2508 = vmatpush.msra.mxu0 0.0
    %2509 = vmatpush.msra.mxu0 0.0
    %2510 = vmatpush.msra.mxu0 0.0
    %2511 = vmatpush.msra.mxu0 0.0
    %2512 = vmatpush.msra.mxu0 0.0
    %2513 = vmatpush.msra.mxu0 0.0
    %2514 = vmatpush.msra.mxu0 0.0
    %2515 = vmatpush.msra.mxu0 0.0
    %2516 = vmatpush.msra.mxu0 %v2491
    %2517 = vmatpush.msra.mxu0 %v2490
    %2518 = vmatpush.msra.mxu0 %v2489
    %2519 = vmatpush.msra.mxu0 %v2488
    %2520 = vmatmul.f32.gmra.mxu0 %v2493
    %v2521 = vpop.f32.mrf.mxu0
    %v2522 = vadd.f32 0.0, %v2521
    %2523 = vmatmul.f32.gmra.mxu0 %v2496
    %v2524 = vpop.f32.mrf.mxu0
    %v2525 = vadd.f32 0.0, %v2524
    %2526 = vmatmul.f32.gmra.mxu0 %v2499
    %v2527 = vpop.f32.mrf.mxu0
    %v2528 = vadd.f32 0.0, %v2527
    %2529 = vmatmul.f32.gmra.mxu0 %v2502
    %v2530 = vpop.f32.mrf.mxu0
    %v2531 = vadd.f32 0.0, %v2530
    %2532 = vdwg.mxu0
    %v2534 = vsel %vm32, %v2437, 0
    %v2537 = vsel %vm32, %v2438, 0
    %v2540 = vsel %vm32, %v2439, 0
    %v2543 = vsel %vm32, %v2440, 0
    %2545 = vmatpush.msra.mxu0 0.0
    %2546 = vmatpush.msra.mxu0 0.0
    %2547 = vmatpush.msra.mxu0 0.0
    %2548 = vmatpush.msra.mxu0 0.0
    %2549 = vmatpush.msra.mxu0 0.0
    %2550 = vmatpush.msra.mxu0 0.0
    %2551 = vmatpush.msra.mxu0 0.0
    %2552 = vmatpush.msra.mxu0 0.0
    %2553 = vmatpush.msra.mxu0 0.0
    %2554 = vmatpush.msra.mxu0 0.0
    %2555 = vmatpush.msra.mxu0 0.0
    %2556 = vmatpush.msra.mxu0 0.0
    %2557 = vmatpush.msra.mxu0 %v2444
    %2558 = vmatpush.msra.mxu0 %v2443
    %2559 = vmatpush.msra.mxu0 %v2442
    %2560 = vmatpush.msra.mxu0 %v2441
    %2561 = vmatmul.f32.gmra.mxu0 %v2534
    %v2562 = vpop.f32.mrf.mxu0
    %v2563 = vadd.f32 %v2522, %v2562
    %2564 = vmatmul.f32.gmra.mxu0 %v2537
    %v2565 = vpop.f32.mrf.mxu0
    %v2566 = vadd.f32 %v2525, %v2565
    %2567 = vmatmul.f32.gmra.mxu0 %v2540
    %v2568 = vpop.f32.mrf.mxu0
    %v2569 = vadd.f32 %v2528, %v2568
    %2570 = vmatmul.f32.gmra.mxu0 %v2543
    %v2571 = vpop.f32.mrf.mxu0
    %v2572 = vadd.f32 %v2531, %v2571
    %2573 = vdwg.mxu0
    %v2574 = vld [vmem:[%s1 + $0x300] sm:$0xff]
    %v2575 = vld [vmem:[%s1 + $0x308] sm:$0xff]
    %v2576 = vld [vmem:[%s1 + $0x310] sm:$0xff]
    %v2577 = vld [vmem:[%s1 + $0x318] sm:$0xff]
    %2578 = vst [vmem:[#allocation1] ss:$4 sm:$0xff] %v2382
    %s2579 = scalar_lea.vmem [#allocation1], 1
    %2580 = vst [vmem:[%s2579] ss:$4 sm:$0xff] %v2383
    %s2581 = scalar_lea.vmem [#allocation1], 2
    %2582 = vst [vmem:[%s2581] ss:$4 sm:$0xff] %v2384
    %s2583 = scalar_lea.vmem [#allocation1], 3
    %2584 = vst [vmem:[%s2583] ss:$4 sm:$0xff] %v2385
    %s2585 = scalar_lea.vmem [#allocation1], 32
    %2586 = vst [vmem:[%s2585] ss:$4 sm:$0xff] %v2386
    %s2587 = scalar_lea.vmem [#allocation1], 33
    %2588 = vst [vmem:[%s2587] ss:$4 sm:$0xff] %v2387
    %s2589 = scalar_lea.vmem [#allocation1], 34
    %2590 = vst [vmem:[%s2589] ss:$4 sm:$0xff] %v2388
    %s2591 = scalar_lea.vmem [#allocation1], 35
    %2592 = vst [vmem:[%s2591] ss:$4 sm:$0xff] %v2389
    %v2593 = vld.sshfl [vmem:[#allocation1] sm:$0xff pattern:$0x73625140]
    %v2594 = vld.sshfl [vmem:[#allocation1 + $0x20] sm:$0xff pattern:$0x73625140]
    %2595 = vst [vmem:[#allocation1] ss:$4 sm:$0xff] %v2390
    %2596 = vst [vmem:[%s2579] ss:$4 sm:$0xff] %v2391
    %2597 = vst [vmem:[%s2581] ss:$4 sm:$0xff] %v2392
    %2598 = vst [vmem:[%s2583] ss:$4 sm:$0xff] %v2393
    %2599 = vst [vmem:[%s2585] ss:$4 sm:$0xff] %v2394
    %2600 = vst [vmem:[%s2587] ss:$4 sm:$0xff] %v2395
    %2601 = vst [vmem:[%s2589] ss:$4 sm:$0xff] %v2396
    %2602 = vst [vmem:[%s2591] ss:$4 sm:$0xff] %v2397
    %v2603 = vld.sshfl [vmem:[#allocation1] sm:$0xff pattern:$0x73625140]
    %v2604 = vld.sshfl [vmem:[#allocation1 + $0x20] sm:$0xff pattern:$0x73625140]
    %v2605 = vsel %vm32, %v2593, 0
    %v2607 = vsel %vm32, %v2594, 0
    %v2609 = vsel %vm32, %v2603, 0
    %v2611 = vsel %vm32, %v2604, 0
    %2613 = vmatpush.msra.mxu0 0.0
    %2614 = vmatpush.msra.mxu0 0.0
    %2615 = vmatpush.msra.mxu0 0.0
    %2616 = vmatpush.msra.mxu0 0.0
    %2617 = vmatpush.msra.mxu0 0.0
    %2618 = vmatpush.msra.mxu0 0.0
    %2619 = vmatpush.msra.mxu0 0.0
    %2620 = vmatpush.msra.mxu0 0.0
    %2621 = vmatpush.msra.mxu0 0.0
    %2622 = vmatpush.msra.mxu0 0.0
    %2623 = vmatpush.msra.mxu0 0.0
    %2624 = vmatpush.msra.mxu0 0.0
    %2625 = vmatpush.msra.mxu0 %v2577
    %2626 = vmatpush.msra.mxu0 %v2576
    %2627 = vmatpush.msra.mxu0 %v2575
    %2628 = vmatpush.msra.mxu0 %v2574
    %2629 = vmatmul.f32.gmra.mxu0 %v2605
    %v2630 = vpop.f32.mrf.mxu0
    %v2631 = vadd.f32 0.0, %v2630
    %2632 = vmatmul.f32.gmra.mxu0 %v2607
    %v2633 = vpop.f32.mrf.mxu0
    %v2634 = vadd.f32 0.0, %v2633
    %2635 = vmatmul.f32.gmra.mxu0 %v2609
    %v2636 = vpop.f32.mrf.mxu0
    %v2637 = vadd.f32 0.0, %v2636
    %2638 = vmatmul.f32.gmra.mxu0 %v2611
    %v2639 = vpop.f32.mrf.mxu0
    %v2640 = vadd.f32 0.0, %v2639
    %2641 = vdwg.mxu0
    %v2642 = vadd.f32 %v2563, %v2631
    %v2643 = vadd.f32 %v2566, %v2634
    %v2644 = vadd.f32 %v2569, %v2637
    %v2645 = vadd.f32 %v2572, %v2640
    %v2646 = vld [vmem:[%s2 + $0xa] sm:$0x1]
    %v2647 = vperm.slane %v2646, 0
    %v2648 = vadd.f32 %v2642, %v2647
    %v2649 = vadd.f32 %v2643, %v2647
    %v2650 = vadd.f32 %v2644, %v2647
    %v2651 = vadd.f32 %v2645, %v2647
    %v2652 = vrot.slane %v2648, 6
    %v2653 = vrot.slane %v2649, 6
    %v2654 = vrot.slane %v2650, 6
    %v2655 = vrot.slane %v2651, 6
    %v2656 = vsel %vm19, %v2654, %v2655
    %v2657 = vsel %vm19, %v2653, %v2654
    %v2658 = vsel %vm19, %v2652, %v2653
    %v2659 = vsel %vm19, %v2655, %v2652
    %v2660 = vsel %vm19, 0.0, %v2659
    %v2661 = vsel %vm395, 0.0, %v2658
    %v2662 = vsel %vm935, 0.0, %v2657
    %v2663 = vsel %vm936, 0.0, %v2656
    %v2664 = vld [vmem:[%s1 + $0x320] sm:$0xff]
    %v2665 = vld [vmem:[%s1 + $0x328] sm:$0xff]
    %v2666 = vld [vmem:[%s1 + $0x330] sm:$0xff]
    %v2667 = vld [vmem:[%s1 + $0x338] sm:$0xff]
    %v2668 = vrot.slane %v2648, 7
    %v2669 = vrot.slane %v2649, 7
    %v2670 = vrot.slane %v2650, 7
    %v2671 = vrot.slane %v2651, 7
    %v2672 = vsel %vm26, %v2670, %v2671
    %v2673 = vsel %vm26, %v2669, %v2670
    %v2674 = vsel %vm26, %v2668, %v2669
    %v2675 = vsel %vm26, %v2671, %v2668
    %v2676 = vsel %vm26, 0.0, %v2675
    %v2677 = vsel %vm425, 0.0, %v2674
    %v2678 = vsel %vm984, 0.0, %v2673
    %v2679 = vsel %vm985, 0.0, %v2672
    %v2680 = vld [vmem:[%s1 + $0x340] sm:$0xff]
    %v2681 = vld [vmem:[%s1 + $0x348] sm:$0xff]
    %v2682 = vld [vmem:[%s1 + $0x350] sm:$0xff]
    %v2683 = vld [vmem:[%s1 + $0x358] sm:$0xff]
    %v2685 = vsel %vm32, %v2676, 0
    %v2688 = vsel %vm32, %v2677, 0
    %v2691 = vsel %vm32, %v2678, 0
    %v2694 = vsel %vm32, %v2679, 0
    %2696 = vmatpush.msra.mxu0 0.0
    %2697 = vmatpush.msra.mxu0 0.0
    %2698 = vmatpush.msra.mxu0 0.0
    %2699 = vmatpush.msra.mxu0 0.0
    %2700 = vmatpush.msra.mxu0 0.0
    %2701 = vmatpush.msra.mxu0 0.0
    %2702 = vmatpush.msra.mxu0 0.0
    %2703 = vmatpush.msra.mxu0 0.0
    %2704 = vmatpush.msra.mxu0 0.0
    %2705 = vmatpush.msra.mxu0 0.0
    %2706 = vmatpush.msra.mxu0 0.0
    %2707 = vmatpush.msra.mxu0 0.0
    %2708 = vmatpush.msra.mxu0 %v2683
    %2709 = vmatpush.msra.mxu0 %v2682
    %2710 = vmatpush.msra.mxu0 %v2681
    %2711 = vmatpush.msra.mxu0 %v2680
    %2712 = vmatmul.f32.gmra.mxu0 %v2685
    %v2713 = vpop.f32.mrf.mxu0
    %v2714 = vadd.f32 0.0, %v2713
    %2715 = vmatmul.f32.gmra.mxu0 %v2688
    %v2716 = vpop.f32.mrf.mxu0
    %v2717 = vadd.f32 0.0, %v2716
    %2718 = vmatmul.f32.gmra.mxu0 %v2691
    %v2719 = vpop.f32.mrf.mxu0
    %v2720 = vadd.f32 0.0, %v2719
    %2721 = vmatmul.f32.gmra.mxu0 %v2694
    %v2722 = vpop.f32.mrf.mxu0
    %v2723 = vadd.f32 0.0, %v2722
    %2724 = vdwg.mxu0
    %v2726 = vsel %vm32, %v2660, 0
    %v2729 = vsel %vm32, %v2661, 0
    %v2732 = vsel %vm32, %v2662, 0
    %v2735 = vsel %vm32, %v2663, 0
    %2737 = vmatpush.msra.mxu0 0.0
    %2738 = vmatpush.msra.mxu0 0.0
    %2739 = vmatpush.msra.mxu0 0.0
    %2740 = vmatpush.msra.mxu0 0.0
    %2741 = vmatpush.msra.mxu0 0.0
    %2742 = vmatpush.msra.mxu0 0.0
    %2743 = vmatpush.msra.mxu0 0.0
    %2744 = vmatpush.msra.mxu0 0.0
    %2745 = vmatpush.msra.mxu0 0.0
    %2746 = vmatpush.msra.mxu0 0.0
    %2747 = vmatpush.msra.mxu0 0.0
    %2748 = vmatpush.msra.mxu0 0.0
    %2749 = vmatpush.msra.mxu0 %v2667
    %2750 = vmatpush.msra.mxu0 %v2666
    %2751 = vmatpush.msra.mxu0 %v2665
    %2752 = vmatpush.msra.mxu0 %v2664
    %2753 = vmatmul.f32.gmra.mxu0 %v2726
    %v2754 = vpop.f32.mrf.mxu0
    %v2755 = vadd.f32 %v2714, %v2754
    %2756 = vmatmul.f32.gmra.mxu0 %v2729
    %v2757 = vpop.f32.mrf.mxu0
    %v2758 = vadd.f32 %v2717, %v2757
    %2759 = vmatmul.f32.gmra.mxu0 %v2732
    %v2760 = vpop.f32.mrf.mxu0
    %v2761 = vadd.f32 %v2720, %v2760
    %2762 = vmatmul.f32.gmra.mxu0 %v2735
    %v2763 = vpop.f32.mrf.mxu0
    %v2764 = vadd.f32 %v2723, %v2763
    %2765 = vdwg.mxu0
    %v2766 = vld [vmem:[%s1 + $0x360] sm:$0xff]
    %v2767 = vld [vmem:[%s1 + $0x368] sm:$0xff]
    %v2768 = vld [vmem:[%s1 + $0x370] sm:$0xff]
    %v2769 = vld [vmem:[%s1 + $0x378] sm:$0xff]
    %v2771 = vsel %vm32, %v2648, 0
    %v2774 = vsel %vm32, %v2649, 0
    %v2777 = vsel %vm32, %v2650, 0
    %v2780 = vsel %vm32, %v2651, 0
    %2782 = vmatpush.msra.mxu0 0.0
    %2783 = vmatpush.msra.mxu0 0.0
    %2784 = vmatpush.msra.mxu0 0.0
    %2785 = vmatpush.msra.mxu0 0.0
    %2786 = vmatpush.msra.mxu0 0.0
    %2787 = vmatpush.msra.mxu0 0.0
    %2788 = vmatpush.msra.mxu0 0.0
    %2789 = vmatpush.msra.mxu0 0.0
    %2790 = vmatpush.msra.mxu0 0.0
    %2791 = vmatpush.msra.mxu0 0.0
    %2792 = vmatpush.msra.mxu0 0.0
    %2793 = vmatpush.msra.mxu0 0.0
    %2794 = vmatpush.msra.mxu0 %v2769
    %2795 = vmatpush.msra.mxu0 %v2768
    %2796 = vmatpush.msra.mxu0 %v2767
    %2797 = vmatpush.msra.mxu0 %v2766
    %2798 = vmatmul.f32.gmra.mxu0 %v2771
    %v2799 = vpop.f32.mrf.mxu0
    %v2800 = vadd.f32 0.0, %v2799
    %2801 = vmatmul.f32.gmra.mxu0 %v2774
    %v2802 = vpop.f32.mrf.mxu0
    %v2803 = vadd.f32 0.0, %v2802
    %2804 = vmatmul.f32.gmra.mxu0 %v2777
    %v2805 = vpop.f32.mrf.mxu0
    %v2806 = vadd.f32 0.0, %v2805
    %2807 = vmatmul.f32.gmra.mxu0 %v2780
    %v2808 = vpop.f32.mrf.mxu0
    %v2809 = vadd.f32 0.0, %v2808
    %2810 = vdwg.mxu0
    %v2811 = vadd.f32 %v2755, %v2800
    %v2812 = vadd.f32 %v2758, %v2803
    %v2813 = vadd.f32 %v2761, %v2806
    %v2814 = vadd.f32 %v2764, %v2809
    %v2815 = vld [vmem:[%s2 + $0xb] sm:$0x1]
    %v2816 = vperm.slane %v2815, 0
    %v2817 = vadd.f32 %v2811, %v2816
    %v2818 = vadd.f32 %v2812, %v2816
    %v2819 = vadd.f32 %v2813, %v2816
    %v2820 = vadd.f32 %v2814, %v2816
    %v2821 = vmax.f32 %v2817, 0.0
    %v2822 = vmax.f32 %v2818, 0.0
    %v2823 = vmax.f32 %v2819, 0.0
    %v2824 = vmax.f32 %v2820, 0.0
    %v2825 = vrot.slane %v2821, 6
    %v2826 = vrot.slane %v2822, 6
    %v2827 = vrot.slane %v2823, 6
    %v2828 = vrot.slane %v2824, 6
    %v2829 = vsel %vm19, %v2827, %v2828
    %v2830 = vsel %vm19, %v2826, %v2827
    %v2831 = vsel %vm19, %v2825, %v2826
    %v2832 = vsel %vm19, %v2828, %v2825
    %v2833 = vsel %vm19, 0.0, %v2832
    %v2834 = vsel %vm395, 0.0, %v2831
    %v2835 = vsel %vm935, 0.0, %v2830
    %v2836 = vsel %vm936, 0.0, %v2829
    %v2837 = vld [vmem:[%s1 + $0x380] sm:$0xff]
    %v2838 = vld [vmem:[%s1 + $0x388] sm:$0xff]
    %v2839 = vld [vmem:[%s1 + $0x390] sm:$0xff]
    %v2840 = vld [vmem:[%s1 + $0x398] sm:$0xff]
    %v2841 = vrot.slane %v2821, 7
    %v2842 = vrot.slane %v2822, 7
    %v2843 = vrot.slane %v2823, 7
    %v2844 = vrot.slane %v2824, 7
    %v2845 = vsel %vm26, %v2843, %v2844
    %v2846 = vsel %vm26, %v2842, %v2843
    %v2847 = vsel %vm26, %v2841, %v2842
    %v2848 = vsel %vm26, %v2844, %v2841
    %v2849 = vsel %vm26, 0.0, %v2848
    %v2850 = vsel %vm425, 0.0, %v2847
    %v2851 = vsel %vm984, 0.0, %v2846
    %v2852 = vsel %vm985, 0.0, %v2845
    %v2853 = vld [vmem:[%s1 + $0x3a0] sm:$0xff]
    %v2854 = vld [vmem:[%s1 + $0x3a8] sm:$0xff]
    %v2855 = vld [vmem:[%s1 + $0x3b0] sm:$0xff]
    %v2856 = vld [vmem:[%s1 + $0x3b8] sm:$0xff]
    %v2858 = vsel %vm32, %v2849, 0
    %v2861 = vsel %vm32, %v2850, 0
    %v2864 = vsel %vm32, %v2851, 0
    %v2867 = vsel %vm32, %v2852, 0
    %2869 = vmatpush.msra.mxu0 0.0
    %2870 = vmatpush.msra.mxu0 0.0
    %2871 = vmatpush.msra.mxu0 0.0
    %2872 = vmatpush.msra.mxu0 0.0
    %2873 = vmatpush.msra.mxu0 0.0
    %2874 = vmatpush.msra.mxu0 0.0
    %2875 = vmatpush.msra.mxu0 0.0
    %2876 = vmatpush.msra.mxu0 0.0
    %2877 = vmatpush.msra.mxu0 0.0
    %2878 = vmatpush.msra.mxu0 0.0
    %2879 = vmatpush.msra.mxu0 0.0
    %2880 = vmatpush.msra.mxu0 0.0
    %2881 = vmatpush.msra.mxu0 %v2856
    %2882 = vmatpush.msra.mxu0 %v2855
    %2883 = vmatpush.msra.mxu0 %v2854
    %2884 = vmatpush.msra.mxu0 %v2853
    %2885 = vmatmul.f32.gmra.mxu0 %v2858
    %v2886 = vpop.f32.mrf.mxu0
    %v2887 = vadd.f32 0.0, %v2886
    %2888 = vmatmul.f32.gmra.mxu0 %v2861
    %v2889 = vpop.f32.mrf.mxu0
    %v2890 = vadd.f32 0.0, %v2889
    %2891 = vmatmul.f32.gmra.mxu0 %v2864
    %v2892 = vpop.f32.mrf.mxu0
    %v2893 = vadd.f32 0.0, %v2892
    %2894 = vmatmul.f32.gmra.mxu0 %v2867
    %v2895 = vpop.f32.mrf.mxu0
    %v2896 = vadd.f32 0.0, %v2895
    %2897 = vdwg.mxu0
    %v2899 = vsel %vm32, %v2833, 0
    %v2902 = vsel %vm32, %v2834, 0
    %v2905 = vsel %vm32, %v2835, 0
    %v2908 = vsel %vm32, %v2836, 0
    %2910 = vmatpush.msra.mxu0 0.0
    %2911 = vmatpush.msra.mxu0 0.0
    %2912 = vmatpush.msra.mxu0 0.0
    %2913 = vmatpush.msra.mxu0 0.0
    %2914 = vmatpush.msra.mxu0 0.0
    %2915 = vmatpush.msra.mxu0 0.0
    %2916 = vmatpush.msra.mxu0 0.0
    %2917 = vmatpush.msra.mxu0 0.0
    %2918 = vmatpush.msra.mxu0 0.0
    %2919 = vmatpush.msra.mxu0 0.0
    %2920 = vmatpush.msra.mxu0 0.0
    %2921 = vmatpush.msra.mxu0 0.0
    %2922 = vmatpush.msra.mxu0 %v2840
    %2923 = vmatpush.msra.mxu0 %v2839
    %2924 = vmatpush.msra.mxu0 %v2838
    %2925 = vmatpush.msra.mxu0 %v2837
    %2926 = vmatmul.f32.gmra.mxu0 %v2899
    %v2927 = vpop.f32.mrf.mxu0
    %v2928 = vadd.f32 %v2887, %v2927
    %2929 = vmatmul.f32.gmra.mxu0 %v2902
    %v2930 = vpop.f32.mrf.mxu0
    %v2931 = vadd.f32 %v2890, %v2930
    %2932 = vmatmul.f32.gmra.mxu0 %v2905
    %v2933 = vpop.f32.mrf.mxu0
    %v2934 = vadd.f32 %v2893, %v2933
    %2935 = vmatmul.f32.gmra.mxu0 %v2908
    %v2936 = vpop.f32.mrf.mxu0
    %v2937 = vadd.f32 %v2896, %v2936
    %2938 = vdwg.mxu0
    %v2939 = vld [vmem:[%s1 + $0x3c0] sm:$0xff]
    %v2940 = vld [vmem:[%s1 + $0x3c8] sm:$0xff]
    %v2941 = vld [vmem:[%s1 + $0x3d0] sm:$0xff]
    %v2942 = vld [vmem:[%s1 + $0x3d8] sm:$0xff]
    %v2944 = vsel %vm32, %v2821, 0
    %v2947 = vsel %vm32, %v2822, 0
    %v2950 = vsel %vm32, %v2823, 0
    %v2953 = vsel %vm32, %v2824, 0
    %2955 = vmatpush.msra.mxu0 0.0
    %2956 = vmatpush.msra.mxu0 0.0
    %2957 = vmatpush.msra.mxu0 0.0
    %2958 = vmatpush.msra.mxu0 0.0
    %2959 = vmatpush.msra.mxu0 0.0
    %2960 = vmatpush.msra.mxu0 0.0
    %2961 = vmatpush.msra.mxu0 0.0
    %2962 = vmatpush.msra.mxu0 0.0
    %2963 = vmatpush.msra.mxu0 0.0
    %2964 = vmatpush.msra.mxu0 0.0
    %2965 = vmatpush.msra.mxu0 0.0
    %2966 = vmatpush.msra.mxu0 0.0
    %2967 = vmatpush.msra.mxu0 %v2942
    %2968 = vmatpush.msra.mxu0 %v2941
    %2969 = vmatpush.msra.mxu0 %v2940
    %2970 = vmatpush.msra.mxu0 %v2939
    %2971 = vmatmul.f32.gmra.mxu0 %v2944
    %v2972 = vpop.f32.mrf.mxu0
    %v2973 = vadd.f32 0.0, %v2972
    %2974 = vmatmul.f32.gmra.mxu0 %v2947
    %v2975 = vpop.f32.mrf.mxu0
    %v2976 = vadd.f32 0.0, %v2975
    %2977 = vmatmul.f32.gmra.mxu0 %v2950
    %v2978 = vpop.f32.mrf.mxu0
    %v2979 = vadd.f32 0.0, %v2978
    %2980 = vmatmul.f32.gmra.mxu0 %v2953
    %v2981 = vpop.f32.mrf.mxu0
    %v2982 = vadd.f32 0.0, %v2981
    %2983 = vdwg.mxu0
    %v2984 = vadd.f32 %v2928, %v2973
    %v2985 = vadd.f32 %v2931, %v2976
    %v2986 = vadd.f32 %v2934, %v2979
    %v2987 = vadd.f32 %v2937, %v2982
    %v2988 = vld [vmem:[%s2 + $0xc] sm:$0x1]
    %v2989 = vperm.slane %v2988, 0
    %v2990 = vadd.f32 %v2984, %v2989
    %v2991 = vadd.f32 %v2985, %v2989
    %v2992 = vadd.f32 %v2986, %v2989
    %v2993 = vadd.f32 %v2987, %v2989
    %2994 = vxpose.xlu0.b32.start [1/16] %v2990, 128
    %2995 = vxpose.xlu0.b32.cont [2/16] %v2991, 128
    %2996 = vxpose.xlu0.b32.cont [3/16] %v2992, 128
    %2997 = vxpose.xlu0.b32.cont [4/16] %v2993, 128
    %2998 = vxpose.xlu0.b32.cont [5/16] 0.0, 128
    %2999 = vxpose.xlu0.b32.cont [6/16] 0.0, 128
    %3000 = vxpose.xlu0.b32.cont [7/16] 0.0, 128
    %3001 = vxpose.xlu0.b32.cont [8/16] 0.0, 128
    %3002 = vxpose.xlu0.b32.cont [9/16] 0.0, 128
    %3003 = vxpose.xlu0.b32.cont [10/16] 0.0, 128
    %3004 = vxpose.xlu0.b32.cont [11/16] 0.0, 128
    %3005 = vxpose.xlu0.b32.cont [12/16] 0.0, 128
    %3006 = vxpose.xlu0.b32.cont [13/16] 0.0, 128
    %3007 = vxpose.xlu0.b32.cont [14/16] 0.0, 128
    %3008 = vxpose.xlu0.b32.cont [15/16] 0.0, 128
    %3009 = vxpose.xlu0.b32.end [16/16] 0.0, 128
    %v3010 = vpop.trf.xlu0
    %v3011 = vpop.trf.xlu0
    %v3012 = vpop.trf.xlu0
    %v3013 = vpop.trf.xlu0
    %v3014 = vpop.trf.xlu0
    %v3015 = vpop.trf.xlu0
    %v3016 = vpop.trf.xlu0
    %v3017 = vpop.trf.xlu0
    %v3018 = vpop.trf.xlu0
    %v3019 = vpop.trf.xlu0
    %v3020 = vpop.trf.xlu0
    %v3021 = vpop.trf.xlu0
    %v3022 = vpop.trf.xlu0
    %v3023 = vpop.trf.xlu0
    %v3024 = vpop.trf.xlu0
    %v3025 = vpop.trf.xlu0
    %v3026 = vsel %vm32, %v3010, 0.0
    %s3027 = scalar_lea.vmem [#allocation2], 8
    %3028 = vst [vmem:[%s3027] sm:$0xff] %v3026
    // Predicated region
    $region14: #{causal_decoder_forward.1} parent=1 // pred_check
      _
    $region15: #{causal_decoder_forward.1} parent=1 // pred_check_branch
      %3030 = sbr.rel (0) target = $region17
    $region16: #{causal_decoder_forward.1} parent=1 // pred_region
      %3032 = vsyncadd [#allocation3], 0
      %s3033 = sshll.u32 [#allocation2], 4
      %s3034 = int_to_ptr.vmem [resolvable:$true] %s3033
      %s3035 = sshll.u32 %s3, 4
      %s3036 = int_to_ptr.hbm [resolvable:$true] %s3035
      %3041 = dma.vmem_to_hbm [thread:$0]  %s3034, 256, %s3036, [#allocation3], 128, 128, 8
    $region17: #{causal_decoder_forward.1} parent=1 // pred_fallthru
      _
    // Predicated region
    $region18: #{causal_decoder_forward.1} parent=1 // pred_check
      _
    $region19: #{causal_decoder_forward.1} parent=1 // pred_check_branch
      %3043 = sbr.rel (0) target = $region21
    $region20: #{causal_decoder_forward.1} parent=1 // pred_region
      %3045 = dma.done [#allocation3], 256
    $region21: #{causal_decoder_forward.1} parent=1 // pred_fallthru
      _
    %3046 = vsyncpa [#allocation3], 1

</llo_original>
